<compile_context>
chip_gen: v7x
topology: tpu7x:2x2x1
jax: 0.10.0
libtpu: 0.0.40
codegen_flags: <defaults>
</compile_context>

<pallas_src>
import numpy as np
import jax
import jax.numpy as jnp
from jax.experimental import pallas as pl
from jax.experimental.pallas import tpu as pltpu

# ---------------- config (mirrors NeuralRecon defaults) -----------------------
PIXEL_MEAN = [103.53, 116.28, 123.675]
PIXEL_STD = [1.0, 1.0, 1.0]
LW = [1.0, 0.8, 0.64]          # cfg.MODEL.LW
STRIDES = [4, 8, 16]           # MnasMulti output strides
OUT_CHANNELS = [24, 40, 80]    # feature channels per scale
N_LEVELS = len(STRIDES)
FEAT_DTYPE = jnp.bfloat16      # bf16 feature storage halves HBM write traffic


# ---------------- fused backbone kernel ----------------------------------------
def _backbone_kernel(x_ref,
                     pw0_ref, pw1_ref, pw2_ref,
                     m0_ref, m1_ref, m2_ref,
                     b0_ref, b1_ref, b2_ref,
                     f0_ref, f1_ref, f2_ref,
                     l0_ref, l1_ref, l2_ref):
    """One (sample, row-tile) step.

    x_ref : (C, TH, W)            raw image rows (un-normalized, un-pooled)
    pw*   : (Wl, Wl/f)            hierarchical width-pool matrices (MXU)
    m*    : (hs_t*Cout, C*TH)     fused [height-pool x (normalize+1x1 conv)] matrix
    b*    : (hs_t*Cout, 1)        folded bias
    f*    : (hs_t, Cout, Ws)      per-level feature tile (bf16)
    l*    : (1, 1)                per-sample sum-of-squares accumulator (f32)
    """
    t = pl.program_id(1)
    pw_refs = (pw0_ref, pw1_ref, pw2_ref)
    m_refs = (m0_ref, m1_ref, m2_ref)
    b_refs = (b0_ref, b1_ref, b2_ref)
    f_refs = (f0_ref, f1_ref, f2_ref)
    l_refs = (l0_ref, l1_ref, l2_ref)

    @pl.when(t == 0)
    def _init_losses():
        for l_ref in l_refs:
            l_ref[...] = jnp.zeros_like(l_ref)

    c, th, w = x_ref.shape
    # (C, TH, W) -> (C*TH, W): leading-dim merge; TH % 8 == 0 keeps it layout-preserving.
    a = x_ref[...].reshape(c * th, w)

    for lvl in range(N_LEVELS):
        # hierarchical lane (width) average pooling on the MXU
        a = jnp.dot(a, pw_refs[lvl][...], preferred_element_type=jnp.float32)
        # fused [sublane (height) pooling x folded (normalize + 1x1 conv)] matmul
        y = jnp.dot(m_refs[lvl][...], a, preferred_element_type=jnp.float32)
        y = jnp.maximum(y + b_refs[lvl][...], 0.0)
        hs_t, cout, ws = f_refs[lvl].shape
        # rows are (i*Cout + o); split keeps Cout (multiple of 8) on sublanes.
        f_refs[lvl][...] = y.reshape(hs_t, cout, ws).astype(f_refs[lvl].dtype)
        # fused loss epilogue: features are never re-read from HBM.
        l_refs[lvl][...] += jnp.sum(y * y)[None, None]


# ---------------- constant / tiling helpers (plain JAX, tiny) -------------------
def _avg_pool_matrix(n_in, factor):
    """(n_in, n_in//factor) block-averaging matrix, entries 1/factor."""
    rows = jnp.arange(n_in) // factor
    cols = jnp.arange(n_in // factor)
    return (rows[:, None] == cols[None, :]).astype(jnp.float32) / factor


def _tile_bytes(c, th, w, strides, out_channels, feat_bytes):
    total = c * th * w * 4                               # input row-tile
    for s, co in zip(strides, out_channels):
        ws, hs_t = w // s, th // s
        total += c * th * ws * 4                         # width-pooled activations
        total += hs_t * co * c * th * 4                  # fused pool/conv matrix
        total += hs_t * co * ws * (4 + feat_bytes)       # f32 result + stored tile
    return total


def _pick_row_tiles(c, h, w, strides, out_channels, feat_bytes, budget_bytes=6 << 20):
    """Largest row-tile (fewest grid steps) whose working set fits a conservative
    VMEM budget (safe for v5e 16 MiB / v6e 32 MiB / v7x 32-of-64 MiB scoped VMEM)."""
    max_s = max(strides)
    max_tiles = h // max_s
    for nt in range(1, max_tiles + 1):
        if max_tiles % nt:
            continue
        if _tile_bytes(c, h // nt, w, strides, out_channels, feat_bytes) <= budget_bytes:
            return nt
    return max_tiles


def _build_level_constants(params, c, th, w):
    """Fold normalization into the conv and build the pooling / fused matrices."""
    mean = params["pixel_mean"]                  # (C,)
    inv_std = 1.0 / params["pixel_std"]          # (C,)
    pw_list, m_list, b_list = [], [], []
    prev_stride, w_cur = 1, w
    for s, wc, bc in zip(STRIDES, params["conv_w"], params["conv_b"]):
        # hierarchical width pooling: /4 then /2 then /2
        factor = s // prev_stride
        pw_list.append(_avg_pool_matrix(w_cur, factor))
        w_cur //= factor
        prev_stride = s
        # fold normalizer: w' = w / std, b' = b - w @ (mean/std)
        wp = wc * inv_std[None, :]                           # (Cout, C)
        bp = bc.reshape(-1) - wp @ mean                      # (Cout,)
        # fold height pooling with the channel conv into one matrix
        hs_t = th // s
        ph = _avg_pool_matrix(th, s).T                       # (hs_t, TH)
        m = jnp.einsum("iy,oc->iocy", ph, wp).reshape(hs_t * wp.shape[0], c * th)
        b2 = jnp.tile(bp.reshape(-1, 1), (hs_t, 1))          # (hs_t*Cout, 1)
        m_list.append(m)
        b_list.append(b2)
    return pw_list, m_list, b_list


# ---------------- fused backbone wrapper ----------------------------------------
def fused_backbone(x, params, feat_dtype=FEAT_DTYPE):
    """x: (N, C, H, W) raw images.  Returns ([(N,Hs,Cout,Ws)]*3, [(N,1,1)]*3)."""
    n, c, h, w = x.shape
    max_s = max(STRIDES)
    assert h % max_s == 0 and w % max_s == 0, "H and W must be multiples of 16"

    feat_bytes = jnp.dtype(feat_dtype).itemsize
    n_tiles = _pick_row_tiles(c, h, w, STRIDES, OUT_CHANNELS, feat_bytes)
    th = h // n_tiles

    pw_list, m_list, b_list = _build_level_constants(params, c, th, w)

    feat_shapes = tuple(jax.ShapeDtypeStruct((n, h // s, co, w // s), feat_dtype)
                        for s, co in zip(STRIDES, OUT_CHANNELS))
    loss_shapes = tuple(jax.ShapeDtypeStruct((n, 1, 1), jnp.float32) for _ in STRIDES)

    in_specs = [pl.BlockSpec((pl.Squeezed(), c, th, w), lambda ni, ti: (ni, 0, ti, 0))]
    for arr in (*pw_list, *m_list, *b_list):
        in_specs.append(pl.BlockSpec(arr.shape, lambda ni, ti: (0, 0)))

    feat_specs = tuple(
        pl.BlockSpec((pl.Squeezed(), th // s, co, w // s), lambda ni, ti: (ni, ti, 0, 0))
        for s, co in zip(STRIDES, OUT_CHANNELS))
    loss_specs = tuple(
        pl.BlockSpec((pl.Squeezed(), 1, 1), lambda ni, ti: (ni, 0, 0)) for _ in STRIDES)

    outs = pl.pallas_call(
        _backbone_kernel,
        out_shape=feat_shapes + loss_shapes,
        grid=(n, n_tiles),                       # (B*V samples, row tiles)
        in_specs=in_specs,
        out_specs=feat_specs + loss_specs,
        compiler_params=pltpu.CompilerParams(
            # sample axis shards across TCs (v7x megacore); row-tile axis carries the
            # per-sample loss accumulator so it stays "arbitrary".
            dimension_semantics=("parallel", "arbitrary"),
            vmem_limit_bytes=32 * 1024 * 1024),
    )(x, *pw_list, *m_list, *b_list)

    return outs[:N_LEVELS], outs[N_LEVELS:]


# ---------------- forward (mirrors the PyTorch module's structure) ---------------
def init_params(key, c_in=3):
    ks = jax.random.split(key, 2 * N_LEVELS)
    conv_w, conv_b = [], []
    for i, cout in enumerate(OUT_CHANNELS):
        conv_w.append(0.1 * jax.random.normal(ks[2 * i], (cout, c_in), jnp.float32))
        conv_b.append(0.01 * jax.random.normal(ks[2 * i + 1], (cout, 1), jnp.float32))
    return {
        "pixel_mean": jnp.asarray(PIXEL_MEAN[:c_in], jnp.float32),
        "pixel_std": jnp.asarray(PIXEL_STD[:c_in], jnp.float32),
        "lw": jnp.asarray(LW, jnp.float32),
        "conv_w": conv_w,
        "conv_b": conv_b,
    }


def neural_recon_forward(imgs, params):
    """imgs: (B, V, C, H, W) float32 (NCHW per view, matching the PyTorch module)."""
    B, V, C, H, W = imgs.shape
    N = B * V

    # torch.unbind(imgs, 1) + the per-view python loop are folded into one grid.
    x = imgs.reshape(N, C, H, W)
    feats, loss_sums = fused_backbone(x, params)          # one Pallas call total

    # per-level mean-of-squares loss (NeuConNet stand-in) and the 3-element weighted
    # total, both in plain JAX (kernel already produced the per-sample partial sums).
    per_level_losses = []
    for lvl, (s, co) in enumerate(zip(STRIDES, OUT_CHANNELS)):
        count = N * co * (H // s) * (W // s)
        per_level_losses.append(jnp.sum(loss_sums[lvl]) / count)
    total = jnp.sum(jnp.stack(per_level_losses) * params["lw"])

    # Re-expose features in the PyTorch-style structure: [view][level] NCHW.
    # (Kernel-native layout is (N, Hs, Cout, Ws); a consumer kernel could use it directly.)
    features = []
    for v in range(V):
        per_level = []
        for lvl, s in enumerate(STRIDES):
            hs, ws = H // s, W // s
            f = feats[lvl].reshape(B, V, hs, OUT_CHANNELS[lvl], ws)[:, v]
            per_level.append(jnp.transpose(f, (0, 2, 1, 3)))   # (B, Cout, Hs, Ws)
        features.append(per_level)

    loss_dict = {f"tsdf_occ_loss_{i}": per_level_losses[i] for i in range(N_LEVELS)}
    loss_dict["total_loss"] = total
    outputs = {"features": features}
    return outputs, loss_dict


# ---------------- plain-JAX reference (for the in-script correctness check) ------
def _reference_forward(x, params):
    n, c, h, w = x.shape
    mean = params["pixel_mean"].reshape(1, c, 1, 1)
    std = params["pixel_std"].reshape(1, c, 1, 1)
    xn = (x - mean) / std
    feats, losses = [], []
    for s, wc, bc in zip(STRIDES, params["conv_w"], params["conv_b"]):
        p = xn.reshape(n, c, h // s, s, w // s, s).mean(axis=(3, 5))
        y = jnp.einsum("oc,nchw->nohw", wc, p) + bc.reshape(1, -1, 1, 1)
        y = jnp.maximum(y, 0.0)
        feats.append(y)
        losses.append(jnp.mean(y * y))
    return feats, losses


if __name__ == "__main__":
    key = jax.random.PRNGKey(0)
    k_img, k_par = jax.random.split(key)
    B, V, C, H, W = 2, 2, 3, 32, 32
    imgs = jax.random.uniform(k_img, (B, V, C, H, W), jnp.float32) * 255.0
    params = init_params(k_par, c_in=C)

    fwd = jax.jit(neural_recon_forward)
    outputs, loss_dict = fwd(imgs, params)
    jax.block_until_ready(loss_dict["total_loss"])
    for lvl in range(N_LEVELS):
        jax.block_until_ready(outputs["features"][0][lvl])

    # correctness check of the folded/fused kernel against the plain-JAX reference
    x_flat = imgs.reshape(B * V, C, H, W)
    ref_feats, ref_losses = _reference_forward(x_flat, params)
    for lvl in range(N_LEVELS):
        got = jnp.stack([outputs["features"][v][lvl] for v in range(V)], axis=1)
        got = got.reshape(B * V, *got.shape[2:]).astype(jnp.float32)
        np.testing.assert_allclose(np.asarray(got), np.asarray(ref_feats[lvl]),
                                   rtol=2e-2, atol=5e-1)
        np.testing.assert_allclose(np.asarray(loss_dict[f"tsdf_occ_loss_{lvl}"]),
                                   np.asarray(ref_losses[lvl]), rtol=2e-2, atol=1e-2)
    ref_total = sum(float(LW[i]) * np.asarray(ref_losses[i]) for i in range(N_LEVELS))
    np.testing.assert_allclose(np.asarray(loss_dict["total_loss"]), ref_total,
                               rtol=2e-2, atol=1e-2)

    print("KERNEL_OK")
</pallas_src>

<mosaic_0001>
module attributes {stable_mosaic.version = 11 : i64} {
  func.func @_backbone_kernel(%arg0: i32, %arg1: i32, %arg2: memref<1x3x32x32xf32, #tpu.memory_space<vmem>>, %arg3: memref<32x8xf32, #tpu.memory_space<vmem>>, %arg4: memref<8x4xf32, #tpu.memory_space<vmem>>, %arg5: memref<4x2xf32, #tpu.memory_space<vmem>>, %arg6: memref<192x96xf32, #tpu.memory_space<vmem>>, %arg7: memref<160x96xf32, #tpu.memory_space<vmem>>, %arg8: memref<160x96xf32, #tpu.memory_space<vmem>>, %arg9: memref<192x1xf32, #tpu.memory_space<vmem>>, %arg10: memref<160x1xf32, #tpu.memory_space<vmem>>, %arg11: memref<160x1xf32, #tpu.memory_space<vmem>>, %arg12: memref<1x8x24x8xbf16, #tpu.memory_space<vmem>>, %arg13: memref<1x4x40x4xbf16, #tpu.memory_space<vmem>>, %arg14: memref<1x2x80x2xbf16, #tpu.memory_space<vmem>>, %arg15: memref<1x1x1xf32, #tpu.memory_space<vmem>>, %arg16: memref<1x1x1xf32, #tpu.memory_space<vmem>>, %arg17: memref<1x1x1xf32, #tpu.memory_space<vmem>>) attributes {dimension_semantics = [#tpu.dimension_semantics<parallel>, #tpu.dimension_semantics<arbitrary>], iteration_bounds = array<i64: 4, 1>, scalar_prefetch = 0 : i64, scratch_operands = 0 : i64, tpu.core_type = #tpu.core_type<tc>, window_params = [{transform_indices = @transform_0, window_bounds = array<i64: 1, 3, 32, 32>}, {pipeline_mode = #tpu.pipeline_mode<synchronous>, transform_indices = @transform_1, window_bounds = array<i64: 32, 8>}, {pipeline_mode = #tpu.pipeline_mode<synchronous>, transform_indices = @transform_2, window_bounds = array<i64: 8, 4>}, {pipeline_mode = #tpu.pipeline_mode<synchronous>, transform_indices = @transform_3, window_bounds = array<i64: 4, 2>}, {pipeline_mode = #tpu.pipeline_mode<synchronous>, transform_indices = @transform_4, window_bounds = array<i64: 192, 96>}, {pipeline_mode = #tpu.pipeline_mode<synchronous>, transform_indices = @transform_5, window_bounds = array<i64: 160, 96>}, {pipeline_mode = #tpu.pipeline_mode<synchronous>, transform_indices = @transform_6, window_bounds = array<i64: 160, 96>}, {pipeline_mode = #tpu.pipeline_mode<synchronous>, transform_indices = @transform_7, window_bounds = array<i64: 192, 1>}, {pipeline_mode = #tpu.pipeline_mode<synchronous>, transform_indices = @transform_8, window_bounds = array<i64: 160, 1>}, {pipeline_mode = #tpu.pipeline_mode<synchronous>, transform_indices = @transform_9, window_bounds = array<i64: 160, 1>}, {transform_indices = @transform_10, window_bounds = array<i64: 1, 8, 24, 8>}, {transform_indices = @transform_11, window_bounds = array<i64: 1, 4, 40, 4>}, {transform_indices = @transform_12, window_bounds = array<i64: 1, 2, 80, 2>}, {transform_indices = @transform_13, window_bounds = array<i64: 1, 1, 1>}, {transform_indices = @transform_14, window_bounds = array<i64: 1, 1, 1>}, {transform_indices = @transform_15, window_bounds = array<i64: 1, 1, 1>}]} {
    %c0_i32 = arith.constant 0 : i32
    %0 = arith.cmpi eq, %arg1, %c0_i32 : i32
    %1 = arith.extui %0 : i1 to i32
    %c0_i32_0 = arith.constant 0 : i32
    %2 = arith.cmpi ne, %1, %c0_i32_0 : i32
    scf.if %2 {
      %cst_63 = arith.constant 0.000000e+00 : f32
      %84 = vector.broadcast %cst_63 : f32 to vector<1x1xf32>
      %c0_64 = arith.constant 0 : index
      %c0_65 = arith.constant 0 : index
      %c0_66 = arith.constant 0 : index
      %85 = vector.load %arg15[%c0_64, %c0_65, %c0_66] : memref<1x1x1xf32, #tpu.memory_space<vmem>>, vector<1x1x1xf32>
      %86 = vector.shape_cast %85 : vector<1x1x1xf32> to vector<1x1xf32>
      %87 = vector.shape_cast %84 : vector<1x1xf32> to vector<1x1x1xf32>
      tpu.vector_store %arg15[%c0_64, %c0_65, %c0_66], %87 {strides = array<i32>} : memref<1x1x1xf32, #tpu.memory_space<vmem>>, vector<1x1x1xf32>,
      %cst_67 = arith.constant 0.000000e+00 : f32
      %88 = vector.broadcast %cst_67 : f32 to vector<1x1xf32>
      %c0_68 = arith.constant 0 : index
      %c0_69 = arith.constant 0 : index
      %c0_70 = arith.constant 0 : index
      %89 = vector.load %arg16[%c0_68, %c0_69, %c0_70] : memref<1x1x1xf32, #tpu.memory_space<vmem>>, vector<1x1x1xf32>
      %90 = vector.shape_cast %89 : vector<1x1x1xf32> to vector<1x1xf32>
      %91 = vector.shape_cast %88 : vector<1x1xf32> to vector<1x1x1xf32>
      tpu.vector_store %arg16[%c0_68, %c0_69, %c0_70], %91 {strides = array<i32>} : memref<1x1x1xf32, #tpu.memory_space<vmem>>, vector<1x1x1xf32>,
      %cst_71 = arith.constant 0.000000e+00 : f32
      %92 = vector.broadcast %cst_71 : f32 to vector<1x1xf32>
      %c0_72 = arith.constant 0 : index
      %c0_73 = arith.constant 0 : index
      %c0_74 = arith.constant 0 : index
      %93 = vector.load %arg17[%c0_72, %c0_73, %c0_74] : memref<1x1x1xf32, #tpu.memory_space<vmem>>, vector<1x1x1xf32>
      %94 = vector.shape_cast %93 : vector<1x1x1xf32> to vector<1x1xf32>
      %95 = vector.shape_cast %92 : vector<1x1xf32> to vector<1x1x1xf32>
      tpu.vector_store %arg17[%c0_72, %c0_73, %c0_74], %95 {strides = array<i32>} : memref<1x1x1xf32, #tpu.memory_space<vmem>>, vector<1x1x1xf32>,
    } else {
    }
    %c0 = arith.constant 0 : index
    %c0_1 = arith.constant 0 : index
    %c0_2 = arith.constant 0 : index
    %c0_3 = arith.constant 0 : index
    %3 = vector.load %arg2[%c0, %c0_1, %c0_2, %c0_3] : memref<1x3x32x32xf32, #tpu.memory_space<vmem>>, vector<1x3x32x32xf32>
    %4 = vector.shape_cast %3 : vector<1x3x32x32xf32> to vector<3x32x32xf32>
    %5 = vector.shape_cast %4 : vector<3x32x32xf32> to vector<96x32xf32>
    %c0_4 = arith.constant 0 : index
    %c0_5 = arith.constant 0 : index
    %6 = vector.load %arg3[%c0_4, %c0_5] : memref<32x8xf32, #tpu.memory_space<vmem>>, vector<32x8xf32>
    %cst = arith.constant dense<0.000000e+00> : vector<96x8xf32>
    %7 = tpu.matmul %5, %6, %cst {dimension_numbers = #tpu.dot_dimension_numbers<[1], [0], [0], [1], [0, 0, 1, 1], [], []>} : vector<96x32xf32>, vector<32x8xf32>, vector<96x8xf32> -> vector<96x8xf32>
    %c0_6 = arith.constant 0 : index
    %c0_7 = arith.constant 0 : index
    %8 = vector.load %arg6[%c0_6, %c0_7] : memref<192x96xf32, #tpu.memory_space<vmem>>, vector<192x96xf32>
    %cst_8 = arith.constant dense<0.000000e+00> : vector<192x8xf32>
    %9 = tpu.matmul %8, %7, %cst_8 {dimension_numbers = #tpu.dot_dimension_numbers<[1], [0], [0], [1], [0, 0, 1, 1], [], []>} : vector<192x96xf32>, vector<96x8xf32>, vector<192x8xf32> -> vector<192x8xf32>
    %c0_9 = arith.constant 0 : index
    %c0_10 = arith.constant 0 : index
    %10 = vector.load %arg9[%c0_9, %c0_10] : memref<192x1xf32, #tpu.memory_space<vmem>>, vector<192x1xf32>
    %11 = vector.broadcast %10 : vector<192x1xf32> to vector<192x8xf32>
    %12 = arith.addf %9, %11 : vector<192x8xf32>
    %cst_11 = arith.constant 0.000000e+00 : f32
    %13 = vector.broadcast %cst_11 : f32 to vector<192x8xf32>
    %14 = arith.maximumf %12, %13 : vector<192x8xf32>
    %15 = vector.shape_cast %14 : vector<192x8xf32> to vector<8x24x8xf32>
    %16 = arith.truncf %15 : vector<8x24x8xf32> to vector<8x24x8xbf16>
    %c0_12 = arith.constant 0 : index
    %c0_13 = arith.constant 0 : index
    %c0_14 = arith.constant 0 : index
    %c0_15 = arith.constant 0 : index
    %17 = vector.load %arg12[%c0_12, %c0_13, %c0_14, %c0_15] : memref<1x8x24x8xbf16, #tpu.memory_space<vmem>>, vector<1x8x24x8xbf16>
    %18 = vector.shape_cast %17 : vector<1x8x24x8xbf16> to vector<8x24x8xbf16>
    %19 = vector.shape_cast %16 : vector<8x24x8xbf16> to vector<1x8x24x8xbf16>
    tpu.vector_store %arg12[%c0_12, %c0_13, %c0_14, %c0_15], %19 {strides = array<i32>} : memref<1x8x24x8xbf16, #tpu.memory_space<vmem>>, vector<1x8x24x8xbf16>,
    %c0_16 = arith.constant 0 : index
    %c0_17 = arith.constant 0 : index
    %c0_18 = arith.constant 0 : index
    %20 = vector.load %arg15[%c0_16, %c0_17, %c0_18] : memref<1x1x1xf32, #tpu.memory_space<vmem>>, vector<1x1x1xf32>
    %21 = vector.shape_cast %20 : vector<1x1x1xf32> to vector<1x1xf32>
    %22 = arith.mulf %14, %14 : vector<192x8xf32>
    %23 = vector.shape_cast %22 : vector<192x8xf32> to vector<1x192x8xf32>
    %cst_19 = arith.constant dense<0.000000e+00> : vector<1xf32>
    %24 = vector.multi_reduction <add>, %23, %cst_19 [1, 2] : vector<1x192x8xf32> to vector<1xf32>
    %25 = vector.shape_cast %24 : vector<1xf32> to vector<1x1x1xf32>
    %26 = vector.extract %25[0, 0, 0] : f32 from vector<1x1x1xf32>
    %27 = vector.broadcast %26 : f32 to vector<1x1xf32>
    %28 = arith.addf %21, %27 : vector<1x1xf32>
    %c0_20 = arith.constant 0 : index
    %c0_21 = arith.constant 0 : index
    %c0_22 = arith.constant 0 : index
    %29 = vector.load %arg15[%c0_20, %c0_21, %c0_22] : memref<1x1x1xf32, #tpu.memory_space<vmem>>, vector<1x1x1xf32>
    %30 = vector.shape_cast %29 : vector<1x1x1xf32> to vector<1x1xf32>
    %31 = vector.shape_cast %28 : vector<1x1xf32> to vector<1x1x1xf32>
    tpu.vector_store %arg15[%c0_20, %c0_21, %c0_22], %31 {strides = array<i32>} : memref<1x1x1xf32, #tpu.memory_space<vmem>>, vector<1x1x1xf32>,
    %c0_23 = arith.constant 0 : index
    %c0_24 = arith.constant 0 : index
    %32 = vector.load %arg4[%c0_23, %c0_24] : memref<8x4xf32, #tpu.memory_space<vmem>>, vector<8x4xf32>
    %cst_25 = arith.constant dense<0.000000e+00> : vector<96x4xf32>
    %33 = tpu.matmul %7, %32, %cst_25 {dimension_numbers = #tpu.dot_dimension_numbers<[1], [0], [0], [1], [0, 0, 1, 1], [], []>} : vector<96x8xf32>, vector<8x4xf32>, vector<96x4xf32> -> vector<96x4xf32>
    %c0_26 = arith.constant 0 : index
    %c0_27 = arith.constant 0 : index
    %34 = vector.load %arg7[%c0_26, %c0_27] : memref<160x96xf32, #tpu.memory_space<vmem>>, vector<160x96xf32>
    %cst_28 = arith.constant dense<0.000000e+00> : vector<160x4xf32>
    %35 = tpu.matmul %34, %33, %cst_28 {dimension_numbers = #tpu.dot_dimension_numbers<[1], [0], [0], [1], [0, 0, 1, 1], [], []>} : vector<160x96xf32>, vector<96x4xf32>, vector<160x4xf32> -> vector<160x4xf32>
    %c0_29 = arith.constant 0 : index
    %c0_30 = arith.constant 0 : index
    %36 = vector.load %arg10[%c0_29, %c0_30] : memref<160x1xf32, #tpu.memory_space<vmem>>, vector<160x1xf32>
    %37 = vector.broadcast %36 : vector<160x1xf32> to vector<160x4xf32>
    %38 = arith.addf %35, %37 : vector<160x4xf32>
    %cst_31 = arith.constant 0.000000e+00 : f32
    %39 = vector.broadcast %cst_31 : f32 to vector<160x4xf32>
    %40 = arith.maximumf %38, %39 : vector<160x4xf32>
    %41 = vector.shape_cast %40 : vector<160x4xf32> to vector<4x40x4xf32>
    %42 = arith.truncf %41 : vector<4x40x4xf32> to vector<4x40x4xbf16>
    %c0_32 = arith.constant 0 : index
    %c0_33 = arith.constant 0 : index
    %c0_34 = arith.constant 0 : index
    %c0_35 = arith.constant 0 : index
    %43 = vector.load %arg13[%c0_32, %c0_33, %c0_34, %c0_35] : memref<1x4x40x4xbf16, #tpu.memory_space<vmem>>, vector<1x4x40x4xbf16>
    %44 = vector.shape_cast %43 : vector<1x4x40x4xbf16> to vector<4x40x4xbf16>
    %45 = vector.shape_cast %42 : vector<4x40x4xbf16> to vector<1x4x40x4xbf16>
    tpu.vector_store %arg13[%c0_32, %c0_33, %c0_34, %c0_35], %45 {strides = array<i32>} : memref<1x4x40x4xbf16, #tpu.memory_space<vmem>>, vector<1x4x40x4xbf16>,
    %c0_36 = arith.constant 0 : index
    %c0_37 = arith.constant 0 : index
    %c0_38 = arith.constant 0 : index
    %46 = vector.load %arg16[%c0_36, %c0_37, %c0_38] : memref<1x1x1xf32, #tpu.memory_space<vmem>>, vector<1x1x1xf32>
    %47 = vector.shape_cast %46 : vector<1x1x1xf32> to vector<1x1xf32>
    %48 = arith.mulf %40, %40 : vector<160x4xf32>
    %49 = vector.shape_cast %48 : vector<160x4xf32> to vector<1x160x4xf32>
    %cst_39 = arith.constant dense<0.000000e+00> : vector<1xf32>
    %50 = vector.multi_reduction <add>, %49, %cst_39 [1, 2] : vector<1x160x4xf32> to vector<1xf32>
    %51 = vector.shape_cast %50 : vector<1xf32> to vector<1x1x1xf32>
    %52 = vector.extract %51[0, 0, 0] : f32 from vector<1x1x1xf32>
    %53 = vector.broadcast %52 : f32 to vector<1x1xf32>
    %54 = arith.addf %47, %53 : vector<1x1xf32>
    %c0_40 = arith.constant 0 : index
    %c0_41 = arith.constant 0 : index
    %c0_42 = arith.constant 0 : index
    %55 = vector.load %arg16[%c0_40, %c0_41, %c0_42] : memref<1x1x1xf32, #tpu.memory_space<vmem>>, vector<1x1x1xf32>
    %56 = vector.shape_cast %55 : vector<1x1x1xf32> to vector<1x1xf32>
    %57 = vector.shape_cast %54 : vector<1x1xf32> to vector<1x1x1xf32>
    tpu.vector_store %arg16[%c0_40, %c0_41, %c0_42], %57 {strides = array<i32>} : memref<1x1x1xf32, #tpu.memory_space<vmem>>, vector<1x1x1xf32>,
    %c0_43 = arith.constant 0 : index
    %c0_44 = arith.constant 0 : index
    %58 = vector.load %arg5[%c0_43, %c0_44] : memref<4x2xf32, #tpu.memory_space<vmem>>, vector<4x2xf32>
    %cst_45 = arith.constant dense<0.000000e+00> : vector<96x2xf32>
    %59 = tpu.matmul %33, %58, %cst_45 {dimension_numbers = #tpu.dot_dimension_numbers<[1], [0], [0], [1], [0, 0, 1, 1], [], []>} : vector<96x4xf32>, vector<4x2xf32>, vector<96x2xf32> -> vector<96x2xf32>
    %c0_46 = arith.constant 0 : index
    %c0_47 = arith.constant 0 : index
    %60 = vector.load %arg8[%c0_46, %c0_47] : memref<160x96xf32, #tpu.memory_space<vmem>>, vector<160x96xf32>
    %cst_48 = arith.constant dense<0.000000e+00> : vector<160x2xf32>
    %61 = tpu.matmul %60, %59, %cst_48 {dimension_numbers = #tpu.dot_dimension_numbers<[1], [0], [0], [1], [0, 0, 1, 1], [], []>} : vector<160x96xf32>, vector<96x2xf32>, vector<160x2xf32> -> vector<160x2xf32>
    %c0_49 = arith.constant 0 : index
    %c0_50 = arith.constant 0 : index
    %62 = vector.load %arg11[%c0_49, %c0_50] : memref<160x1xf32, #tpu.memory_space<vmem>>, vector<160x1xf32>
    %63 = vector.broadcast %62 : vector<160x1xf32> to vector<160x2xf32>
    %64 = arith.addf %61, %63 : vector<160x2xf32>
    %cst_51 = arith.constant 0.000000e+00 : f32
    %65 = vector.broadcast %cst_51 : f32 to vector<160x2xf32>
    %66 = arith.maximumf %64, %65 : vector<160x2xf32>
    %67 = vector.shape_cast %66 : vector<160x2xf32> to vector<2x80x2xf32>
    %68 = arith.truncf %67 : vector<2x80x2xf32> to vector<2x80x2xbf16>
    %c0_52 = arith.constant 0 : index
    %c0_53 = arith.constant 0 : index
    %c0_54 = arith.constant 0 : index
    %c0_55 = arith.constant 0 : index
    %69 = vector.load %arg14[%c0_52, %c0_53, %c0_54, %c0_55] : memref<1x2x80x2xbf16, #tpu.memory_space<vmem>>, vector<1x2x80x2xbf16>
    %70 = vector.shape_cast %69 : vector<1x2x80x2xbf16> to vector<2x80x2xbf16>
    %71 = vector.shape_cast %68 : vector<2x80x2xbf16> to vector<1x2x80x2xbf16>
    tpu.vector_store %arg14[%c0_52, %c0_53, %c0_54, %c0_55], %71 {strides = array<i32>} : memref<1x2x80x2xbf16, #tpu.memory_space<vmem>>, vector<1x2x80x2xbf16>,
    %c0_56 = arith.constant 0 : index
    %c0_57 = arith.constant 0 : index
    %c0_58 = arith.constant 0 : index
    %72 = vector.load %arg17[%c0_56, %c0_57, %c0_58] : memref<1x1x1xf32, #tpu.memory_space<vmem>>, vector<1x1x1xf32>
    %73 = vector.shape_cast %72 : vector<1x1x1xf32> to vector<1x1xf32>
    %74 = arith.mulf %66, %66 : vector<160x2xf32>
    %75 = vector.shape_cast %74 : vector<160x2xf32> to vector<1x160x2xf32>
    %cst_59 = arith.constant dense<0.000000e+00> : vector<1xf32>
    %76 = vector.multi_reduction <add>, %75, %cst_59 [1, 2] : vector<1x160x2xf32> to vector<1xf32>
    %77 = vector.shape_cast %76 : vector<1xf32> to vector<1x1x1xf32>
    %78 = vector.extract %77[0, 0, 0] : f32 from vector<1x1x1xf32>
    %79 = vector.broadcast %78 : f32 to vector<1x1xf32>
    %80 = arith.addf %73, %79 : vector<1x1xf32>
    %c0_60 = arith.constant 0 : index
    %c0_61 = arith.constant 0 : index
    %c0_62 = arith.constant 0 : index
    %81 = vector.load %arg17[%c0_60, %c0_61, %c0_62] : memref<1x1x1xf32, #tpu.memory_space<vmem>>, vector<1x1x1xf32>
    %82 = vector.shape_cast %81 : vector<1x1x1xf32> to vector<1x1xf32>
    %83 = vector.shape_cast %80 : vector<1x1xf32> to vector<1x1x1xf32>
    tpu.vector_store %arg17[%c0_60, %c0_61, %c0_62], %83 {strides = array<i32>} : memref<1x1x1xf32, #tpu.memory_space<vmem>>, vector<1x1x1xf32>,
    return
  }
  func.func @transform_0(%arg0: i32, %arg1: i32) -> (i32, i32, i32, i32) {
    %c0_i32 = arith.constant 0 : i32
    %c0_i32_0 = arith.constant 0 : i32
    %c0_i32_1 = arith.constant 0 : i32
    return %arg0, %c0_i32, %arg1, %c0_i32_0 : i32, i32, i32, i32
  }
  func.func @transform_1(%arg0: i32, %arg1: i32) -> (i32, i32) {
    %c0_i32 = arith.constant 0 : i32
    %c0_i32_0 = arith.constant 0 : i32
    %c0_i32_1 = arith.constant 0 : i32
    return %c0_i32, %c0_i32_0 : i32, i32
  }
  func.func @transform_2(%arg0: i32, %arg1: i32) -> (i32, i32) {
    %c0_i32 = arith.constant 0 : i32
    %c0_i32_0 = arith.constant 0 : i32
    %c0_i32_1 = arith.constant 0 : i32
    return %c0_i32, %c0_i32_0 : i32, i32
  }
  func.func @transform_3(%arg0: i32, %arg1: i32) -> (i32, i32) {
    %c0_i32 = arith.constant 0 : i32
    %c0_i32_0 = arith.constant 0 : i32
    %c0_i32_1 = arith.constant 0 : i32
    return %c0_i32, %c0_i32_0 : i32, i32
  }
  func.func @transform_4(%arg0: i32, %arg1: i32) -> (i32, i32) {
    %c0_i32 = arith.constant 0 : i32
    %c0_i32_0 = arith.constant 0 : i32
    %c0_i32_1 = arith.constant 0 : i32
    return %c0_i32, %c0_i32_0 : i32, i32
  }
  func.func @transform_5(%arg0: i32, %arg1: i32) -> (i32, i32) {
    %c0_i32 = arith.constant 0 : i32
    %c0_i32_0 = arith.constant 0 : i32
    %c0_i32_1 = arith.constant 0 : i32
    return %c0_i32, %c0_i32_0 : i32, i32
  }
  func.func @transform_6(%arg0: i32, %arg1: i32) -> (i32, i32) {
    %c0_i32 = arith.constant 0 : i32
    %c0_i32_0 = arith.constant 0 : i32
    %c0_i32_1 = arith.constant 0 : i32
    return %c0_i32, %c0_i32_0 : i32, i32
  }
  func.func @transform_7(%arg0: i32, %arg1: i32) -> (i32, i32) {
    %c0_i32 = arith.constant 0 : i32
    %c0_i32_0 = arith.constant 0 : i32
    %c0_i32_1 = arith.constant 0 : i32
    return %c0_i32, %c0_i32_0 : i32, i32
  }
  func.func @transform_8(%arg0: i32, %arg1: i32) -> (i32, i32) {
    %c0_i32 = arith.constant 0 : i32
    %c0_i32_0 = arith.constant 0 : i32
    %c0_i32_1 = arith.constant 0 : i32
    return %c0_i32, %c0_i32_0 : i32, i32
  }
  func.func @transform_9(%arg0: i32, %arg1: i32) -> (i32, i32) {
    %c0_i32 = arith.constant 0 : i32
    %c0_i32_0 = arith.constant 0 : i32
    %c0_i32_1 = arith.constant 0 : i32
    return %c0_i32, %c0_i32_0 : i32, i32
  }
  func.func @transform_10(%arg0: i32, %arg1: i32) -> (i32, i32, i32, i32) {
    %c0_i32 = arith.constant 0 : i32
    %c0_i32_0 = arith.constant 0 : i32
    %c0_i32_1 = arith.constant 0 : i32
    return %arg0, %arg1, %c0_i32, %c0_i32_0 : i32, i32, i32, i32
  }
  func.func @transform_11(%arg0: i32, %arg1: i32) -> (i32, i32, i32, i32) {
    %c0_i32 = arith.constant 0 : i32
    %c0_i32_0 = arith.constant 0 : i32
    %c0_i32_1 = arith.constant 0 : i32
    return %arg0, %arg1, %c0_i32, %c0_i32_0 : i32, i32, i32, i32
  }
  func.func @transform_12(%arg0: i32, %arg1: i32) -> (i32, i32, i32, i32) {
    %c0_i32 = arith.constant 0 : i32
    %c0_i32_0 = arith.constant 0 : i32
    %c0_i32_1 = arith.constant 0 : i32
    return %arg0, %arg1, %c0_i32, %c0_i32_0 : i32, i32, i32, i32
  }
  func.func @transform_13(%arg0: i32, %arg1: i32) -> (i32, i32, i32) {
    %c0_i32 = arith.constant 0 : i32
    %c0_i32_0 = arith.constant 0 : i32
    %c0_i32_1 = arith.constant 0 : i32
    return %arg0, %c0_i32, %c0_i32_0 : i32, i32, i32
  }
  func.func @transform_14(%arg0: i32, %arg1: i32) -> (i32, i32, i32) {
    %c0_i32 = arith.constant 0 : i32
    %c0_i32_0 = arith.constant 0 : i32
    %c0_i32_1 = arith.constant 0 : i32
    return %arg0, %c0_i32, %c0_i32_0 : i32, i32, i32
  }
  func.func @transform_15(%arg0: i32, %arg1: i32) -> (i32, i32, i32) {
    %c0_i32 = arith.constant 0 : i32
    %c0_i32_0 = arith.constant 0 : i32
    %c0_i32_1 = arith.constant 0 : i32
    return %arg0, %c0_i32, %c0_i32_0 : i32, i32, i32
  }
}

</mosaic_0001>

<llo_original>
// kernel: neural_recon_forward.1
$region0: #{neural_recon_forward.1}
  #allocation0 [shape = 'u32[]', space=smem, size = 0x4, offset = 0x4, fixed_abs, tag = 'smem constant byte address 0x4 - core index']
  #allocation1 [shape = 'u32[144,128]{1,0:T(1,128)}', space=vmem, size = 0x12000, scoped, tag = 'internal scratch']
  %s0 = inlined_call_operand.vmem [shape: f32[4,3,32,32], index: 0, kind: input, shape index: {}]
  %s1 = inlined_call_operand.vmem [shape: f32[32,8], index: 1, kind: input, shape index: {}]
  %s2 = inlined_call_operand.vmem [shape: f32[8,4], index: 2, kind: input, shape index: {}]
  %s3 = inlined_call_operand.vmem [shape: f32[4,2], index: 3, kind: input, shape index: {}]
  %s4 = inlined_call_operand.vmem [shape: f32[192,96], index: 4, kind: input, shape index: {}]
  %s5 = inlined_call_operand.vmem [shape: f32[160,96], index: 5, kind: input, shape index: {}]
  %s6 = inlined_call_operand.vmem [shape: f32[160,96], index: 6, kind: input, shape index: {}]
  %s7 = inlined_call_operand.vmem [shape: f32[192,1], index: 7, kind: input, shape index: {}]
  %s8 = inlined_call_operand.vmem [shape: f32[160,1], index: 8, kind: input, shape index: {}]
  %s9 = inlined_call_operand.vmem [shape: f32[160,1], index: 9, kind: input, shape index: {}]
  %s10 = inlined_call_operand.vmem [shape: bf16[4,8,24,8], index: 10, kind: output, shape index: {0}]
  %s11 = inlined_call_operand.vmem [shape: bf16[4,4,40,4], index: 11, kind: output, shape index: {1}]
  %s12 = inlined_call_operand.vmem [shape: bf16[4,2,80,2], index: 12, kind: output, shape index: {2}]
  %s13 = inlined_call_operand.vmem [shape: f32[4,1,1], index: 13, kind: output, shape index: {3}]
  %s14 = inlined_call_operand.vmem [shape: f32[4,1,1], index: 14, kind: output, shape index: {4}]
  %s15 = inlined_call_operand.vmem [shape: f32[4,1,1], index: 15, kind: output, shape index: {5}]
  %16 = xla_tuple %s10, %s11, %s12, %s13, %s14, %s15
  %s17 = sld [smem:[#allocation0]]
  $region117: #{neural_recon_forward.1} parent=0
    _
  %s19 = ssub.s32 1, %s17
  %s20 = scalar_select 0, %s19, %s17
  loop: start=0, step=1, limit=6
  $region2: #{neural_recon_forward.1} parent=0 // loop_pre_header
    _
  $region3: #{neural_recon_forward.1} parent=0 // loop_header
    %s22 = sphi 0, %s26
    %p23 = scmp.ge.s32.totalorder %s22, 6
    %s29 = sphi 0, %s41
    %s30 = sphi 0, %s37
    %s31 = sphi 0, %s29
    %s32 = sphi 0, %s30
    %s33 = sphi 0, %s31
    %s34 = sphi 0, %s32
    %s46 = sphi 0, %s48
    %s49 = sphi 0, %s46
    %s50 = sphi 0, %s49
    %s66 = sphi 0, %s50
    %s70 = sphi 0, %s70
    %s72 = sphi 0, %s70
    %s73 = sphi 0, %s72
    %s87 = sphi 0, %s73
    %s91 = sphi 0, %s91
    %s93 = sphi 0, %s91
    %s94 = sphi 0, %s93
    %s108 = sphi 0, %s94
    %s112 = sphi 0, %s112
    %s114 = sphi 0, %s112
    %s115 = sphi 0, %s114
    %s129 = sphi 0, %s115
    %s133 = sphi 0, %s133
    %s135 = sphi 0, %s133
    %s136 = sphi 0, %s135
    %s150 = sphi 0, %s136
    %s154 = sphi 0, %s154
    %s156 = sphi 0, %s154
    %s157 = sphi 0, %s156
    %s171 = sphi 0, %s157
    %s175 = sphi 0, %s175
    %s177 = sphi 0, %s175
    %s178 = sphi 0, %s177
    %s192 = sphi 0, %s178
    %s196 = sphi 0, %s196
    %s198 = sphi 0, %s196
    %s199 = sphi 0, %s198
    %s213 = sphi 0, %s199
    %s217 = sphi 0, %s217
    %s219 = sphi 0, %s217
    %s220 = sphi 0, %s219
    %s234 = sphi 0, %s220
    %s238 = sphi 0, %s238
    %s240 = sphi 0, %s238
    %s241 = sphi 0, %s240
    %s255 = sphi 0, %s241
    %s263 = sphi 0, %s265
    %s266 = sphi 0, %s263
    %s267 = sphi 0, %s266
    %s283 = sphi 0, %s267
    %s291 = sphi 0, %s293
    %s294 = sphi 0, %s291
    %s295 = sphi 0, %s294
    %s311 = sphi 0, %s295
    %s319 = sphi 0, %s321
    %s322 = sphi 0, %s319
    %s323 = sphi 0, %s322
    %s339 = sphi 0, %s323
    %s345 = sphi 0, %s347
    %s348 = sphi 0, %s345
    %s349 = sphi 0, %s348
    %s365 = sphi 0, %s349
    %s371 = sphi 0, %s373
    %s374 = sphi 0, %s371
    %s375 = sphi 0, %s374
    %s391 = sphi 0, %s375
    %s397 = sphi 0, %s399
    %s400 = sphi 0, %s397
    %s401 = sphi 0, %s400
    %s417 = sphi 0, %s401
  $region4: #{neural_recon_forward.1} parent=0 // loop_header_branch
    %25 = sbr.rel (%p23) target = $region8
  $region5: #{neural_recon_forward.1} parent=0 // loop_body
    %s27 = ssub.s32 %s22, 1
    %s28 = ssub.s32 %s22, 2
    %s35 = sadd.s32 1, %s30
    %p36 = scmp.ge.s32.totalorder %s35, 1
    %s37 = scalar_select %p36, 0, %s35
    %s38 = sadd.s32 1, %s29
    %s39 = scalar_select %p36, %s38, %s29
    %p40 = scmp.ge.s32.totalorder %s39, 4
    %s41 = scalar_select %p40, 0, %s39
    %s42 = ssub.s32 %s29, %s41
    %s43 = ssub.s32 %s30, %s37
    %s44 = sor.u32 %s42, %s43
    %p45 = scmp.eq.s32.totalorder %s44, 0
    %s47 = sadd.s32 %s46, 1
    %s48 = scalar_select %p45, %s46, %s47
    %p51 = pneg %p45
    %p52 = scmp.eq.s32.totalorder %s22, 3
    %p53 = por %p51, %p52
    %p54 = scmp.ne.s32.totalorder %s46, %s49
    %p55 = scmp.eq.s32.totalorder %s22, 0
    %p56 = por %p54, %p55
    %p57 = scmp.ne.s32.totalorder %s46, %s49
    %p58 = scmp.eq.s32.totalorder %s27, 3
    %p59 = por %p57, %p58
    %p60 = scmp.ne.s32.totalorder %s49, %s50
    %p61 = scmp.eq.s32.totalorder %s27, 0
    %p62 = por %p60, %p61
    %p63 = scmp.ne.s32.totalorder %s49, %s50
    %p64 = scmp.eq.s32.totalorder %s28, 3
    %p65 = por %p63, %p64
    %p67 = scmp.ne.s32.totalorder %s50, %s66
    %p68 = scmp.eq.s32.totalorder %s28, 0
    %p69 = por %p67, %p68
    %s71 = sadd.s32 %s70, 1
    %p74 = scmp.eq.s32.totalorder %s22, 3
    %p75 = scmp.ne.s32.totalorder %s70, %s72
    %p76 = scmp.eq.s32.totalorder %s22, 0
    %p77 = por %p75, %p76
    %p78 = scmp.ne.s32.totalorder %s70, %s72
    %p79 = scmp.eq.s32.totalorder %s27, 3
    %p80 = por %p78, %p79
    %p81 = scmp.ne.s32.totalorder %s72, %s73
    %p82 = scmp.eq.s32.totalorder %s27, 0
    %p83 = por %p81, %p82
    %p84 = scmp.ne.s32.totalorder %s72, %s73
    %p85 = scmp.eq.s32.totalorder %s28, 3
    %p86 = por %p84, %p85
    %p88 = scmp.ne.s32.totalorder %s73, %s87
    %p89 = scmp.eq.s32.totalorder %s28, 0
    %p90 = por %p88, %p89
    %s92 = sadd.s32 %s91, 1
    %p95 = scmp.eq.s32.totalorder %s22, 3
    %p96 = scmp.ne.s32.totalorder %s91, %s93
    %p97 = scmp.eq.s32.totalorder %s22, 0
    %p98 = por %p96, %p97
    %p99 = scmp.ne.s32.totalorder %s91, %s93
    %p100 = scmp.eq.s32.totalorder %s27, 3
    %p101 = por %p99, %p100
    %p102 = scmp.ne.s32.totalorder %s93, %s94
    %p103 = scmp.eq.s32.totalorder %s27, 0
    %p104 = por %p102, %p103
    %p105 = scmp.ne.s32.totalorder %s93, %s94
    %p106 = scmp.eq.s32.totalorder %s28, 3
    %p107 = por %p105, %p106
    %p109 = scmp.ne.s32.totalorder %s94, %s108
    %p110 = scmp.eq.s32.totalorder %s28, 0
    %p111 = por %p109, %p110
    %s113 = sadd.s32 %s112, 1
    %p116 = scmp.eq.s32.totalorder %s22, 3
    %p117 = scmp.ne.s32.totalorder %s112, %s114
    %p118 = scmp.eq.s32.totalorder %s22, 0
    %p119 = por %p117, %p118
    %p120 = scmp.ne.s32.totalorder %s112, %s114
    %p121 = scmp.eq.s32.totalorder %s27, 3
    %p122 = por %p120, %p121
    %p123 = scmp.ne.s32.totalorder %s114, %s115
    %p124 = scmp.eq.s32.totalorder %s27, 0
    %p125 = por %p123, %p124
    %p126 = scmp.ne.s32.totalorder %s114, %s115
    %p127 = scmp.eq.s32.totalorder %s28, 3
    %p128 = por %p126, %p127
    %p130 = scmp.ne.s32.totalorder %s115, %s129
    %p131 = scmp.eq.s32.totalorder %s28, 0
    %p132 = por %p130, %p131
    %s134 = sadd.s32 %s133, 1
    %p137 = scmp.eq.s32.totalorder %s22, 3
    %p138 = scmp.ne.s32.totalorder %s133, %s135
    %p139 = scmp.eq.s32.totalorder %s22, 0
    %p140 = por %p138, %p139
    %p141 = scmp.ne.s32.totalorder %s133, %s135
    %p142 = scmp.eq.s32.totalorder %s27, 3
    %p143 = por %p141, %p142
    %p144 = scmp.ne.s32.totalorder %s135, %s136
    %p145 = scmp.eq.s32.totalorder %s27, 0
    %p146 = por %p144, %p145
    %p147 = scmp.ne.s32.totalorder %s135, %s136
    %p148 = scmp.eq.s32.totalorder %s28, 3
    %p149 = por %p147, %p148
    %p151 = scmp.ne.s32.totalorder %s136, %s150
    %p152 = scmp.eq.s32.totalorder %s28, 0
    %p153 = por %p151, %p152
    %s155 = sadd.s32 %s154, 1
    %p158 = scmp.eq.s32.totalorder %s22, 3
    %p159 = scmp.ne.s32.totalorder %s154, %s156
    %p160 = scmp.eq.s32.totalorder %s22, 0
    %p161 = por %p159, %p160
    %p162 = scmp.ne.s32.totalorder %s154, %s156
    %p163 = scmp.eq.s32.totalorder %s27, 3
    %p164 = por %p162, %p163
    %p165 = scmp.ne.s32.totalorder %s156, %s157
    %p166 = scmp.eq.s32.totalorder %s27, 0
    %p167 = por %p165, %p166
    %p168 = scmp.ne.s32.totalorder %s156, %s157
    %p169 = scmp.eq.s32.totalorder %s28, 3
    %p170 = por %p168, %p169
    %p172 = scmp.ne.s32.totalorder %s157, %s171
    %p173 = scmp.eq.s32.totalorder %s28, 0
    %p174 = por %p172, %p173
    %s176 = sadd.s32 %s175, 1
    %p179 = scmp.eq.s32.totalorder %s22, 3
    %p180 = scmp.ne.s32.totalorder %s175, %s177
    %p181 = scmp.eq.s32.totalorder %s22, 0
    %p182 = por %p180, %p181
    %p183 = scmp.ne.s32.totalorder %s175, %s177
    %p184 = scmp.eq.s32.totalorder %s27, 3
    %p185 = por %p183, %p184
    %p186 = scmp.ne.s32.totalorder %s177, %s178
    %p187 = scmp.eq.s32.totalorder %s27, 0
    %p188 = por %p186, %p187
    %p189 = scmp.ne.s32.totalorder %s177, %s178
    %p190 = scmp.eq.s32.totalorder %s28, 3
    %p191 = por %p189, %p190
    %p193 = scmp.ne.s32.totalorder %s178, %s192
    %p194 = scmp.eq.s32.totalorder %s28, 0
    %p195 = por %p193, %p194
    %s197 = sadd.s32 %s196, 1
    %p200 = scmp.eq.s32.totalorder %s22, 3
    %p201 = scmp.ne.s32.totalorder %s196, %s198
    %p202 = scmp.eq.s32.totalorder %s22, 0
    %p203 = por %p201, %p202
    %p204 = scmp.ne.s32.totalorder %s196, %s198
    %p205 = scmp.eq.s32.totalorder %s27, 3
    %p206 = por %p204, %p205
    %p207 = scmp.ne.s32.totalorder %s198, %s199
    %p208 = scmp.eq.s32.totalorder %s27, 0
    %p209 = por %p207, %p208
    %p210 = scmp.ne.s32.totalorder %s198, %s199
    %p211 = scmp.eq.s32.totalorder %s28, 3
    %p212 = por %p210, %p211
    %p214 = scmp.ne.s32.totalorder %s199, %s213
    %p215 = scmp.eq.s32.totalorder %s28, 0
    %p216 = por %p214, %p215
    %s218 = sadd.s32 %s217, 1
    %p221 = scmp.eq.s32.totalorder %s22, 3
    %p222 = scmp.ne.s32.totalorder %s217, %s219
    %p223 = scmp.eq.s32.totalorder %s22, 0
    %p224 = por %p222, %p223
    %p225 = scmp.ne.s32.totalorder %s217, %s219
    %p226 = scmp.eq.s32.totalorder %s27, 3
    %p227 = por %p225, %p226
    %p228 = scmp.ne.s32.totalorder %s219, %s220
    %p229 = scmp.eq.s32.totalorder %s27, 0
    %p230 = por %p228, %p229
    %p231 = scmp.ne.s32.totalorder %s219, %s220
    %p232 = scmp.eq.s32.totalorder %s28, 3
    %p233 = por %p231, %p232
    %p235 = scmp.ne.s32.totalorder %s220, %s234
    %p236 = scmp.eq.s32.totalorder %s28, 0
    %p237 = por %p235, %p236
    %s239 = sadd.s32 %s238, 1
    %p242 = scmp.eq.s32.totalorder %s22, 3
    %p243 = scmp.ne.s32.totalorder %s238, %s240
    %p244 = scmp.eq.s32.totalorder %s22, 0
    %p245 = por %p243, %p244
    %p246 = scmp.ne.s32.totalorder %s238, %s240
    %p247 = scmp.eq.s32.totalorder %s27, 3
    %p248 = por %p246, %p247
    %p249 = scmp.ne.s32.totalorder %s240, %s241
    %p250 = scmp.eq.s32.totalorder %s27, 0
    %p251 = por %p249, %p250
    %p252 = scmp.ne.s32.totalorder %s240, %s241
    %p253 = scmp.eq.s32.totalorder %s28, 3
    %p254 = por %p252, %p253
    %p256 = scmp.ne.s32.totalorder %s241, %s255
    %p257 = scmp.eq.s32.totalorder %s28, 0
    %p258 = por %p256, %p257
    %s259 = ssub.s32 %s29, %s41
    %s260 = ssub.s32 %s30, %s37
    %s261 = sor.u32 %s259, %s260
    %p262 = scmp.eq.s32.totalorder %s261, 0
    %s264 = sadd.s32 %s263, 1
    %s265 = scalar_select %p262, %s263, %s264
    %p268 = pneg %p262
    %p269 = scmp.eq.s32.totalorder %s22, 3
    %p270 = por %p268, %p269
    %p271 = scmp.ne.s32.totalorder %s263, %s266
    %p272 = scmp.eq.s32.totalorder %s22, 0
    %p273 = por %p271, %p272
    %p274 = scmp.ne.s32.totalorder %s263, %s266
    %p275 = scmp.eq.s32.totalorder %s27, 3
    %p276 = por %p274, %p275
    %p277 = scmp.ne.s32.totalorder %s266, %s267
    %p278 = scmp.eq.s32.totalorder %s27, 0
    %p279 = por %p277, %p278
    %p280 = scmp.ne.s32.totalorder %s266, %s267
    %p281 = scmp.eq.s32.totalorder %s28, 3
    %p282 = por %p280, %p281
    %p284 = scmp.ne.s32.totalorder %s267, %s283
    %p285 = scmp.eq.s32.totalorder %s28, 0
    %p286 = por %p284, %p285
    %s287 = ssub.s32 %s29, %s41
    %s288 = ssub.s32 %s30, %s37
    %s289 = sor.u32 %s287, %s288
    %p290 = scmp.eq.s32.totalorder %s289, 0
    %s292 = sadd.s32 %s291, 1
    %s293 = scalar_select %p290, %s291, %s292
    %p296 = pneg %p290
    %p297 = scmp.eq.s32.totalorder %s22, 3
    %p298 = por %p296, %p297
    %p299 = scmp.ne.s32.totalorder %s291, %s294
    %p300 = scmp.eq.s32.totalorder %s22, 0
    %p301 = por %p299, %p300
    %p302 = scmp.ne.s32.totalorder %s291, %s294
    %p303 = scmp.eq.s32.totalorder %s27, 3
    %p304 = por %p302, %p303
    %p305 = scmp.ne.s32.totalorder %s294, %s295
    %p306 = scmp.eq.s32.totalorder %s27, 0
    %p307 = por %p305, %p306
    %p308 = scmp.ne.s32.totalorder %s294, %s295
    %p309 = scmp.eq.s32.totalorder %s28, 3
    %p310 = por %p308, %p309
    %p312 = scmp.ne.s32.totalorder %s295, %s311
    %p313 = scmp.eq.s32.totalorder %s28, 0
    %p314 = por %p312, %p313
    %s315 = ssub.s32 %s29, %s41
    %s316 = ssub.s32 %s30, %s37
    %s317 = sor.u32 %s315, %s316
    %p318 = scmp.eq.s32.totalorder %s317, 0
    %s320 = sadd.s32 %s319, 1
    %s321 = scalar_select %p318, %s319, %s320
    %p324 = pneg %p318
    %p325 = scmp.eq.s32.totalorder %s22, 3
    %p326 = por %p324, %p325
    %p327 = scmp.ne.s32.totalorder %s319, %s322
    %p328 = scmp.eq.s32.totalorder %s22, 0
    %p329 = por %p327, %p328
    %p330 = scmp.ne.s32.totalorder %s319, %s322
    %p331 = scmp.eq.s32.totalorder %s27, 3
    %p332 = por %p330, %p331
    %p333 = scmp.ne.s32.totalorder %s322, %s323
    %p334 = scmp.eq.s32.totalorder %s27, 0
    %p335 = por %p333, %p334
    %p336 = scmp.ne.s32.totalorder %s322, %s323
    %p337 = scmp.eq.s32.totalorder %s28, 3
    %p338 = por %p336, %p337
    %p340 = scmp.ne.s32.totalorder %s323, %s339
    %p341 = scmp.eq.s32.totalorder %s28, 0
    %p342 = por %p340, %p341
    %s343 = ssub.s32 %s29, %s41
    %p344 = scmp.eq.s32.totalorder %s343, 0
    %s346 = sadd.s32 %s345, 1
    %s347 = scalar_select %p344, %s345, %s346
    %p350 = pneg %p344
    %p351 = scmp.eq.s32.totalorder %s22, 3
    %p352 = por %p350, %p351
    %p353 = scmp.ne.s32.totalorder %s345, %s348
    %p354 = scmp.eq.s32.totalorder %s22, 0
    %p355 = por %p353, %p354
    %p356 = scmp.ne.s32.totalorder %s345, %s348
    %p357 = scmp.eq.s32.totalorder %s27, 3
    %p358 = por %p356, %p357
    %p359 = scmp.ne.s32.totalorder %s348, %s349
    %p360 = scmp.eq.s32.totalorder %s27, 0
    %p361 = por %p359, %p360
    %p362 = scmp.ne.s32.totalorder %s348, %s349
    %p363 = scmp.eq.s32.totalorder %s28, 3
    %p364 = por %p362, %p363
    %p366 = scmp.ne.s32.totalorder %s349, %s365
    %p367 = scmp.eq.s32.totalorder %s28, 0
    %p368 = por %p366, %p367
    %s369 = ssub.s32 %s29, %s41
    %p370 = scmp.eq.s32.totalorder %s369, 0
    %s372 = sadd.s32 %s371, 1
    %s373 = scalar_select %p370, %s371, %s372
    %p376 = pneg %p370
    %p377 = scmp.eq.s32.totalorder %s22, 3
    %p378 = por %p376, %p377
    %p379 = scmp.ne.s32.totalorder %s371, %s374
    %p380 = scmp.eq.s32.totalorder %s22, 0
    %p381 = por %p379, %p380
    %p382 = scmp.ne.s32.totalorder %s371, %s374
    %p383 = scmp.eq.s32.totalorder %s27, 3
    %p384 = por %p382, %p383
    %p385 = scmp.ne.s32.totalorder %s374, %s375
    %p386 = scmp.eq.s32.totalorder %s27, 0
    %p387 = por %p385, %p386
    %p388 = scmp.ne.s32.totalorder %s374, %s375
    %p389 = scmp.eq.s32.totalorder %s28, 3
    %p390 = por %p388, %p389
    %p392 = scmp.ne.s32.totalorder %s375, %s391
    %p393 = scmp.eq.s32.totalorder %s28, 0
    %p394 = por %p392, %p393
    %s395 = ssub.s32 %s29, %s41
    %p396 = scmp.eq.s32.totalorder %s395, 0
    %s398 = sadd.s32 %s397, 1
    %s399 = scalar_select %p396, %s397, %s398
    %p402 = pneg %p396
    %p403 = scmp.eq.s32.totalorder %s22, 3
    %p404 = por %p402, %p403
    %p405 = scmp.ne.s32.totalorder %s397, %s400
    %p406 = scmp.eq.s32.totalorder %s22, 0
    %p407 = por %p405, %p406
    %p408 = scmp.ne.s32.totalorder %s397, %s400
    %p409 = scmp.eq.s32.totalorder %s27, 3
    %p410 = por %p408, %p409
    %p411 = scmp.ne.s32.totalorder %s400, %s401
    %p412 = scmp.eq.s32.totalorder %s27, 0
    %p413 = por %p411, %p412
    %p414 = scmp.ne.s32.totalorder %s400, %s401
    %p415 = scmp.eq.s32.totalorder %s28, 3
    %p416 = por %p414, %p415
    %p418 = scmp.ne.s32.totalorder %s401, %s417
    %p419 = scmp.eq.s32.totalorder %s28, 0
    %p420 = por %p418, %p419
    %p421 = scmp.le.s32.totalorder 1, %s22
    %p422 = scmp.lt.s32.totalorder %s22, 5
    %p423 = pnand %p421, %p422
    %p424 = pneg %p423
    // Predicated region
    $region9: #{neural_recon_forward.1} parent=5 // pred_check
      _
    $region10: #{neural_recon_forward.1} parent=5 // pred_check_branch
      %426 = sbr.rel (%p423) target = $region12
    $region11: #{neural_recon_forward.1} parent=5 // pred_region
      %s427 = ssub.s32 %s22, 1
      // Predicated region
      $region13: #{neural_recon_forward.1} parent=11 // pred_check
        %p428 = pneg %p83
      $region14: #{neural_recon_forward.1} parent=11 // pred_check_branch
        %430 = sbr.rel (%p428) target = $region16
      $region15: #{neural_recon_forward.1} parent=11 // pred_region
        _
      $region16: #{neural_recon_forward.1} parent=11 // pred_fallthru
        _
      // Predicated region
      $region17: #{neural_recon_forward.1} parent=11 // pred_check
        %p431 = pneg %p104
      $region18: #{neural_recon_forward.1} parent=11 // pred_check_branch
        %433 = sbr.rel (%p431) target = $region20
      $region19: #{neural_recon_forward.1} parent=11 // pred_region
        _
      $region20: #{neural_recon_forward.1} parent=11 // pred_fallthru
        _
      // Predicated region
      $region21: #{neural_recon_forward.1} parent=11 // pred_check
        %p434 = pneg %p125
      $region22: #{neural_recon_forward.1} parent=11 // pred_check_branch
        %436 = sbr.rel (%p434) target = $region24
      $region23: #{neural_recon_forward.1} parent=11 // pred_region
        _
      $region24: #{neural_recon_forward.1} parent=11 // pred_fallthru
        _
      // Predicated region
      $region25: #{neural_recon_forward.1} parent=11 // pred_check
        %p437 = pneg %p146
      $region26: #{neural_recon_forward.1} parent=11 // pred_check_branch
        %439 = sbr.rel (%p437) target = $region28
      $region27: #{neural_recon_forward.1} parent=11 // pred_region
        _
      $region28: #{neural_recon_forward.1} parent=11 // pred_fallthru
        _
      // Predicated region
      $region29: #{neural_recon_forward.1} parent=11 // pred_check
        %p440 = pneg %p167
      $region30: #{neural_recon_forward.1} parent=11 // pred_check_branch
        %442 = sbr.rel (%p440) target = $region32
      $region31: #{neural_recon_forward.1} parent=11 // pred_region
        _
      $region32: #{neural_recon_forward.1} parent=11 // pred_fallthru
        _
      // Predicated region
      $region33: #{neural_recon_forward.1} parent=11 // pred_check
        %p443 = pneg %p188
      $region34: #{neural_recon_forward.1} parent=11 // pred_check_branch
        %445 = sbr.rel (%p443) target = $region36
      $region35: #{neural_recon_forward.1} parent=11 // pred_region
        _
      $region36: #{neural_recon_forward.1} parent=11 // pred_fallthru
        _
      // Predicated region
      $region37: #{neural_recon_forward.1} parent=11 // pred_check
        %p446 = pneg %p209
      $region38: #{neural_recon_forward.1} parent=11 // pred_check_branch
        %448 = sbr.rel (%p446) target = $region40
      $region39: #{neural_recon_forward.1} parent=11 // pred_region
        _
      $region40: #{neural_recon_forward.1} parent=11 // pred_fallthru
        _
      // Predicated region
      $region41: #{neural_recon_forward.1} parent=11 // pred_check
        %p449 = pneg %p230
      $region42: #{neural_recon_forward.1} parent=11 // pred_check_branch
        %451 = sbr.rel (%p449) target = $region44
      $region43: #{neural_recon_forward.1} parent=11 // pred_region
        _
      $region44: #{neural_recon_forward.1} parent=11 // pred_fallthru
        _
      // Predicated region
      $region45: #{neural_recon_forward.1} parent=11 // pred_check
        %p452 = pneg %p251
      $region46: #{neural_recon_forward.1} parent=11 // pred_check_branch
        %454 = sbr.rel (%p452) target = $region48
      $region47: #{neural_recon_forward.1} parent=11 // pred_region
        _
      $region48: #{neural_recon_forward.1} parent=11 // pred_fallthru
        _
    $region12: #{neural_recon_forward.1} parent=5 // pred_fallthru
      _
    %p455 = scmp.lt.s32.totalorder %s22, 4
    // Predicated region
    $region49: #{neural_recon_forward.1} parent=5 // pred_check
      %p456 = pneg %p455
    $region50: #{neural_recon_forward.1} parent=5 // pred_check_branch
      %458 = sbr.rel (%p456) target = $region52
    $region51: #{neural_recon_forward.1} parent=5 // pred_region
      // Predicated region
      $region53: #{neural_recon_forward.1} parent=51 // pred_check
        %p459 = pneg %p56
      $region54: #{neural_recon_forward.1} parent=51 // pred_check_branch
        %461 = sbr.rel (%p459) target = $region56
      $region55: #{neural_recon_forward.1} parent=51 // pred_region
        %s462 = smul.u32 4, %s30
        %p463 = scmp.lt.s32.totalorder %s29, 3
        %s464 = scalar_select %p463, %s29, 3
        %p465 = scmp.lt.s32.totalorder %s462, 3
        %s466 = scalar_select %p465, %s462, 3
        %s467 = smul.addr %s464, 12
        %s468 = sadd.s32 %s466, %s467
        %s469 = smul.addr %s468, 8
        %s470 = scalar_lea.vmem %s0, %s469
        %s471 = smul.u32 4, %s30
      $region56: #{neural_recon_forward.1} parent=51 // pred_fallthru
        _
    $region52: #{neural_recon_forward.1} parent=5 // pred_fallthru
      _
    %p472 = scmp.le.s32.totalorder 1, %s22
    %p473 = scmp.lt.s32.totalorder %s22, 5
    %p474 = pnand %p472, %p473
    %p475 = pneg %p474
    // Predicated region
    $region57: #{neural_recon_forward.1} parent=5 // pred_check
      _
    $region58: #{neural_recon_forward.1} parent=5 // pred_check_branch
      %477 = sbr.rel (%p474) target = $region60
    $region59: #{neural_recon_forward.1} parent=5 // pred_region
      %s478 = ssub.s32 %s22, 1
      %s479 = smul.u32 4, %s32
      %p480 = scmp.lt.s32.totalorder %s31, 3
      %s481 = scalar_select %p480, %s31, 3
      %p482 = scmp.lt.s32.totalorder %s479, 3
      %s483 = scalar_select %p482, %s479, 3
      %s484 = smul.addr %s481, 12
      %s485 = sadd.s32 %s483, %s484
      %s486 = smul.addr %s485, 8
      %s487 = scalar_lea.vmem %s0, %s486
      %p488 = pneg %p62
      %p489 = pneg %p59
      %p490 = pneg %p83
      %p491 = pneg %p80
      %p492 = pneg %p104
      %p493 = pneg %p101
      %p494 = pneg %p125
      %p495 = pneg %p122
      %p496 = pneg %p146
      %p497 = pneg %p143
      %p498 = pneg %p167
      %p499 = pneg %p164
      %p500 = pneg %p188
      %p501 = pneg %p185
      %p502 = pneg %p209
      %p503 = pneg %p206
      %p504 = pneg %p230
      %p505 = pneg %p227
      %p506 = pneg %p251
      %p507 = pneg %p248
      %p508 = pneg %p279
      %p509 = pneg %p276
      %s510 = smul.u32 8, %s32
      %p511 = scmp.lt.s32.totalorder %s31, 3
      %s512 = scalar_select %p511, %s31, 3
      %p513 = scmp.lt.s32.totalorder %s510, 7
      %s514 = scalar_select %p513, %s510, 7
      %s515 = smul.addr %s514, 3
      %s516 = smul.addr %s512, 24
      %s517 = sadd.s32 %s515, %s516
      %s518 = smul.addr %s517, 4
      %s519 = scalar_lea.vmem %s10, %s518
      %p520 = pneg %p307
      %p521 = pneg %p304
      %s522 = smul.u32 4, %s32
      %p523 = scmp.lt.s32.totalorder %s31, 3
      %s524 = scalar_select %p523, %s31, 3
      %p525 = scmp.lt.s32.totalorder %s522, 3
      %s526 = scalar_select %p525, %s522, 3
      %s527 = smul.addr %s526, 5
      %s528 = smul.addr %s524, 20
      %s529 = sadd.s32 %s527, %s528
      %s530 = smul.addr %s529, 4
      %s531 = scalar_lea.vmem %s11, %s530
      %p532 = pneg %p335
      %p533 = pneg %p332
      %s534 = smul.u32 2, %s32
      %p535 = scmp.lt.s32.totalorder %s31, 3
      %s536 = scalar_select %p535, %s31, 3
      %p537 = scmp.lt.s32.totalorder %s534, 1
      %s538 = scalar_select %p537, %s534, 1
      %s539 = smul.addr %s538, 10
      %s540 = smul.addr %s536, 20
      %s541 = sadd.s32 %s539, %s540
      %s542 = smul.addr %s541, 4
      %s543 = scalar_lea.vmem %s12, %s542
      %p544 = pneg %p361
      %p545 = pneg %p358
      %p546 = scmp.lt.s32.totalorder %s31, 3
      %s547 = scalar_select %p546, %s31, 3
      %s548 = scalar_lea.vmem %s13, %s547
      %p549 = pneg %p387
      %p550 = pneg %p384
      %p551 = scmp.lt.s32.totalorder %s31, 3
      %s552 = scalar_select %p551, %s31, 3
      %s553 = scalar_lea.vmem %s14, %s552
      %p554 = pneg %p413
      %p555 = pneg %p410
      %p556 = scmp.lt.s32.totalorder %s31, 3
      %s557 = scalar_select %p556, %s31, 3
      %s558 = scalar_lea.vmem %s15, %s557
      %s559 = smul.u32 4, %s32
      %p560 = scmp.lt.s32.totalorder %s31, 3
      %s561 = scalar_select %p560, %s31, 3
      %p562 = scmp.lt.s32.totalorder %s559, 3
      %s563 = scalar_select %p562, %s559, 3
      %s564 = smul.addr %s561, 12
      %s565 = sadd.s32 %s563, %s564
      %s566 = smul.addr %s565, 8
      %s567 = scalar_lea.vmem %s0, %s566
      %s568 = smul.u32 4, %s32
      %s569 = smul.u32 8, %s32
      %p570 = scmp.lt.s32.totalorder %s31, 3
      %s571 = scalar_select %p570, %s31, 3
      %p572 = scmp.lt.s32.totalorder %s569, 7
      %s573 = scalar_select %p572, %s569, 7
      %s574 = smul.addr %s573, 3
      %s575 = smul.addr %s571, 24
      %s576 = sadd.s32 %s574, %s575
      %s577 = smul.addr %s576, 4
      %s578 = scalar_lea.vmem %s10, %s577
      %s579 = smul.u32 8, %s32
      %s580 = smul.u32 4, %s32
      %p581 = scmp.lt.s32.totalorder %s31, 3
      %s582 = scalar_select %p581, %s31, 3
      %p583 = scmp.lt.s32.totalorder %s580, 3
      %s584 = scalar_select %p583, %s580, 3
      %s585 = smul.addr %s584, 5
      %s586 = smul.addr %s582, 20
      %s587 = sadd.s32 %s585, %s586
      %s588 = smul.addr %s587, 4
      %s589 = scalar_lea.vmem %s11, %s588
      %s590 = smul.u32 4, %s32
      %s591 = smul.u32 2, %s32
      %p592 = scmp.lt.s32.totalorder %s31, 3
      %s593 = scalar_select %p592, %s31, 3
      %p594 = scmp.lt.s32.totalorder %s591, 1
      %s595 = scalar_select %p594, %s591, 1
      %s596 = smul.addr %s595, 10
      %s597 = smul.addr %s593, 20
      %s598 = sadd.s32 %s596, %s597
      %s599 = smul.addr %s598, 4
      %s600 = scalar_lea.vmem %s12, %s599
      %s601 = smul.u32 2, %s32
      %p602 = scmp.lt.s32.totalorder %s31, 3
      %s603 = scalar_select %p602, %s31, 3
      %s604 = scalar_lea.vmem %s13, %s603
      %p605 = scmp.lt.s32.totalorder %s31, 3
      %s606 = scalar_select %p605, %s31, 3
      %s607 = scalar_lea.vmem %s14, %s606
      %p608 = scmp.lt.s32.totalorder %s31, 3
      %s609 = scalar_select %p608, %s31, 3
      %s610 = scalar_lea.vmem %s15, %s609
      %p611 = scmp.eq.s32.totalorder %s32, 0
      // Predicated region
      $region61: #{neural_recon_forward.1} parent=59 // pred_check
        %p612 = pneg %p611
      $region62: #{neural_recon_forward.1} parent=59 // pred_check_branch
        %614 = sbr.rel (%p612) target = $region64
      $region63: #{neural_recon_forward.1} parent=59 // pred_region
        %vm615 = vcmask 0
        %616 = vst.msk [vmem:[%s604] sm:$0x1] %vm615, 0.0
        %617 = vst.msk [vmem:[%s607] sm:$0x1] %vm615, 0.0
        %618 = vst.msk [vmem:[%s610] sm:$0x1] %vm615, 0.0
      $region64: #{neural_recon_forward.1} parent=59 // pred_fallthru
        _
      %v619 = vld [vmem:[%s567] sm:$0xff]
      %v620 = vld [vmem:[%s567 + $0x8] sm:$0xff]
      %v621 = vld [vmem:[%s567 + $0x10] sm:$0xff]
      %v622 = vld [vmem:[%s567 + $0x18] sm:$0xff]
      %v623 = vld [vmem:[%s567 + $0x20] sm:$0xff]
      %v624 = vld [vmem:[%s567 + $0x28] sm:$0xff]
      %v625 = vld [vmem:[%s567 + $0x30] sm:$0xff]
      %v626 = vld [vmem:[%s567 + $0x38] sm:$0xff]
      %v627 = vld [vmem:[%s567 + $0x40] sm:$0xff]
      %v628 = vld [vmem:[%s567 + $0x48] sm:$0xff]
      %v629 = vld [vmem:[%s567 + $0x50] sm:$0xff]
      %v630 = vld [vmem:[%s567 + $0x58] sm:$0xff]
      %v631 = vld [vmem:[%s1] sm:$0xff]
      %v632 = vld [vmem:[%s1 + $0x8] sm:$0xff]
      %v633 = vld [vmem:[%s1 + $0x10] sm:$0xff]
      %v634 = vld [vmem:[%s1 + $0x18] sm:$0xff]
      %vm635 = vcmask 261120
      %v637 = vsel %vm635, %v619, 0
      %v640 = vsel %vm635, %v620, 0
      %v643 = vsel %vm635, %v621, 0
      %v646 = vsel %vm635, %v622, 0
      %v649 = vsel %vm635, %v623, 0
      %v652 = vsel %vm635, %v624, 0
      %v655 = vsel %vm635, %v625, 0
      %v658 = vsel %vm635, %v626, 0
      %v661 = vsel %vm635, %v627, 0
      %v664 = vsel %vm635, %v628, 0
      %v667 = vsel %vm635, %v629, 0
      %v670 = vsel %vm635, %v630, 0
      %672 = vmatprep.subr.mxu0 0.0
      %673 = vmatpush1.msra.mxu0 %v631
      %674 = vmatprep.subr.mxu0 0.0
      %675 = vmatpush1.msra.mxu0 %v632
      %676 = vmatprep.subr.mxu0 0.0
      %677 = vmatpush1.msra.mxu0 %v633
      %678 = vmatprep.subr.mxu0 0.0
      %679 = vmatpush1.msra.mxu0 %v634
      %680 = vmatprep.subr.mxu0 0.0
      %681 = vmatpush1.msra.mxu0 0.0
      %682 = vmatprep.subr.mxu0 0.0
      %683 = vmatpush1.msra.mxu0 0.0
      %684 = vmatprep.subr.mxu0 0.0
      %685 = vmatpush1.msra.mxu0 0.0
      %686 = vmatprep.subr.mxu0 0.0
      %687 = vmatpush1.msra.mxu0 0.0
      %688 = vmatprep.subr.mxu0 0.0
      %689 = vmatpush1.msra.mxu0 0.0
      %690 = vmatprep.subr.mxu0 0.0
      %691 = vmatpush1.msra.mxu0 0.0
      %692 = vmatprep.subr.mxu0 0.0
      %693 = vmatpush1.msra.mxu0 0.0
      %694 = vmatprep.subr.mxu0 0.0
      %695 = vmatpush1.msra.mxu0 0.0
      %696 = vmatprep.subr.mxu0 0.0
      %697 = vmatpush1.msra.mxu0 0.0
      %698 = vmatprep.subr.mxu0 0.0
      %699 = vmatpush1.msra.mxu0 0.0
      %700 = vmatprep.subr.mxu0 0.0
      %701 = vmatpush1.msra.mxu0 0.0
      %702 = vmatprep.subr.mxu0 0.0
      %703 = vmatpush1.msra.mxu0 0.0
      %704 = vmatprep.subr.mxu0 0.0
      %705 = vmatpush1.msra.mxu0 0.0
      %706 = vmatprep.subr.mxu0 0.0
      %707 = vmatpush1.msra.mxu0 0.0
      %708 = vmatprep.subr.mxu0 0.0
      %709 = vmatpush1.msra.mxu0 0.0
      %710 = vmatprep.subr.mxu0 0.0
      %711 = vmatpush1.msra.mxu0 0.0
      %712 = vmatprep.subr.mxu0 0.0
      %713 = vmatpush1.msra.mxu0 0.0
      %714 = vmatprep.subr.mxu0 0.0
      %715 = vmatpush1.msra.mxu0 0.0
      %716 = vmatprep.subr.mxu0 0.0
      %717 = vmatpush1.msra.mxu0 0.0
      %718 = vmatprep.subr.mxu0 0.0
      %719 = vmatpush1.msra.mxu0 0.0
      %720 = vmatprep.subr.mxu0 0.0
      %721 = vmatpush1.msra.mxu0 0.0
      %722 = vmatprep.subr.mxu0 0.0
      %723 = vmatpush1.msra.mxu0 0.0
      %724 = vmatprep.subr.mxu0 0.0
      %725 = vmatpush1.msra.mxu0 0.0
      %726 = vmatprep.subr.mxu0 0.0
      %727 = vmatpush1.msra.mxu0 0.0
      %728 = vmatprep.subr.mxu0 0.0
      %729 = vmatpush1.msra.mxu0 0.0
      %730 = vmatprep.subr.mxu0 0.0
      %731 = vmatpush1.msra.mxu0 0.0
      %732 = vmatprep.subr.mxu0 0.0
      %733 = vmatpush1.msra.mxu0 0.0
      %734 = vmatprep.subr.mxu0 0.0
      %735 = vmatpush1.msra.mxu0 0.0
      %736 = vmatprep.mubr.f32.mxu0 0.0
      %737 = vmatmul.mubr.f32.gmra.mrb[0].mxu0 %v637
      %v738 = vpop.f32.mrb[0].mxu0
      %v739 = vadd.f32 0.0, %v738
      %v740 = vpop.f32.mrb[0].mxu0
      %741 = vmatprep.mubr.f32.mxu0 0.0
      %742 = vmatmul.mubr.f32.gmra.mrb[0].mxu0 %v640
      %v743 = vpop.f32.mrb[0].mxu0
      %v744 = vadd.f32 0.0, %v743
      %v745 = vpop.f32.mrb[0].mxu0
      %746 = vmatprep.mubr.f32.mxu0 0.0
      %747 = vmatmul.mubr.f32.gmra.mrb[0].mxu0 %v643
      %v748 = vpop.f32.mrb[0].mxu0
      %v749 = vadd.f32 0.0, %v748
      %v750 = vpop.f32.mrb[0].mxu0
      %751 = vmatprep.mubr.f32.mxu0 0.0
      %752 = vmatmul.mubr.f32.gmra.mrb[0].mxu0 %v646
      %v753 = vpop.f32.mrb[0].mxu0
      %v754 = vadd.f32 0.0, %v753
      %v755 = vpop.f32.mrb[0].mxu0
      %756 = vmatprep.mubr.f32.mxu0 0.0
      %757 = vmatmul.mubr.f32.gmra.mrb[0].mxu0 %v649
      %v758 = vpop.f32.mrb[0].mxu0
      %v759 = vadd.f32 0.0, %v758
      %v760 = vpop.f32.mrb[0].mxu0
      %761 = vmatprep.mubr.f32.mxu0 0.0
      %762 = vmatmul.mubr.f32.gmra.mrb[0].mxu0 %v652
      %v763 = vpop.f32.mrb[0].mxu0
      %v764 = vadd.f32 0.0, %v763
      %v765 = vpop.f32.mrb[0].mxu0
      %766 = vmatprep.mubr.f32.mxu0 0.0
      %767 = vmatmul.mubr.f32.gmra.mrb[0].mxu0 %v655
      %v768 = vpop.f32.mrb[0].mxu0
      %v769 = vadd.f32 0.0, %v768
      %v770 = vpop.f32.mrb[0].mxu0
      %771 = vmatprep.mubr.f32.mxu0 0.0
      %772 = vmatmul.mubr.f32.gmra.mrb[0].mxu0 %v658
      %v773 = vpop.f32.mrb[0].mxu0
      %v774 = vadd.f32 0.0, %v773
      %v775 = vpop.f32.mrb[0].mxu0
      %776 = vmatprep.mubr.f32.mxu0 0.0
      %777 = vmatmul.mubr.f32.gmra.mrb[0].mxu0 %v661
      %v778 = vpop.f32.mrb[0].mxu0
      %v779 = vadd.f32 0.0, %v778
      %v780 = vpop.f32.mrb[0].mxu0
      %781 = vmatprep.mubr.f32.mxu0 0.0
      %782 = vmatmul.mubr.f32.gmra.mrb[0].mxu0 %v664
      %v783 = vpop.f32.mrb[0].mxu0
      %v784 = vadd.f32 0.0, %v783
      %v785 = vpop.f32.mrb[0].mxu0
      %786 = vmatprep.mubr.f32.mxu0 0.0
      %787 = vmatmul.mubr.f32.gmra.mrb[0].mxu0 %v667
      %v788 = vpop.f32.mrb[0].mxu0
      %v789 = vadd.f32 0.0, %v788
      %v790 = vpop.f32.mrb[0].mxu0
      %791 = vmatprep.mubr.f32.mxu0 0.0
      %792 = vmatmul.mubr.f32.gmra.mrb[0].mxu0 %v670
      %v793 = vpop.f32.mrb[0].mxu0
      %v794 = vadd.f32 0.0, %v793
      %v795 = vpop.f32.mrb[0].mxu0
      %796 = vdwg.mxu0
      %v797 = vld [vmem:[%s4] sm:$0xff]
      %v798 = vld [vmem:[%s4 + $0x8] sm:$0xff]
      %v799 = vld [vmem:[%s4 + $0x10] sm:$0xff]
      %v800 = vld [vmem:[%s4 + $0x18] sm:$0xff]
      %v801 = vld [vmem:[%s4 + $0x20] sm:$0xff]
      %v802 = vld [vmem:[%s4 + $0x28] sm:$0xff]
      %v803 = vld [vmem:[%s4 + $0x30] sm:$0xff]
      %v804 = vld [vmem:[%s4 + $0x38] sm:$0xff]
      %v805 = vld [vmem:[%s4 + $0x40] sm:$0xff]
      %v806 = vld [vmem:[%s4 + $0x48] sm:$0xff]
      %v807 = vld [vmem:[%s4 + $0x50] sm:$0xff]
      %v808 = vld [vmem:[%s4 + $0x58] sm:$0xff]
      %v809 = vld [vmem:[%s4 + $0x60] sm:$0xff]
      %v810 = vld [vmem:[%s4 + $0x68] sm:$0xff]
      %v811 = vld [vmem:[%s4 + $0x70] sm:$0xff]
      %v812 = vld [vmem:[%s4 + $0x78] sm:$0xff]
      %v813 = vld [vmem:[%s4 + $0x80] sm:$0xff]
      %v814 = vld [vmem:[%s4 + $0x88] sm:$0xff]
      %v815 = vld [vmem:[%s4 + $0x90] sm:$0xff]
      %v816 = vld [vmem:[%s4 + $0x98] sm:$0xff]
      %v817 = vld [vmem:[%s4 + $0xa0] sm:$0xff]
      %v818 = vld [vmem:[%s4 + $0xa8] sm:$0xff]
      %v819 = vld [vmem:[%s4 + $0xb0] sm:$0xff]
      %v820 = vld [vmem:[%s4 + $0xb8] sm:$0xff]
      %v821 = vld [vmem:[%s7] sm:$0xff]
      %v822 = vld [vmem:[%s7 + $0x8] sm:$0xff]
      %v823 = vld [vmem:[%s7 + $0x10] sm:$0xff]
      %v824 = vld [vmem:[%s7 + $0x18] sm:$0xff]
      %v825 = vld [vmem:[%s7 + $0x20] sm:$0xff]
      %v826 = vld [vmem:[%s7 + $0x28] sm:$0xff]
      %v827 = vld [vmem:[%s7 + $0x30] sm:$0xff]
      %v828 = vld [vmem:[%s7 + $0x38] sm:$0xff]
      %v829 = vld [vmem:[%s7 + $0x40] sm:$0xff]
      %v830 = vld [vmem:[%s7 + $0x48] sm:$0xff]
      %v831 = vld [vmem:[%s7 + $0x50] sm:$0xff]
      %v832 = vld [vmem:[%s7 + $0x58] sm:$0xff]
      %v833 = vld [vmem:[%s7 + $0x60] sm:$0xff]
      %v834 = vld [vmem:[%s7 + $0x68] sm:$0xff]
      %v835 = vld [vmem:[%s7 + $0x70] sm:$0xff]
      %v836 = vld [vmem:[%s7 + $0x78] sm:$0xff]
      %v837 = vld [vmem:[%s7 + $0x80] sm:$0xff]
      %v838 = vld [vmem:[%s7 + $0x88] sm:$0xff]
      %v839 = vld [vmem:[%s7 + $0x90] sm:$0xff]
      %v840 = vld [vmem:[%s7 + $0x98] sm:$0xff]
      %v841 = vld [vmem:[%s7 + $0xa0] sm:$0xff]
      %v842 = vld [vmem:[%s7 + $0xa8] sm:$0xff]
      %v843 = vld [vmem:[%s7 + $0xb0] sm:$0xff]
      %v844 = vld [vmem:[%s7 + $0xb8] sm:$0xff]
      %846 = vset.pattern.permute.xlu0 0
      %847 = vperm.xlu0 %846, %v821
      %v848 = vpop.permute.xlu0 %847
      %851 = vset.pattern.permute.xlu0 0
      %852 = vperm.xlu0 %851, %v822
      %v853 = vpop.permute.xlu0 %852
      %856 = vset.pattern.permute.xlu0 0
      %857 = vperm.xlu0 %856, %v823
      %v858 = vpop.permute.xlu0 %857
      %861 = vset.pattern.permute.xlu0 0
      %862 = vperm.xlu0 %861, %v824
      %v863 = vpop.permute.xlu0 %862
      %866 = vset.pattern.permute.xlu0 0
      %867 = vperm.xlu0 %866, %v825
      %v868 = vpop.permute.xlu0 %867
      %871 = vset.pattern.permute.xlu0 0
      %872 = vperm.xlu0 %871, %v826
      %v873 = vpop.permute.xlu0 %872
      %876 = vset.pattern.permute.xlu0 0
      %877 = vperm.xlu0 %876, %v827
      %v878 = vpop.permute.xlu0 %877
      %881 = vset.pattern.permute.xlu0 0
      %882 = vperm.xlu0 %881, %v828
      %v883 = vpop.permute.xlu0 %882
      %886 = vset.pattern.permute.xlu0 0
      %887 = vperm.xlu0 %886, %v829
      %v888 = vpop.permute.xlu0 %887
      %891 = vset.pattern.permute.xlu0 0
      %892 = vperm.xlu0 %891, %v830
      %v893 = vpop.permute.xlu0 %892
      %896 = vset.pattern.permute.xlu0 0
      %897 = vperm.xlu0 %896, %v831
      %v898 = vpop.permute.xlu0 %897
      %901 = vset.pattern.permute.xlu0 0
      %902 = vperm.xlu0 %901, %v832
      %v903 = vpop.permute.xlu0 %902
      %906 = vset.pattern.permute.xlu0 0
      %907 = vperm.xlu0 %906, %v833
      %v908 = vpop.permute.xlu0 %907
      %911 = vset.pattern.permute.xlu0 0
      %912 = vperm.xlu0 %911, %v834
      %v913 = vpop.permute.xlu0 %912
      %916 = vset.pattern.permute.xlu0 0
      %917 = vperm.xlu0 %916, %v835
      %v918 = vpop.permute.xlu0 %917
      %921 = vset.pattern.permute.xlu0 0
      %922 = vperm.xlu0 %921, %v836
      %v923 = vpop.permute.xlu0 %922
      %926 = vset.pattern.permute.xlu0 0
      %927 = vperm.xlu0 %926, %v837
      %v928 = vpop.permute.xlu0 %927
      %931 = vset.pattern.permute.xlu0 0
      %932 = vperm.xlu0 %931, %v838
      %v933 = vpop.permute.xlu0 %932
      %936 = vset.pattern.permute.xlu0 0
      %937 = vperm.xlu0 %936, %v839
      %v938 = vpop.permute.xlu0 %937
      %941 = vset.pattern.permute.xlu0 0
      %942 = vperm.xlu0 %941, %v840
      %v943 = vpop.permute.xlu0 %942
      %946 = vset.pattern.permute.xlu0 0
      %947 = vperm.xlu0 %946, %v841
      %v948 = vpop.permute.xlu0 %947
      %951 = vset.pattern.permute.xlu0 0
      %952 = vperm.xlu0 %951, %v842
      %v953 = vpop.permute.xlu0 %952
      %956 = vset.pattern.permute.xlu0 0
      %957 = vperm.xlu0 %956, %v843
      %v958 = vpop.permute.xlu0 %957
      %961 = vset.pattern.permute.xlu0 0
      %962 = vperm.xlu0 %961, %v844
      %v963 = vpop.permute.xlu0 %962
      %vm965 = vcmask 785408
      %v967 = vsel %vm965, %v797, 0
      %v970 = vsel %vm965, %v798, 0
      %v973 = vsel %vm965, %v799, 0
      %v976 = vsel %vm965, %v800, 0
      %v979 = vsel %vm965, %v801, 0
      %v982 = vsel %vm965, %v802, 0
      %v985 = vsel %vm965, %v803, 0
      %v988 = vsel %vm965, %v804, 0
      %v991 = vsel %vm965, %v805, 0
      %v994 = vsel %vm965, %v806, 0
      %v997 = vsel %vm965, %v807, 0
      %v1000 = vsel %vm965, %v808, 0
      %v1003 = vsel %vm965, %v809, 0
      %v1006 = vsel %vm965, %v810, 0
      %v1009 = vsel %vm965, %v811, 0
      %v1012 = vsel %vm965, %v812, 0
      %v1015 = vsel %vm965, %v813, 0
      %v1018 = vsel %vm965, %v814, 0
      %v1021 = vsel %vm965, %v815, 0
      %v1024 = vsel %vm965, %v816, 0
      %v1027 = vsel %vm965, %v817, 0
      %v1030 = vsel %vm965, %v818, 0
      %v1033 = vsel %vm965, %v819, 0
      %v1036 = vsel %vm965, %v820, 0
      %1038 = vmatprep.subr.mxu0 0.0
      %1039 = vmatpush1.msra.mxu0 %v739
      %1040 = vmatprep.subr.mxu0 0.0
      %1041 = vmatpush1.msra.mxu0 %v744
      %1042 = vmatprep.subr.mxu0 0.0
      %1043 = vmatpush1.msra.mxu0 %v749
      %1044 = vmatprep.subr.mxu0 0.0
      %1045 = vmatpush1.msra.mxu0 %v754
      %1046 = vmatprep.subr.mxu0 0.0
      %1047 = vmatpush1.msra.mxu0 %v759
      %1048 = vmatprep.subr.mxu0 0.0
      %1049 = vmatpush1.msra.mxu0 %v764
      %1050 = vmatprep.subr.mxu0 0.0
      %1051 = vmatpush1.msra.mxu0 %v769
      %1052 = vmatprep.subr.mxu0 0.0
      %1053 = vmatpush1.msra.mxu0 %v774
      %1054 = vmatprep.subr.mxu0 0.0
      %1055 = vmatpush1.msra.mxu0 %v779
      %1056 = vmatprep.subr.mxu0 0.0
      %1057 = vmatpush1.msra.mxu0 %v784
      %1058 = vmatprep.subr.mxu0 0.0
      %1059 = vmatpush1.msra.mxu0 %v789
      %1060 = vmatprep.subr.mxu0 0.0
      %1061 = vmatpush1.msra.mxu0 %v794
      %1062 = vmatprep.subr.mxu0 0.0
      %1063 = vmatpush1.msra.mxu0 0.0
      %1064 = vmatprep.subr.mxu0 0.0
      %1065 = vmatpush1.msra.mxu0 0.0
      %1066 = vmatprep.subr.mxu0 0.0
      %1067 = vmatpush1.msra.mxu0 0.0
      %1068 = vmatprep.subr.mxu0 0.0
      %1069 = vmatpush1.msra.mxu0 0.0
      %1070 = vmatprep.subr.mxu0 0.0
      %1071 = vmatpush1.msra.mxu0 0.0
      %1072 = vmatprep.subr.mxu0 0.0
      %1073 = vmatpush1.msra.mxu0 0.0
      %1074 = vmatprep.subr.mxu0 0.0
      %1075 = vmatpush1.msra.mxu0 0.0
      %1076 = vmatprep.subr.mxu0 0.0
      %1077 = vmatpush1.msra.mxu0 0.0
      %1078 = vmatprep.subr.mxu0 0.0
      %1079 = vmatpush1.msra.mxu0 0.0
      %1080 = vmatprep.subr.mxu0 0.0
      %1081 = vmatpush1.msra.mxu0 0.0
      %1082 = vmatprep.subr.mxu0 0.0
      %1083 = vmatpush1.msra.mxu0 0.0
      %1084 = vmatprep.subr.mxu0 0.0
      %1085 = vmatpush1.msra.mxu0 0.0
      %1086 = vmatprep.subr.mxu0 0.0
      %1087 = vmatpush1.msra.mxu0 0.0
      %1088 = vmatprep.subr.mxu0 0.0
      %1089 = vmatpush1.msra.mxu0 0.0
      %1090 = vmatprep.subr.mxu0 0.0
      %1091 = vmatpush1.msra.mxu0 0.0
      %1092 = vmatprep.subr.mxu0 0.0
      %1093 = vmatpush1.msra.mxu0 0.0
      %1094 = vmatprep.subr.mxu0 0.0
      %1095 = vmatpush1.msra.mxu0 0.0
      %1096 = vmatprep.subr.mxu0 0.0
      %1097 = vmatpush1.msra.mxu0 0.0
      %1098 = vmatprep.subr.mxu0 0.0
      %1099 = vmatpush1.msra.mxu0 0.0
      %1100 = vmatprep.subr.mxu0 0.0
      %1101 = vmatpush1.msra.mxu0 0.0
      %1102 = vmatprep.mubr.f32.mxu0 0.0
      %1103 = vmatmul.mubr.f32.gmra.mrb[0].mxu0 %v967
      %v1104 = vpop.f32.mrb[0].mxu0
      %v1105 = vadd.f32 %v848, %v1104
      %v1106 = vpop.f32.mrb[0].mxu0
      %1107 = vmatprep.mubr.f32.mxu0 0.0
      %1108 = vmatmul.mubr.f32.gmra.mrb[0].mxu0 %v970
      %v1109 = vpop.f32.mrb[0].mxu0
      %v1110 = vadd.f32 %v853, %v1109
      %v1111 = vpop.f32.mrb[0].mxu0
      %1112 = vmatprep.mubr.f32.mxu0 0.0
      %1113 = vmatmul.mubr.f32.gmra.mrb[0].mxu0 %v973
      %v1114 = vpop.f32.mrb[0].mxu0
      %v1115 = vadd.f32 %v858, %v1114
      %v1116 = vpop.f32.mrb[0].mxu0
      %1117 = vmatprep.mubr.f32.mxu0 0.0
      %1118 = vmatmul.mubr.f32.gmra.mrb[0].mxu0 %v976
      %v1119 = vpop.f32.mrb[0].mxu0
      %v1120 = vadd.f32 %v863, %v1119
      %v1121 = vpop.f32.mrb[0].mxu0
      %1122 = vmatprep.mubr.f32.mxu0 0.0
      %1123 = vmatmul.mubr.f32.gmra.mrb[0].mxu0 %v979
      %v1124 = vpop.f32.mrb[0].mxu0
      %v1125 = vadd.f32 %v868, %v1124
      %v1126 = vpop.f32.mrb[0].mxu0
      %1127 = vmatprep.mubr.f32.mxu0 0.0
      %1128 = vmatmul.mubr.f32.gmra.mrb[0].mxu0 %v982
      %v1129 = vpop.f32.mrb[0].mxu0
      %v1130 = vadd.f32 %v873, %v1129
      %v1131 = vpop.f32.mrb[0].mxu0
      %1132 = vmatprep.mubr.f32.mxu0 0.0
      %1133 = vmatmul.mubr.f32.gmra.mrb[0].mxu0 %v985
      %v1134 = vpop.f32.mrb[0].mxu0
      %v1135 = vadd.f32 %v878, %v1134
      %v1136 = vpop.f32.mrb[0].mxu0
      %1137 = vmatprep.mubr.f32.mxu0 0.0
      %1138 = vmatmul.mubr.f32.gmra.mrb[0].mxu0 %v988
      %v1139 = vpop.f32.mrb[0].mxu0
      %v1140 = vadd.f32 %v883, %v1139
      %v1141 = vpop.f32.mrb[0].mxu0
      %1142 = vmatprep.mubr.f32.mxu0 0.0
      %1143 = vmatmul.mubr.f32.gmra.mrb[0].mxu0 %v991
      %v1144 = vpop.f32.mrb[0].mxu0
      %v1145 = vadd.f32 %v888, %v1144
      %v1146 = vpop.f32.mrb[0].mxu0
      %1147 = vmatprep.mubr.f32.mxu0 0.0
      %1148 = vmatmul.mubr.f32.gmra.mrb[0].mxu0 %v994
      %v1149 = vpop.f32.mrb[0].mxu0
      %v1150 = vadd.f32 %v893, %v1149
      %v1151 = vpop.f32.mrb[0].mxu0
      %1152 = vmatprep.mubr.f32.mxu0 0.0
      %1153 = vmatmul.mubr.f32.gmra.mrb[0].mxu0 %v997
      %v1154 = vpop.f32.mrb[0].mxu0
      %v1155 = vadd.f32 %v898, %v1154
      %v1156 = vpop.f32.mrb[0].mxu0
      %1157 = vmatprep.mubr.f32.mxu0 0.0
      %1158 = vmatmul.mubr.f32.gmra.mrb[0].mxu0 %v1000
      %v1159 = vpop.f32.mrb[0].mxu0
      %v1160 = vadd.f32 %v903, %v1159
      %v1161 = vpop.f32.mrb[0].mxu0
      %1162 = vmatprep.mubr.f32.mxu0 0.0
      %1163 = vmatmul.mubr.f32.gmra.mrb[0].mxu0 %v1003
      %v1164 = vpop.f32.mrb[0].mxu0
      %v1165 = vadd.f32 %v908, %v1164
      %v1166 = vpop.f32.mrb[0].mxu0
      %1167 = vmatprep.mubr.f32.mxu0 0.0
      %1168 = vmatmul.mubr.f32.gmra.mrb[0].mxu0 %v1006
      %v1169 = vpop.f32.mrb[0].mxu0
      %v1170 = vadd.f32 %v913, %v1169
      %v1171 = vpop.f32.mrb[0].mxu0
      %1172 = vmatprep.mubr.f32.mxu0 0.0
      %1173 = vmatmul.mubr.f32.gmra.mrb[0].mxu0 %v1009
      %v1174 = vpop.f32.mrb[0].mxu0
      %v1175 = vadd.f32 %v918, %v1174
      %v1176 = vpop.f32.mrb[0].mxu0
      %1177 = vmatprep.mubr.f32.mxu0 0.0
      %1178 = vmatmul.mubr.f32.gmra.mrb[0].mxu0 %v1012
      %v1179 = vpop.f32.mrb[0].mxu0
      %v1180 = vadd.f32 %v923, %v1179
      %v1181 = vpop.f32.mrb[0].mxu0
      %1182 = vmatprep.mubr.f32.mxu0 0.0
      %1183 = vmatmul.mubr.f32.gmra.mrb[0].mxu0 %v1015
      %v1184 = vpop.f32.mrb[0].mxu0
      %v1185 = vadd.f32 %v928, %v1184
      %v1186 = vpop.f32.mrb[0].mxu0
      %1187 = vmatprep.mubr.f32.mxu0 0.0
      %1188 = vmatmul.mubr.f32.gmra.mrb[0].mxu0 %v1018
      %v1189 = vpop.f32.mrb[0].mxu0
      %v1190 = vadd.f32 %v933, %v1189
      %v1191 = vpop.f32.mrb[0].mxu0
      %1192 = vmatprep.mubr.f32.mxu0 0.0
      %1193 = vmatmul.mubr.f32.gmra.mrb[0].mxu0 %v1021
      %v1194 = vpop.f32.mrb[0].mxu0
      %v1195 = vadd.f32 %v938, %v1194
      %v1196 = vpop.f32.mrb[0].mxu0
      %1197 = vmatprep.mubr.f32.mxu0 0.0
      %1198 = vmatmul.mubr.f32.gmra.mrb[0].mxu0 %v1024
      %v1199 = vpop.f32.mrb[0].mxu0
      %v1200 = vadd.f32 %v943, %v1199
      %v1201 = vpop.f32.mrb[0].mxu0
      %1202 = vmatprep.mubr.f32.mxu0 0.0
      %1203 = vmatmul.mubr.f32.gmra.mrb[0].mxu0 %v1027
      %v1204 = vpop.f32.mrb[0].mxu0
      %v1205 = vadd.f32 %v948, %v1204
      %v1206 = vpop.f32.mrb[0].mxu0
      %1207 = vmatprep.mubr.f32.mxu0 0.0
      %1208 = vmatmul.mubr.f32.gmra.mrb[0].mxu0 %v1030
      %v1209 = vpop.f32.mrb[0].mxu0
      %v1210 = vadd.f32 %v953, %v1209
      %v1211 = vpop.f32.mrb[0].mxu0
      %1212 = vmatprep.mubr.f32.mxu0 0.0
      %1213 = vmatmul.mubr.f32.gmra.mrb[0].mxu0 %v1033
      %v1214 = vpop.f32.mrb[0].mxu0
      %v1215 = vadd.f32 %v958, %v1214
      %v1216 = vpop.f32.mrb[0].mxu0
      %1217 = vmatprep.mubr.f32.mxu0 0.0
      %1218 = vmatmul.mubr.f32.gmra.mrb[0].mxu0 %v1036
      %v1219 = vpop.f32.mrb[0].mxu0
      %v1220 = vadd.f32 %v963, %v1219
      %v1221 = vpop.f32.mrb[0].mxu0
      %1222 = vdwg.mxu0
      %v1223 = vmax.f32 %v1105, 0.0
      %v1224 = vmax.f32 %v1110, 0.0
      %v1225 = vmax.f32 %v1115, 0.0
      %v1226 = vmax.f32 %v1120, 0.0
      %v1227 = vmax.f32 %v1125, 0.0
      %v1228 = vmax.f32 %v1130, 0.0
      %v1229 = vmax.f32 %v1135, 0.0
      %v1230 = vmax.f32 %v1140, 0.0
      %v1231 = vmax.f32 %v1145, 0.0
      %v1232 = vmax.f32 %v1150, 0.0
      %v1233 = vmax.f32 %v1155, 0.0
      %v1234 = vmax.f32 %v1160, 0.0
      %v1235 = vmax.f32 %v1165, 0.0
      %v1236 = vmax.f32 %v1170, 0.0
      %v1237 = vmax.f32 %v1175, 0.0
      %v1238 = vmax.f32 %v1180, 0.0
      %v1239 = vmax.f32 %v1185, 0.0
      %v1240 = vmax.f32 %v1190, 0.0
      %v1241 = vmax.f32 %v1195, 0.0
      %v1242 = vmax.f32 %v1200, 0.0
      %v1243 = vmax.f32 %v1205, 0.0
      %v1244 = vmax.f32 %v1210, 0.0
      %v1245 = vmax.f32 %v1215, 0.0
      %v1246 = vmax.f32 %v1220, 0.0
      %v1247 = vpack.c.bf16 %v1224, %v1223
      %v1248 = vpack.c.bf16 %v1225, %v1225
      %v1249 = vpack.c.bf16 %v1227, %v1226
      %v1250 = vpack.c.bf16 %v1228, %v1228
      %v1251 = vpack.c.bf16 %v1230, %v1229
      %v1252 = vpack.c.bf16 %v1231, %v1231
      %v1253 = vpack.c.bf16 %v1233, %v1232
      %v1254 = vpack.c.bf16 %v1234, %v1234
      %v1255 = vpack.c.bf16 %v1236, %v1235
      %v1256 = vpack.c.bf16 %v1237, %v1237
      %v1257 = vpack.c.bf16 %v1239, %v1238
      %v1258 = vpack.c.bf16 %v1240, %v1240
      %v1259 = vpack.c.bf16 %v1242, %v1241
      %v1260 = vpack.c.bf16 %v1243, %v1243
      %v1261 = vpack.c.bf16 %v1245, %v1244
      %v1262 = vpack.c.bf16 %v1246, %v1246
      %v1279 = vunpack.c.l.b16 %v1247
      %v1280 = vunpack.c.h.b16 %v1247
      %v1281 = vunpack.c.l.b16 %v1248
      %v1282 = vunpack.c.l.b16 %v1249
      %v1283 = vunpack.c.h.b16 %v1249
      %v1284 = vunpack.c.l.b16 %v1250
      %v1285 = vunpack.c.l.b16 %v1251
      %v1286 = vunpack.c.h.b16 %v1251
      %v1287 = vunpack.c.l.b16 %v1252
      %v1288 = vunpack.c.l.b16 %v1253
      %v1289 = vunpack.c.h.b16 %v1253
      %v1290 = vunpack.c.l.b16 %v1254
      %v1291 = vunpack.c.l.b16 %v1255
      %v1292 = vunpack.c.h.b16 %v1255
      %v1293 = vunpack.c.l.b16 %v1256
      %v1294 = vunpack.c.l.b16 %v1257
      %v1295 = vunpack.c.h.b16 %v1257
      %v1296 = vunpack.c.l.b16 %v1258
      %v1297 = vunpack.c.l.b16 %v1259
      %v1298 = vunpack.c.h.b16 %v1259
      %v1299 = vunpack.c.l.b16 %v1260
      %v1300 = vunpack.c.l.b16 %v1261
      %v1301 = vunpack.c.h.b16 %v1261
      %v1302 = vunpack.c.l.b16 %v1262
      %v1303 = vpack.c.b16 %v1279, %v1279
      %v1304 = vpack.c.b16 %v1280, %v1280
      %v1305 = vpack.c.b16 %v1281, %v1281
      %v1306 = vpack.c.b16 %v1282, %v1282
      %v1307 = vpack.c.b16 %v1283, %v1283
      %v1308 = vpack.c.b16 %v1284, %v1284
      %v1309 = vpack.c.b16 %v1285, %v1285
      %v1310 = vpack.c.b16 %v1286, %v1286
      %v1311 = vpack.c.b16 %v1287, %v1287
      %v1312 = vpack.c.b16 %v1288, %v1288
      %v1313 = vpack.c.b16 %v1289, %v1289
      %v1314 = vpack.c.b16 %v1290, %v1290
      %v1315 = vpack.c.b16 %v1291, %v1291
      %v1316 = vpack.c.b16 %v1292, %v1292
      %v1317 = vpack.c.b16 %v1293, %v1293
      %v1318 = vpack.c.b16 %v1294, %v1294
      %v1319 = vpack.c.b16 %v1295, %v1295
      %v1320 = vpack.c.b16 %v1296, %v1296
      %v1321 = vpack.c.b16 %v1297, %v1297
      %v1322 = vpack.c.b16 %v1298, %v1298
      %v1323 = vpack.c.b16 %v1299, %v1299
      %v1324 = vpack.c.b16 %v1300, %v1300
      %v1325 = vpack.c.b16 %v1301, %v1301
      %v1326 = vpack.c.b16 %v1302, %v1302
      %vm1351 = vcmask 60416
      %1352 = vst.msk [vmem:[%s578] sm:$0xf] %vm1351, %v1303
      %1353 = vst.msk [vmem:[%s578 + $0x4] sm:$0xf] %vm1351, %v1304
      %1354 = vst.msk [vmem:[%s578 + $0x8] sm:$0xf] %vm1351, %v1305
      %1355 = vst.msk [vmem:[%s578 + $0xc] sm:$0xf] %vm1351, %v1306
      %1356 = vst.msk [vmem:[%s578 + $0x10] sm:$0xf] %vm1351, %v1307
      %1357 = vst.msk [vmem:[%s578 + $0x14] sm:$0xf] %vm1351, %v1308
      %1358 = vst.msk [vmem:[%s578 + $0x18] sm:$0xf] %vm1351, %v1309
      %1359 = vst.msk [vmem:[%s578 + $0x1c] sm:$0xf] %vm1351, %v1310
      %1360 = vst.msk [vmem:[%s578 + $0x20] sm:$0xf] %vm1351, %v1311
      %1361 = vst.msk [vmem:[%s578 + $0x24] sm:$0xf] %vm1351, %v1312
      %1362 = vst.msk [vmem:[%s578 + $0x28] sm:$0xf] %vm1351, %v1313
      %1363 = vst.msk [vmem:[%s578 + $0x2c] sm:$0xf] %vm1351, %v1314
      %1364 = vst.msk [vmem:[%s578 + $0x30] sm:$0xf] %vm1351, %v1315
      %1365 = vst.msk [vmem:[%s578 + $0x34] sm:$0xf] %vm1351, %v1316
      %1366 = vst.msk [vmem:[%s578 + $0x38] sm:$0xf] %vm1351, %v1317
      %1367 = vst.msk [vmem:[%s578 + $0x3c] sm:$0xf] %vm1351, %v1318
      %1368 = vst.msk [vmem:[%s578 + $0x40] sm:$0xf] %vm1351, %v1319
      %1369 = vst.msk [vmem:[%s578 + $0x44] sm:$0xf] %vm1351, %v1320
      %1370 = vst.msk [vmem:[%s578 + $0x48] sm:$0xf] %vm1351, %v1321
      %1371 = vst.msk [vmem:[%s578 + $0x4c] sm:$0xf] %vm1351, %v1322
      %1372 = vst.msk [vmem:[%s578 + $0x50] sm:$0xf] %vm1351, %v1323
      %1373 = vst.msk [vmem:[%s578 + $0x54] sm:$0xf] %vm1351, %v1324
      %1374 = vst.msk [vmem:[%s578 + $0x58] sm:$0xf] %vm1351, %v1325
      %1375 = vst.msk [vmem:[%s578 + $0x5c] sm:$0xf] %vm1351, %v1326
      %v1376 = vld [vmem:[%s604] sm:$0x1]
      %v1377 = vmul.f32 %v1223, %v1223
      %v1378 = vmul.f32 %v1224, %v1224
      %v1379 = vmul.f32 %v1225, %v1225
      %v1380 = vmul.f32 %v1226, %v1226
      %v1381 = vmul.f32 %v1227, %v1227
      %v1382 = vmul.f32 %v1228, %v1228
      %v1383 = vmul.f32 %v1229, %v1229
      %v1384 = vmul.f32 %v1230, %v1230
      %v1385 = vmul.f32 %v1231, %v1231
      %v1386 = vmul.f32 %v1232, %v1232
      %v1387 = vmul.f32 %v1233, %v1233
      %v1388 = vmul.f32 %v1234, %v1234
      %v1389 = vmul.f32 %v1235, %v1235
      %v1390 = vmul.f32 %v1236, %v1236
      %v1391 = vmul.f32 %v1237, %v1237
      %v1392 = vmul.f32 %v1238, %v1238
      %v1393 = vmul.f32 %v1239, %v1239
      %v1394 = vmul.f32 %v1240, %v1240
      %v1395 = vmul.f32 %v1241, %v1241
      %v1396 = vmul.f32 %v1242, %v1242
      %v1397 = vmul.f32 %v1243, %v1243
      %v1398 = vmul.f32 %v1244, %v1244
      %v1399 = vmul.f32 %v1245, %v1245
      %v1400 = vmul.f32 %v1246, %v1246
      %vm1401 = vcmask 64512
      %v1402 = vsel %vm1401, %v1377, 0.0
      %v1403 = vsel %vm1401, %v1378, 0.0
      %v1404 = vadd.f32 %v1402, %v1403
      %v1405 = vsel %vm1401, %v1379, 0.0
      %v1406 = vadd.f32 %v1404, %v1405
      %v1407 = vsel %vm1401, %v1380, 0.0
      %v1408 = vadd.f32 %v1406, %v1407
      %v1409 = vsel %vm1401, %v1381, 0.0
      %v1410 = vadd.f32 %v1408, %v1409
      %v1411 = vsel %vm1401, %v1382, 0.0
      %v1412 = vadd.f32 %v1410, %v1411
      %v1413 = vsel %vm1401, %v1383, 0.0
      %v1414 = vadd.f32 %v1412, %v1413
      %v1415 = vsel %vm1401, %v1384, 0.0
      %v1416 = vadd.f32 %v1414, %v1415
      %v1417 = vsel %vm1401, %v1385, 0.0
      %v1418 = vadd.f32 %v1416, %v1417
      %v1419 = vsel %vm1401, %v1386, 0.0
      %v1420 = vadd.f32 %v1418, %v1419
      %v1421 = vsel %vm1401, %v1387, 0.0
      %v1422 = vadd.f32 %v1420, %v1421
      %v1423 = vsel %vm1401, %v1388, 0.0
      %v1424 = vadd.f32 %v1422, %v1423
      %v1425 = vsel %vm1401, %v1389, 0.0
      %v1426 = vadd.f32 %v1424, %v1425
      %v1427 = vsel %vm1401, %v1390, 0.0
      %v1428 = vadd.f32 %v1426, %v1427
      %v1429 = vsel %vm1401, %v1391, 0.0
      %v1430 = vadd.f32 %v1428, %v1429
      %v1431 = vsel %vm1401, %v1392, 0.0
      %v1432 = vadd.f32 %v1430, %v1431
      %v1433 = vsel %vm1401, %v1393, 0.0
      %v1434 = vadd.f32 %v1432, %v1433
      %v1435 = vsel %vm1401, %v1394, 0.0
      %v1436 = vadd.f32 %v1434, %v1435
      %v1437 = vsel %vm1401, %v1395, 0.0
      %v1438 = vadd.f32 %v1436, %v1437
      %v1439 = vsel %vm1401, %v1396, 0.0
      %v1440 = vadd.f32 %v1438, %v1439
      %v1441 = vsel %vm1401, %v1397, 0.0
      %v1442 = vadd.f32 %v1440, %v1441
      %v1443 = vsel %vm1401, %v1398, 0.0
      %v1444 = vadd.f32 %v1442, %v1443
      %v1445 = vsel %vm1401, %v1399, 0.0
      %v1446 = vadd.f32 %v1444, %v1445
      %v1447 = vsel %vm1401, %v1400, 0.0
      %v1448 = vadd.f32 %v1446, %v1447
      %1449 = vadd.xlane.f32.xlu0 %v1448
      %v1450 = vpop.xlane.xlu0 %1449
      %v1451 = vrot.slane %v1450, 4
      %v1452 = vadd.f32 %v1450, %v1451
      %v1453 = vrot.slane %v1452, 2
      %v1454 = vadd.f32 %v1452, %v1453
      %v1455 = vrot.slane %v1454, 1
      %v1456 = vadd.f32 %v1454, %v1455
      %s1457 = vtos %v1456
      %v1458 = vstv %s1457
      %v1459 = vadd.f32 %v1376, %v1458
      %vm1460 = vcmask 0
      %1461 = vst.msk [vmem:[%s604] sm:$0x1] %vm1460, %v1459
      %v1462 = vld [vmem:[%s2] sm:$0xff]
      %v1464 = vsel %vm1401, %v739, 0
      %v1467 = vsel %vm1401, %v744, 0
      %v1470 = vsel %vm1401, %v749, 0
      %v1473 = vsel %vm1401, %v754, 0
      %v1476 = vsel %vm1401, %v759, 0
      %v1479 = vsel %vm1401, %v764, 0
      %v1482 = vsel %vm1401, %v769, 0
      %v1485 = vsel %vm1401, %v774, 0
      %v1488 = vsel %vm1401, %v779, 0
      %v1491 = vsel %vm1401, %v784, 0
      %v1494 = vsel %vm1401, %v789, 0
      %v1497 = vsel %vm1401, %v794, 0
      %1499 = vmatprep.subr.mxu0 0.0
      %1500 = vmatpush1.msra.mxu0 %v1462
      %1501 = vmatprep.subr.mxu0 0.0
      %1502 = vmatpush1.msra.mxu0 0.0
      %1503 = vmatprep.subr.mxu0 0.0
      %1504 = vmatpush1.msra.mxu0 0.0
      %1505 = vmatprep.subr.mxu0 0.0
      %1506 = vmatpush1.msra.mxu0 0.0
      %1507 = vmatprep.subr.mxu0 0.0
      %1508 = vmatpush1.msra.mxu0 0.0
      %1509 = vmatprep.subr.mxu0 0.0
      %1510 = vmatpush1.msra.mxu0 0.0
      %1511 = vmatprep.subr.mxu0 0.0
      %1512 = vmatpush1.msra.mxu0 0.0
      %1513 = vmatprep.subr.mxu0 0.0
      %1514 = vmatpush1.msra.mxu0 0.0
      %1515 = vmatprep.subr.mxu0 0.0
      %1516 = vmatpush1.msra.mxu0 0.0
      %1517 = vmatprep.subr.mxu0 0.0
      %1518 = vmatpush1.msra.mxu0 0.0
      %1519 = vmatprep.subr.mxu0 0.0
      %1520 = vmatpush1.msra.mxu0 0.0
      %1521 = vmatprep.subr.mxu0 0.0
      %1522 = vmatpush1.msra.mxu0 0.0
      %1523 = vmatprep.subr.mxu0 0.0
      %1524 = vmatpush1.msra.mxu0 0.0
      %1525 = vmatprep.subr.mxu0 0.0
      %1526 = vmatpush1.msra.mxu0 0.0
      %1527 = vmatprep.subr.mxu0 0.0
      %1528 = vmatpush1.msra.mxu0 0.0
      %1529 = vmatprep.subr.mxu0 0.0
      %1530 = vmatpush1.msra.mxu0 0.0
      %1531 = vmatprep.subr.mxu0 0.0
      %1532 = vmatpush1.msra.mxu0 0.0
      %1533 = vmatprep.subr.mxu0 0.0
      %1534 = vmatpush1.msra.mxu0 0.0
      %1535 = vmatprep.subr.mxu0 0.0
      %1536 = vmatpush1.msra.mxu0 0.0
      %1537 = vmatprep.subr.mxu0 0.0
      %1538 = vmatpush1.msra.mxu0 0.0
      %1539 = vmatprep.subr.mxu0 0.0
      %1540 = vmatpush1.msra.mxu0 0.0
      %1541 = vmatprep.subr.mxu0 0.0
      %1542 = vmatpush1.msra.mxu0 0.0
      %1543 = vmatprep.subr.mxu0 0.0
      %1544 = vmatpush1.msra.mxu0 0.0
      %1545 = vmatprep.subr.mxu0 0.0
      %1546 = vmatpush1.msra.mxu0 0.0
      %1547 = vmatprep.subr.mxu0 0.0
      %1548 = vmatpush1.msra.mxu0 0.0
      %1549 = vmatprep.subr.mxu0 0.0
      %1550 = vmatpush1.msra.mxu0 0.0
      %1551 = vmatprep.subr.mxu0 0.0
      %1552 = vmatpush1.msra.mxu0 0.0
      %1553 = vmatprep.subr.mxu0 0.0
      %1554 = vmatpush1.msra.mxu0 0.0
      %1555 = vmatprep.subr.mxu0 0.0
      %1556 = vmatpush1.msra.mxu0 0.0
      %1557 = vmatprep.subr.mxu0 0.0
      %1558 = vmatpush1.msra.mxu0 0.0
      %1559 = vmatprep.subr.mxu0 0.0
      %1560 = vmatpush1.msra.mxu0 0.0
      %1561 = vmatprep.subr.mxu0 0.0
      %1562 = vmatpush1.msra.mxu0 0.0
      %1563 = vmatprep.mubr.f32.mxu0 0.0
      %1564 = vmatmul.mubr.f32.gmra.mrb[0].mxu0 %v1464
      %v1565 = vpop.f32.mrb[0].mxu0
      %v1566 = vadd.f32 0.0, %v1565
      %v1567 = vpop.f32.mrb[0].mxu0
      %1568 = vmatprep.mubr.f32.mxu0 0.0
      %1569 = vmatmul.mubr.f32.gmra.mrb[0].mxu0 %v1467
      %v1570 = vpop.f32.mrb[0].mxu0
      %v1571 = vadd.f32 0.0, %v1570
      %v1572 = vpop.f32.mrb[0].mxu0
      %1573 = vmatprep.mubr.f32.mxu0 0.0
      %1574 = vmatmul.mubr.f32.gmra.mrb[0].mxu0 %v1470
      %v1575 = vpop.f32.mrb[0].mxu0
      %v1576 = vadd.f32 0.0, %v1575
      %v1577 = vpop.f32.mrb[0].mxu0
      %1578 = vmatprep.mubr.f32.mxu0 0.0
      %1579 = vmatmul.mubr.f32.gmra.mrb[0].mxu0 %v1473
      %v1580 = vpop.f32.mrb[0].mxu0
      %v1581 = vadd.f32 0.0, %v1580
      %v1582 = vpop.f32.mrb[0].mxu0
      %1583 = vmatprep.mubr.f32.mxu0 0.0
      %1584 = vmatmul.mubr.f32.gmra.mrb[0].mxu0 %v1476
      %v1585 = vpop.f32.mrb[0].mxu0
      %v1586 = vadd.f32 0.0, %v1585
      %v1587 = vpop.f32.mrb[0].mxu0
      %1588 = vmatprep.mubr.f32.mxu0 0.0
      %1589 = vmatmul.mubr.f32.gmra.mrb[0].mxu0 %v1479
      %v1590 = vpop.f32.mrb[0].mxu0
      %v1591 = vadd.f32 0.0, %v1590
      %v1592 = vpop.f32.mrb[0].mxu0
      %1593 = vmatprep.mubr.f32.mxu0 0.0
      %1594 = vmatmul.mubr.f32.gmra.mrb[0].mxu0 %v1482
      %v1595 = vpop.f32.mrb[0].mxu0
      %v1596 = vadd.f32 0.0, %v1595
      %v1597 = vpop.f32.mrb[0].mxu0
      %1598 = vmatprep.mubr.f32.mxu0 0.0
      %1599 = vmatmul.mubr.f32.gmra.mrb[0].mxu0 %v1485
      %v1600 = vpop.f32.mrb[0].mxu0
      %v1601 = vadd.f32 0.0, %v1600
      %v1602 = vpop.f32.mrb[0].mxu0
      %1603 = vmatprep.mubr.f32.mxu0 0.0
      %1604 = vmatmul.mubr.f32.gmra.mrb[0].mxu0 %v1488
      %v1605 = vpop.f32.mrb[0].mxu0
      %v1606 = vadd.f32 0.0, %v1605
      %v1607 = vpop.f32.mrb[0].mxu0
      %1608 = vmatprep.mubr.f32.mxu0 0.0
      %1609 = vmatmul.mubr.f32.gmra.mrb[0].mxu0 %v1491
      %v1610 = vpop.f32.mrb[0].mxu0
      %v1611 = vadd.f32 0.0, %v1610
      %v1612 = vpop.f32.mrb[0].mxu0
      %1613 = vmatprep.mubr.f32.mxu0 0.0
      %1614 = vmatmul.mubr.f32.gmra.mrb[0].mxu0 %v1494
      %v1615 = vpop.f32.mrb[0].mxu0
      %v1616 = vadd.f32 0.0, %v1615
      %v1617 = vpop.f32.mrb[0].mxu0
      %1618 = vmatprep.mubr.f32.mxu0 0.0
      %1619 = vmatmul.mubr.f32.gmra.mrb[0].mxu0 %v1497
      %v1620 = vpop.f32.mrb[0].mxu0
      %v1621 = vadd.f32 0.0, %v1620
      %v1622 = vpop.f32.mrb[0].mxu0
      %1623 = vdwg.mxu0
      %v1624 = vld [vmem:[%s5] sm:$0xff]
      %v1625 = vld [vmem:[%s5 + $0x8] sm:$0xff]
      %v1626 = vld [vmem:[%s5 + $0x10] sm:$0xff]
      %v1627 = vld [vmem:[%s5 + $0x18] sm:$0xff]
      %v1628 = vld [vmem:[%s5 + $0x20] sm:$0xff]
      %v1629 = vld [vmem:[%s5 + $0x28] sm:$0xff]
      %v1630 = vld [vmem:[%s5 + $0x30] sm:$0xff]
      %v1631 = vld [vmem:[%s5 + $0x38] sm:$0xff]
      %v1632 = vld [vmem:[%s5 + $0x40] sm:$0xff]
      %v1633 = vld [vmem:[%s5 + $0x48] sm:$0xff]
      %v1634 = vld [vmem:[%s5 + $0x50] sm:$0xff]
      %v1635 = vld [vmem:[%s5 + $0x58] sm:$0xff]
      %v1636 = vld [vmem:[%s5 + $0x60] sm:$0xff]
      %v1637 = vld [vmem:[%s5 + $0x68] sm:$0xff]
      %v1638 = vld [vmem:[%s5 + $0x70] sm:$0xff]
      %v1639 = vld [vmem:[%s5 + $0x78] sm:$0xff]
      %v1640 = vld [vmem:[%s5 + $0x80] sm:$0xff]
      %v1641 = vld [vmem:[%s5 + $0x88] sm:$0xff]
      %v1642 = vld [vmem:[%s5 + $0x90] sm:$0xff]
      %v1643 = vld [vmem:[%s5 + $0x98] sm:$0xff]
      %v1644 = vld [vmem:[%s8] sm:$0xff]
      %v1645 = vld [vmem:[%s8 + $0x8] sm:$0xff]
      %v1646 = vld [vmem:[%s8 + $0x10] sm:$0xff]
      %v1647 = vld [vmem:[%s8 + $0x18] sm:$0xff]
      %v1648 = vld [vmem:[%s8 + $0x20] sm:$0xff]
      %v1649 = vld [vmem:[%s8 + $0x28] sm:$0xff]
      %v1650 = vld [vmem:[%s8 + $0x30] sm:$0xff]
      %v1651 = vld [vmem:[%s8 + $0x38] sm:$0xff]
      %v1652 = vld [vmem:[%s8 + $0x40] sm:$0xff]
      %v1653 = vld [vmem:[%s8 + $0x48] sm:$0xff]
      %v1654 = vld [vmem:[%s8 + $0x50] sm:$0xff]
      %v1655 = vld [vmem:[%s8 + $0x58] sm:$0xff]
      %v1656 = vld [vmem:[%s8 + $0x60] sm:$0xff]
      %v1657 = vld [vmem:[%s8 + $0x68] sm:$0xff]
      %v1658 = vld [vmem:[%s8 + $0x70] sm:$0xff]
      %v1659 = vld [vmem:[%s8 + $0x78] sm:$0xff]
      %v1660 = vld [vmem:[%s8 + $0x80] sm:$0xff]
      %v1661 = vld [vmem:[%s8 + $0x88] sm:$0xff]
      %v1662 = vld [vmem:[%s8 + $0x90] sm:$0xff]
      %v1663 = vld [vmem:[%s8 + $0x98] sm:$0xff]
      %1665 = vset.pattern.permute.xlu0 0
      %1666 = vperm.xlu0 %1665, %v1644
      %v1667 = vpop.permute.xlu0 %1666
      %1670 = vset.pattern.permute.xlu0 0
      %1671 = vperm.xlu0 %1670, %v1645
      %v1672 = vpop.permute.xlu0 %1671
      %1675 = vset.pattern.permute.xlu0 0
      %1676 = vperm.xlu0 %1675, %v1646
      %v1677 = vpop.permute.xlu0 %1676
      %1680 = vset.pattern.permute.xlu0 0
      %1681 = vperm.xlu0 %1680, %v1647
      %v1682 = vpop.permute.xlu0 %1681
      %1685 = vset.pattern.permute.xlu0 0
      %1686 = vperm.xlu0 %1685, %v1648
      %v1687 = vpop.permute.xlu0 %1686
      %1690 = vset.pattern.permute.xlu0 0
      %1691 = vperm.xlu0 %1690, %v1649
      %v1692 = vpop.permute.xlu0 %1691
      %1695 = vset.pattern.permute.xlu0 0
      %1696 = vperm.xlu0 %1695, %v1650
      %v1697 = vpop.permute.xlu0 %1696
      %1700 = vset.pattern.permute.xlu0 0
      %1701 = vperm.xlu0 %1700, %v1651
      %v1702 = vpop.permute.xlu0 %1701
      %1705 = vset.pattern.permute.xlu0 0
      %1706 = vperm.xlu0 %1705, %v1652
      %v1707 = vpop.permute.xlu0 %1706
      %1710 = vset.pattern.permute.xlu0 0
      %1711 = vperm.xlu0 %1710, %v1653
      %v1712 = vpop.permute.xlu0 %1711
      %1715 = vset.pattern.permute.xlu0 0
      %1716 = vperm.xlu0 %1715, %v1654
      %v1717 = vpop.permute.xlu0 %1716
      %1720 = vset.pattern.permute.xlu0 0
      %1721 = vperm.xlu0 %1720, %v1655
      %v1722 = vpop.permute.xlu0 %1721
      %1725 = vset.pattern.permute.xlu0 0
      %1726 = vperm.xlu0 %1725, %v1656
      %v1727 = vpop.permute.xlu0 %1726
      %1730 = vset.pattern.permute.xlu0 0
      %1731 = vperm.xlu0 %1730, %v1657
      %v1732 = vpop.permute.xlu0 %1731
      %1735 = vset.pattern.permute.xlu0 0
      %1736 = vperm.xlu0 %1735, %v1658
      %v1737 = vpop.permute.xlu0 %1736
      %1740 = vset.pattern.permute.xlu0 0
      %1741 = vperm.xlu0 %1740, %v1659
      %v1742 = vpop.permute.xlu0 %1741
      %1745 = vset.pattern.permute.xlu0 0
      %1746 = vperm.xlu0 %1745, %v1660
      %v1747 = vpop.permute.xlu0 %1746
      %1750 = vset.pattern.permute.xlu0 0
      %1751 = vperm.xlu0 %1750, %v1661
      %v1752 = vpop.permute.xlu0 %1751
      %1755 = vset.pattern.permute.xlu0 0
      %1756 = vperm.xlu0 %1755, %v1662
      %v1757 = vpop.permute.xlu0 %1756
      %1760 = vset.pattern.permute.xlu0 0
      %1761 = vperm.xlu0 %1760, %v1663
      %v1762 = vpop.permute.xlu0 %1761
      %v1765 = vsel %vm965, %v1624, 0
      %v1768 = vsel %vm965, %v1625, 0
      %v1771 = vsel %vm965, %v1626, 0
      %v1774 = vsel %vm965, %v1627, 0
      %v1777 = vsel %vm965, %v1628, 0
      %v1780 = vsel %vm965, %v1629, 0
      %v1783 = vsel %vm965, %v1630, 0
      %v1786 = vsel %vm965, %v1631, 0
      %v1789 = vsel %vm965, %v1632, 0
      %v1792 = vsel %vm965, %v1633, 0
      %v1795 = vsel %vm965, %v1634, 0
      %v1798 = vsel %vm965, %v1635, 0
      %v1801 = vsel %vm965, %v1636, 0
      %v1804 = vsel %vm965, %v1637, 0
      %v1807 = vsel %vm965, %v1638, 0
      %v1810 = vsel %vm965, %v1639, 0
      %v1813 = vsel %vm965, %v1640, 0
      %v1816 = vsel %vm965, %v1641, 0
      %v1819 = vsel %vm965, %v1642, 0
      %v1822 = vsel %vm965, %v1643, 0
      %1824 = vmatprep.subr.mxu0 0.0
      %1825 = vmatpush1.msra.mxu0 %v1566
      %1826 = vmatprep.subr.mxu0 0.0
      %1827 = vmatpush1.msra.mxu0 %v1571
      %1828 = vmatprep.subr.mxu0 0.0
      %1829 = vmatpush1.msra.mxu0 %v1576
      %1830 = vmatprep.subr.mxu0 0.0
      %1831 = vmatpush1.msra.mxu0 %v1581
      %1832 = vmatprep.subr.mxu0 0.0
      %1833 = vmatpush1.msra.mxu0 %v1586
      %1834 = vmatprep.subr.mxu0 0.0
      %1835 = vmatpush1.msra.mxu0 %v1591
      %1836 = vmatprep.subr.mxu0 0.0
      %1837 = vmatpush1.msra.mxu0 %v1596
      %1838 = vmatprep.subr.mxu0 0.0
      %1839 = vmatpush1.msra.mxu0 %v1601
      %1840 = vmatprep.subr.mxu0 0.0
      %1841 = vmatpush1.msra.mxu0 %v1606
      %1842 = vmatprep.subr.mxu0 0.0
      %1843 = vmatpush1.msra.mxu0 %v1611
      %1844 = vmatprep.subr.mxu0 0.0
      %1845 = vmatpush1.msra.mxu0 %v1616
      %1846 = vmatprep.subr.mxu0 0.0
      %1847 = vmatpush1.msra.mxu0 %v1621
      %1848 = vmatprep.subr.mxu0 0.0
      %1849 = vmatpush1.msra.mxu0 0.0
      %1850 = vmatprep.subr.mxu0 0.0
      %1851 = vmatpush1.msra.mxu0 0.0
      %1852 = vmatprep.subr.mxu0 0.0
      %1853 = vmatpush1.msra.mxu0 0.0
      %1854 = vmatprep.subr.mxu0 0.0
      %1855 = vmatpush1.msra.mxu0 0.0
      %1856 = vmatprep.subr.mxu0 0.0
      %1857 = vmatpush1.msra.mxu0 0.0
      %1858 = vmatprep.subr.mxu0 0.0
      %1859 = vmatpush1.msra.mxu0 0.0
      %1860 = vmatprep.subr.mxu0 0.0
      %1861 = vmatpush1.msra.mxu0 0.0
      %1862 = vmatprep.subr.mxu0 0.0
      %1863 = vmatpush1.msra.mxu0 0.0
      %1864 = vmatprep.subr.mxu0 0.0
      %1865 = vmatpush1.msra.mxu0 0.0
      %1866 = vmatprep.subr.mxu0 0.0
      %1867 = vmatpush1.msra.mxu0 0.0
      %1868 = vmatprep.subr.mxu0 0.0
      %1869 = vmatpush1.msra.mxu0 0.0
      %1870 = vmatprep.subr.mxu0 0.0
      %1871 = vmatpush1.msra.mxu0 0.0
      %1872 = vmatprep.subr.mxu0 0.0
      %1873 = vmatpush1.msra.mxu0 0.0
      %1874 = vmatprep.subr.mxu0 0.0
      %1875 = vmatpush1.msra.mxu0 0.0
      %1876 = vmatprep.subr.mxu0 0.0
      %1877 = vmatpush1.msra.mxu0 0.0
      %1878 = vmatprep.subr.mxu0 0.0
      %1879 = vmatpush1.msra.mxu0 0.0
      %1880 = vmatprep.subr.mxu0 0.0
      %1881 = vmatpush1.msra.mxu0 0.0
      %1882 = vmatprep.subr.mxu0 0.0
      %1883 = vmatpush1.msra.mxu0 0.0
      %1884 = vmatprep.subr.mxu0 0.0
      %1885 = vmatpush1.msra.mxu0 0.0
      %1886 = vmatprep.subr.mxu0 0.0
      %1887 = vmatpush1.msra.mxu0 0.0
      %1888 = vmatprep.mubr.f32.mxu0 0.0
      %1889 = vmatmul.mubr.f32.gmra.mrb[0].mxu0 %v1765
      %v1890 = vpop.f32.mrb[0].mxu0
      %v1891 = vadd.f32 %v1667, %v1890
      %v1892 = vpop.f32.mrb[0].mxu0
      %1893 = vmatprep.mubr.f32.mxu0 0.0
      %1894 = vmatmul.mubr.f32.gmra.mrb[0].mxu0 %v1768
      %v1895 = vpop.f32.mrb[0].mxu0
      %v1896 = vadd.f32 %v1672, %v1895
      %v1897 = vpop.f32.mrb[0].mxu0
      %1898 = vmatprep.mubr.f32.mxu0 0.0
      %1899 = vmatmul.mubr.f32.gmra.mrb[0].mxu0 %v1771
      %v1900 = vpop.f32.mrb[0].mxu0
      %v1901 = vadd.f32 %v1677, %v1900
      %v1902 = vpop.f32.mrb[0].mxu0
      %1903 = vmatprep.mubr.f32.mxu0 0.0
      %1904 = vmatmul.mubr.f32.gmra.mrb[0].mxu0 %v1774
      %v1905 = vpop.f32.mrb[0].mxu0
      %v1906 = vadd.f32 %v1682, %v1905
      %v1907 = vpop.f32.mrb[0].mxu0
      %1908 = vmatprep.mubr.f32.mxu0 0.0
      %1909 = vmatmul.mubr.f32.gmra.mrb[0].mxu0 %v1777
      %v1910 = vpop.f32.mrb[0].mxu0
      %v1911 = vadd.f32 %v1687, %v1910
      %v1912 = vpop.f32.mrb[0].mxu0
      %1913 = vmatprep.mubr.f32.mxu0 0.0
      %1914 = vmatmul.mubr.f32.gmra.mrb[0].mxu0 %v1780
      %v1915 = vpop.f32.mrb[0].mxu0
      %v1916 = vadd.f32 %v1692, %v1915
      %v1917 = vpop.f32.mrb[0].mxu0
      %1918 = vmatprep.mubr.f32.mxu0 0.0
      %1919 = vmatmul.mubr.f32.gmra.mrb[0].mxu0 %v1783
      %v1920 = vpop.f32.mrb[0].mxu0
      %v1921 = vadd.f32 %v1697, %v1920
      %v1922 = vpop.f32.mrb[0].mxu0
      %1923 = vmatprep.mubr.f32.mxu0 0.0
      %1924 = vmatmul.mubr.f32.gmra.mrb[0].mxu0 %v1786
      %v1925 = vpop.f32.mrb[0].mxu0
      %v1926 = vadd.f32 %v1702, %v1925
      %v1927 = vpop.f32.mrb[0].mxu0
      %1928 = vmatprep.mubr.f32.mxu0 0.0
      %1929 = vmatmul.mubr.f32.gmra.mrb[0].mxu0 %v1789
      %v1930 = vpop.f32.mrb[0].mxu0
      %v1931 = vadd.f32 %v1707, %v1930
      %v1932 = vpop.f32.mrb[0].mxu0
      %1933 = vmatprep.mubr.f32.mxu0 0.0
      %1934 = vmatmul.mubr.f32.gmra.mrb[0].mxu0 %v1792
      %v1935 = vpop.f32.mrb[0].mxu0
      %v1936 = vadd.f32 %v1712, %v1935
      %v1937 = vpop.f32.mrb[0].mxu0
      %1938 = vmatprep.mubr.f32.mxu0 0.0
      %1939 = vmatmul.mubr.f32.gmra.mrb[0].mxu0 %v1795
      %v1940 = vpop.f32.mrb[0].mxu0
      %v1941 = vadd.f32 %v1717, %v1940
      %v1942 = vpop.f32.mrb[0].mxu0
      %1943 = vmatprep.mubr.f32.mxu0 0.0
      %1944 = vmatmul.mubr.f32.gmra.mrb[0].mxu0 %v1798
      %v1945 = vpop.f32.mrb[0].mxu0
      %v1946 = vadd.f32 %v1722, %v1945
      %v1947 = vpop.f32.mrb[0].mxu0
      %1948 = vmatprep.mubr.f32.mxu0 0.0
      %1949 = vmatmul.mubr.f32.gmra.mrb[0].mxu0 %v1801
      %v1950 = vpop.f32.mrb[0].mxu0
      %v1951 = vadd.f32 %v1727, %v1950
      %v1952 = vpop.f32.mrb[0].mxu0
      %1953 = vmatprep.mubr.f32.mxu0 0.0
      %1954 = vmatmul.mubr.f32.gmra.mrb[0].mxu0 %v1804
      %v1955 = vpop.f32.mrb[0].mxu0
      %v1956 = vadd.f32 %v1732, %v1955
      %v1957 = vpop.f32.mrb[0].mxu0
      %1958 = vmatprep.mubr.f32.mxu0 0.0
      %1959 = vmatmul.mubr.f32.gmra.mrb[0].mxu0 %v1807
      %v1960 = vpop.f32.mrb[0].mxu0
      %v1961 = vadd.f32 %v1737, %v1960
      %v1962 = vpop.f32.mrb[0].mxu0
      %1963 = vmatprep.mubr.f32.mxu0 0.0
      %1964 = vmatmul.mubr.f32.gmra.mrb[0].mxu0 %v1810
      %v1965 = vpop.f32.mrb[0].mxu0
      %v1966 = vadd.f32 %v1742, %v1965
      %v1967 = vpop.f32.mrb[0].mxu0
      %1968 = vmatprep.mubr.f32.mxu0 0.0
      %1969 = vmatmul.mubr.f32.gmra.mrb[0].mxu0 %v1813
      %v1970 = vpop.f32.mrb[0].mxu0
      %v1971 = vadd.f32 %v1747, %v1970
      %v1972 = vpop.f32.mrb[0].mxu0
      %1973 = vmatprep.mubr.f32.mxu0 0.0
      %1974 = vmatmul.mubr.f32.gmra.mrb[0].mxu0 %v1816
      %v1975 = vpop.f32.mrb[0].mxu0
      %v1976 = vadd.f32 %v1752, %v1975
      %v1977 = vpop.f32.mrb[0].mxu0
      %1978 = vmatprep.mubr.f32.mxu0 0.0
      %1979 = vmatmul.mubr.f32.gmra.mrb[0].mxu0 %v1819
      %v1980 = vpop.f32.mrb[0].mxu0
      %v1981 = vadd.f32 %v1757, %v1980
      %v1982 = vpop.f32.mrb[0].mxu0
      %1983 = vmatprep.mubr.f32.mxu0 0.0
      %1984 = vmatmul.mubr.f32.gmra.mrb[0].mxu0 %v1822
      %v1985 = vpop.f32.mrb[0].mxu0
      %v1986 = vadd.f32 %v1762, %v1985
      %v1987 = vpop.f32.mrb[0].mxu0
      %1988 = vdwg.mxu0
      %v1989 = vmax.f32 %v1891, 0.0
      %v1990 = vmax.f32 %v1896, 0.0
      %v1991 = vmax.f32 %v1901, 0.0
      %v1992 = vmax.f32 %v1906, 0.0
      %v1993 = vmax.f32 %v1911, 0.0
      %v1994 = vmax.f32 %v1916, 0.0
      %v1995 = vmax.f32 %v1921, 0.0
      %v1996 = vmax.f32 %v1926, 0.0
      %v1997 = vmax.f32 %v1931, 0.0
      %v1998 = vmax.f32 %v1936, 0.0
      %v1999 = vmax.f32 %v1941, 0.0
      %v2000 = vmax.f32 %v1946, 0.0
      %v2001 = vmax.f32 %v1951, 0.0
      %v2002 = vmax.f32 %v1956, 0.0
      %v2003 = vmax.f32 %v1961, 0.0
      %v2004 = vmax.f32 %v1966, 0.0
      %v2005 = vmax.f32 %v1971, 0.0
      %v2006 = vmax.f32 %v1976, 0.0
      %v2007 = vmax.f32 %v1981, 0.0
      %v2008 = vmax.f32 %v1986, 0.0
      %v2009 = vpack.c.bf16 %v1990, %v1989
      %v2010 = vpack.c.bf16 %v1992, %v1991
      %v2011 = vpack.c.bf16 %v1993, %v1993
      %v2012 = vpack.c.bf16 %v1995, %v1994
      %v2013 = vpack.c.bf16 %v1997, %v1996
      %v2014 = vpack.c.bf16 %v1998, %v1998
      %v2015 = vpack.c.bf16 %v2000, %v1999
      %v2016 = vpack.c.bf16 %v2002, %v2001
      %v2017 = vpack.c.bf16 %v2003, %v2003
      %v2018 = vpack.c.bf16 %v2005, %v2004
      %v2019 = vpack.c.bf16 %v2007, %v2006
      %v2020 = vpack.c.bf16 %v2008, %v2008
      %v2033 = vunpack.c.l.b16 %v2009
      %v2034 = vunpack.c.h.b16 %v2009
      %v2035 = vunpack.c.l.b16 %v2010
      %v2036 = vunpack.c.h.b16 %v2010
      %v2037 = vunpack.c.l.b16 %v2011
      %v2038 = vunpack.c.l.b16 %v2012
      %v2039 = vunpack.c.h.b16 %v2012
      %v2040 = vunpack.c.l.b16 %v2013
      %v2041 = vunpack.c.h.b16 %v2013
      %v2042 = vunpack.c.l.b16 %v2014
      %v2043 = vunpack.c.l.b16 %v2015
      %v2044 = vunpack.c.h.b16 %v2015
      %v2045 = vunpack.c.l.b16 %v2016
      %v2046 = vunpack.c.h.b16 %v2016
      %v2047 = vunpack.c.l.b16 %v2017
      %v2048 = vunpack.c.l.b16 %v2018
      %v2049 = vunpack.c.h.b16 %v2018
      %v2050 = vunpack.c.l.b16 %v2019
      %v2051 = vunpack.c.h.b16 %v2019
      %v2052 = vunpack.c.l.b16 %v2020
      %v2053 = vpack.c.b16 %v2033, %v2033
      %v2054 = vpack.c.b16 %v2034, %v2034
      %v2055 = vpack.c.b16 %v2035, %v2035
      %v2056 = vpack.c.b16 %v2036, %v2036
      %v2057 = vpack.c.b16 %v2037, %v2037
      %v2058 = vpack.c.b16 %v2038, %v2038
      %v2059 = vpack.c.b16 %v2039, %v2039
      %v2060 = vpack.c.b16 %v2040, %v2040
      %v2061 = vpack.c.b16 %v2041, %v2041
      %v2062 = vpack.c.b16 %v2042, %v2042
      %v2063 = vpack.c.b16 %v2043, %v2043
      %v2064 = vpack.c.b16 %v2044, %v2044
      %v2065 = vpack.c.b16 %v2045, %v2045
      %v2066 = vpack.c.b16 %v2046, %v2046
      %v2067 = vpack.c.b16 %v2047, %v2047
      %v2068 = vpack.c.b16 %v2048, %v2048
      %v2069 = vpack.c.b16 %v2049, %v2049
      %v2070 = vpack.c.b16 %v2050, %v2050
      %v2071 = vpack.c.b16 %v2051, %v2051
      %v2072 = vpack.c.b16 %v2052, %v2052
      %vm2093 = vcmask 27648
      %2094 = vst.msk [vmem:[%s589] sm:$0xf] %vm2093, %v2053
      %2095 = vst.msk [vmem:[%s589 + $0x4] sm:$0xf] %vm2093, %v2054
      %2096 = vst.msk [vmem:[%s589 + $0x8] sm:$0xf] %vm2093, %v2055
      %2097 = vst.msk [vmem:[%s589 + $0xc] sm:$0xf] %vm2093, %v2056
      %2098 = vst.msk [vmem:[%s589 + $0x10] sm:$0xf] %vm2093, %v2057
      %2099 = vst.msk [vmem:[%s589 + $0x14] sm:$0xf] %vm2093, %v2058
      %2100 = vst.msk [vmem:[%s589 + $0x18] sm:$0xf] %vm2093, %v2059
      %2101 = vst.msk [vmem:[%s589 + $0x1c] sm:$0xf] %vm2093, %v2060
      %2102 = vst.msk [vmem:[%s589 + $0x20] sm:$0xf] %vm2093, %v2061
      %2103 = vst.msk [vmem:[%s589 + $0x24] sm:$0xf] %vm2093, %v2062
      %2104 = vst.msk [vmem:[%s589 + $0x28] sm:$0xf] %vm2093, %v2063
      %2105 = vst.msk [vmem:[%s589 + $0x2c] sm:$0xf] %vm2093, %v2064
      %2106 = vst.msk [vmem:[%s589 + $0x30] sm:$0xf] %vm2093, %v2065
      %2107 = vst.msk [vmem:[%s589 + $0x34] sm:$0xf] %vm2093, %v2066
      %2108 = vst.msk [vmem:[%s589 + $0x38] sm:$0xf] %vm2093, %v2067
      %2109 = vst.msk [vmem:[%s589 + $0x3c] sm:$0xf] %vm2093, %v2068
      %2110 = vst.msk [vmem:[%s589 + $0x40] sm:$0xf] %vm2093, %v2069
      %2111 = vst.msk [vmem:[%s589 + $0x44] sm:$0xf] %vm2093, %v2070
      %2112 = vst.msk [vmem:[%s589 + $0x48] sm:$0xf] %vm2093, %v2071
      %2113 = vst.msk [vmem:[%s589 + $0x4c] sm:$0xf] %vm2093, %v2072
      %v2114 = vld [vmem:[%s607] sm:$0x1]
      %v2115 = vmul.f32 %v1989, %v1989
      %v2116 = vmul.f32 %v1990, %v1990
      %v2117 = vmul.f32 %v1991, %v1991
      %v2118 = vmul.f32 %v1992, %v1992
      %v2119 = vmul.f32 %v1993, %v1993
      %v2120 = vmul.f32 %v1994, %v1994
      %v2121 = vmul.f32 %v1995, %v1995
      %v2122 = vmul.f32 %v1996, %v1996
      %v2123 = vmul.f32 %v1997, %v1997
      %v2124 = vmul.f32 %v1998, %v1998
      %v2125 = vmul.f32 %v1999, %v1999
      %v2126 = vmul.f32 %v2000, %v2000
      %v2127 = vmul.f32 %v2001, %v2001
      %v2128 = vmul.f32 %v2002, %v2002
      %v2129 = vmul.f32 %v2003, %v2003
      %v2130 = vmul.f32 %v2004, %v2004
      %v2131 = vmul.f32 %v2005, %v2005
      %v2132 = vmul.f32 %v2006, %v2006
      %v2133 = vmul.f32 %v2007, %v2007
      %v2134 = vmul.f32 %v2008, %v2008
      %vm2135 = vcmask 31744
      %v2136 = vsel %vm2135, %v2115, 0.0
      %v2137 = vsel %vm2135, %v2116, 0.0
      %v2138 = vadd.f32 %v2136, %v2137
      %v2139 = vsel %vm2135, %v2117, 0.0
      %v2140 = vadd.f32 %v2138, %v2139
      %v2141 = vsel %vm2135, %v2118, 0.0
      %v2142 = vadd.f32 %v2140, %v2141
      %v2143 = vsel %vm2135, %v2119, 0.0
      %v2144 = vadd.f32 %v2142, %v2143
      %v2145 = vsel %vm2135, %v2120, 0.0
      %v2146 = vadd.f32 %v2144, %v2145
      %v2147 = vsel %vm2135, %v2121, 0.0
      %v2148 = vadd.f32 %v2146, %v2147
      %v2149 = vsel %vm2135, %v2122, 0.0
      %v2150 = vadd.f32 %v2148, %v2149
      %v2151 = vsel %vm2135, %v2123, 0.0
      %v2152 = vadd.f32 %v2150, %v2151
      %v2153 = vsel %vm2135, %v2124, 0.0
      %v2154 = vadd.f32 %v2152, %v2153
      %v2155 = vsel %vm2135, %v2125, 0.0
      %v2156 = vadd.f32 %v2154, %v2155
      %v2157 = vsel %vm2135, %v2126, 0.0
      %v2158 = vadd.f32 %v2156, %v2157
      %v2159 = vsel %vm2135, %v2127, 0.0
      %v2160 = vadd.f32 %v2158, %v2159
      %v2161 = vsel %vm2135, %v2128, 0.0
      %v2162 = vadd.f32 %v2160, %v2161
      %v2163 = vsel %vm2135, %v2129, 0.0
      %v2164 = vadd.f32 %v2162, %v2163
      %v2165 = vsel %vm2135, %v2130, 0.0
      %v2166 = vadd.f32 %v2164, %v2165
      %v2167 = vsel %vm2135, %v2131, 0.0
      %v2168 = vadd.f32 %v2166, %v2167
      %v2169 = vsel %vm2135, %v2132, 0.0
      %v2170 = vadd.f32 %v2168, %v2169
      %v2171 = vsel %vm2135, %v2133, 0.0
      %v2172 = vadd.f32 %v2170, %v2171
      %v2173 = vsel %vm2135, %v2134, 0.0
      %v2174 = vadd.f32 %v2172, %v2173
      %2175 = vadd.xlane.f32.xlu0 %v2174
      %v2176 = vpop.xlane.xlu0 %2175
      %v2177 = vrot.slane %v2176, 4
      %v2178 = vadd.f32 %v2176, %v2177
      %v2179 = vrot.slane %v2178, 2
      %v2180 = vadd.f32 %v2178, %v2179
      %v2181 = vrot.slane %v2180, 1
      %v2182 = vadd.f32 %v2180, %v2181
      %s2183 = vtos %v2182
      %v2184 = vstv %s2183
      %v2185 = vadd.f32 %v2114, %v2184
      %2186 = vst.msk [vmem:[%s607] sm:$0x1] %vm1460, %v2185
      %v2187 = vld [vmem:[%s3] sm:$0xf]
      %v2189 = vsel %vm2135, %v1566, 0
      %v2192 = vsel %vm2135, %v1571, 0
      %v2195 = vsel %vm2135, %v1576, 0
      %v2198 = vsel %vm2135, %v1581, 0
      %v2201 = vsel %vm2135, %v1586, 0
      %v2204 = vsel %vm2135, %v1591, 0
      %v2207 = vsel %vm2135, %v1596, 0
      %v2210 = vsel %vm2135, %v1601, 0
      %v2213 = vsel %vm2135, %v1606, 0
      %v2216 = vsel %vm2135, %v1611, 0
      %v2219 = vsel %vm2135, %v1616, 0
      %v2222 = vsel %vm2135, %v1621, 0
      %vm2224 = vcmask 1043456
      %v2226 = vsel %vm2224, %v2187, 0
      %2228 = vmatprep.subr.mxu0 0.0
      %2229 = vmatpush1.msra.mxu0 %v2226
      %2230 = vmatprep.subr.mxu0 0.0
      %2231 = vmatpush1.msra.mxu0 0.0
      %2232 = vmatprep.subr.mxu0 0.0
      %2233 = vmatpush1.msra.mxu0 0.0
      %2234 = vmatprep.subr.mxu0 0.0
      %2235 = vmatpush1.msra.mxu0 0.0
      %2236 = vmatprep.subr.mxu0 0.0
      %2237 = vmatpush1.msra.mxu0 0.0
      %2238 = vmatprep.subr.mxu0 0.0
      %2239 = vmatpush1.msra.mxu0 0.0
      %2240 = vmatprep.subr.mxu0 0.0
      %2241 = vmatpush1.msra.mxu0 0.0
      %2242 = vmatprep.subr.mxu0 0.0
      %2243 = vmatpush1.msra.mxu0 0.0
      %2244 = vmatprep.subr.mxu0 0.0
      %2245 = vmatpush1.msra.mxu0 0.0
      %2246 = vmatprep.subr.mxu0 0.0
      %2247 = vmatpush1.msra.mxu0 0.0
      %2248 = vmatprep.subr.mxu0 0.0
      %2249 = vmatpush1.msra.mxu0 0.0
      %2250 = vmatprep.subr.mxu0 0.0
      %2251 = vmatpush1.msra.mxu0 0.0
      %2252 = vmatprep.subr.mxu0 0.0
      %2253 = vmatpush1.msra.mxu0 0.0
      %2254 = vmatprep.subr.mxu0 0.0
      %2255 = vmatpush1.msra.mxu0 0.0
      %2256 = vmatprep.subr.mxu0 0.0
      %2257 = vmatpush1.msra.mxu0 0.0
      %2258 = vmatprep.subr.mxu0 0.0
      %2259 = vmatpush1.msra.mxu0 0.0
      %2260 = vmatprep.subr.mxu0 0.0
      %2261 = vmatpush1.msra.mxu0 0.0
      %2262 = vmatprep.subr.mxu0 0.0
      %2263 = vmatpush1.msra.mxu0 0.0
      %2264 = vmatprep.subr.mxu0 0.0
      %2265 = vmatpush1.msra.mxu0 0.0
      %2266 = vmatprep.subr.mxu0 0.0
      %2267 = vmatpush1.msra.mxu0 0.0
      %2268 = vmatprep.subr.mxu0 0.0
      %2269 = vmatpush1.msra.mxu0 0.0
      %2270 = vmatprep.subr.mxu0 0.0
      %2271 = vmatpush1.msra.mxu0 0.0
      %2272 = vmatprep.subr.mxu0 0.0
      %2273 = vmatpush1.msra.mxu0 0.0
      %2274 = vmatprep.subr.mxu0 0.0
      %2275 = vmatpush1.msra.mxu0 0.0
      %2276 = vmatprep.subr.mxu0 0.0
      %2277 = vmatpush1.msra.mxu0 0.0
      %2278 = vmatprep.subr.mxu0 0.0
      %2279 = vmatpush1.msra.mxu0 0.0
      %2280 = vmatprep.subr.mxu0 0.0
      %2281 = vmatpush1.msra.mxu0 0.0
      %2282 = vmatprep.subr.mxu0 0.0
      %2283 = vmatpush1.msra.mxu0 0.0
      %2284 = vmatprep.subr.mxu0 0.0
      %2285 = vmatpush1.msra.mxu0 0.0
      %2286 = vmatprep.subr.mxu0 0.0
      %2287 = vmatpush1.msra.mxu0 0.0
      %2288 = vmatprep.subr.mxu0 0.0
      %2289 = vmatpush1.msra.mxu0 0.0
      %2290 = vmatprep.subr.mxu0 0.0
      %2291 = vmatpush1.msra.mxu0 0.0
      %2292 = vmatprep.mubr.f32.mxu0 0.0
      %2293 = vmatmul.mubr.f32.gmra.mrb[0].mxu0 %v2189
      %v2294 = vpop.f32.mrb[0].mxu0
      %v2295 = vadd.f32 0.0, %v2294
      %v2296 = vpop.f32.mrb[0].mxu0
      %2297 = vmatprep.mubr.f32.mxu0 0.0
      %2298 = vmatmul.mubr.f32.gmra.mrb[0].mxu0 %v2192
      %v2299 = vpop.f32.mrb[0].mxu0
      %v2300 = vadd.f32 0.0, %v2299
      %v2301 = vpop.f32.mrb[0].mxu0
      %2302 = vmatprep.mubr.f32.mxu0 0.0
      %2303 = vmatmul.mubr.f32.gmra.mrb[0].mxu0 %v2195
      %v2304 = vpop.f32.mrb[0].mxu0
      %v2305 = vadd.f32 0.0, %v2304
      %v2306 = vpop.f32.mrb[0].mxu0
      %2307 = vmatprep.mubr.f32.mxu0 0.0
      %2308 = vmatmul.mubr.f32.gmra.mrb[0].mxu0 %v2198
      %v2309 = vpop.f32.mrb[0].mxu0
      %v2310 = vadd.f32 0.0, %v2309
      %v2311 = vpop.f32.mrb[0].mxu0
      %2312 = vmatprep.mubr.f32.mxu0 0.0
      %2313 = vmatmul.mubr.f32.gmra.mrb[0].mxu0 %v2201
      %v2314 = vpop.f32.mrb[0].mxu0
      %v2315 = vadd.f32 0.0, %v2314
      %v2316 = vpop.f32.mrb[0].mxu0
      %2317 = vmatprep.mubr.f32.mxu0 0.0
      %2318 = vmatmul.mubr.f32.gmra.mrb[0].mxu0 %v2204
      %v2319 = vpop.f32.mrb[0].mxu0
      %v2320 = vadd.f32 0.0, %v2319
      %v2321 = vpop.f32.mrb[0].mxu0
      %2322 = vmatprep.mubr.f32.mxu0 0.0
      %2323 = vmatmul.mubr.f32.gmra.mrb[0].mxu0 %v2207
      %v2324 = vpop.f32.mrb[0].mxu0
      %v2325 = vadd.f32 0.0, %v2324
      %v2326 = vpop.f32.mrb[0].mxu0
      %2327 = vmatprep.mubr.f32.mxu0 0.0
      %2328 = vmatmul.mubr.f32.gmra.mrb[0].mxu0 %v2210
      %v2329 = vpop.f32.mrb[0].mxu0
      %v2330 = vadd.f32 0.0, %v2329
      %v2331 = vpop.f32.mrb[0].mxu0
      %2332 = vmatprep.mubr.f32.mxu0 0.0
      %2333 = vmatmul.mubr.f32.gmra.mrb[0].mxu0 %v2213
      %v2334 = vpop.f32.mrb[0].mxu0
      %v2335 = vadd.f32 0.0, %v2334
      %v2336 = vpop.f32.mrb[0].mxu0
      %2337 = vmatprep.mubr.f32.mxu0 0.0
      %2338 = vmatmul.mubr.f32.gmra.mrb[0].mxu0 %v2216
      %v2339 = vpop.f32.mrb[0].mxu0
      %v2340 = vadd.f32 0.0, %v2339
      %v2341 = vpop.f32.mrb[0].mxu0
      %2342 = vmatprep.mubr.f32.mxu0 0.0
      %2343 = vmatmul.mubr.f32.gmra.mrb[0].mxu0 %v2219
      %v2344 = vpop.f32.mrb[0].mxu0
      %v2345 = vadd.f32 0.0, %v2344
      %v2346 = vpop.f32.mrb[0].mxu0
      %2347 = vmatprep.mubr.f32.mxu0 0.0
      %2348 = vmatmul.mubr.f32.gmra.mrb[0].mxu0 %v2222
      %v2349 = vpop.f32.mrb[0].mxu0
      %v2350 = vadd.f32 0.0, %v2349
      %v2351 = vpop.f32.mrb[0].mxu0
      %2352 = vdwg.mxu0
      %v2353 = vld [vmem:[%s6] sm:$0xff]
      %v2354 = vld [vmem:[%s6 + $0x8] sm:$0xff]
      %v2355 = vld [vmem:[%s6 + $0x10] sm:$0xff]
      %v2356 = vld [vmem:[%s6 + $0x18] sm:$0xff]
      %v2357 = vld [vmem:[%s6 + $0x20] sm:$0xff]
      %v2358 = vld [vmem:[%s6 + $0x28] sm:$0xff]
      %v2359 = vld [vmem:[%s6 + $0x30] sm:$0xff]
      %v2360 = vld [vmem:[%s6 + $0x38] sm:$0xff]
      %v2361 = vld [vmem:[%s6 + $0x40] sm:$0xff]
      %v2362 = vld [vmem:[%s6 + $0x48] sm:$0xff]
      %v2363 = vld [vmem:[%s6 + $0x50] sm:$0xff]
      %v2364 = vld [vmem:[%s6 + $0x58] sm:$0xff]
      %v2365 = vld [vmem:[%s6 + $0x60] sm:$0xff]
      %v2366 = vld [vmem:[%s6 + $0x68] sm:$0xff]
      %v2367 = vld [vmem:[%s6 + $0x70] sm:$0xff]
      %v2368 = vld [vmem:[%s6 + $0x78] sm:$0xff]
      %v2369 = vld [vmem:[%s6 + $0x80] sm:$0xff]
      %v2370 = vld [vmem:[%s6 + $0x88] sm:$0xff]
      %v2371 = vld [vmem:[%s6 + $0x90] sm:$0xff]
      %v2372 = vld [vmem:[%s6 + $0x98] sm:$0xff]
      %v2373 = vld [vmem:[%s9] sm:$0xff]
      %v2374 = vld [vmem:[%s9 + $0x8] sm:$0xff]
      %v2375 = vld [vmem:[%s9 + $0x10] sm:$0xff]
      %v2376 = vld [vmem:[%s9 + $0x18] sm:$0xff]
      %v2377 = vld [vmem:[%s9 + $0x20] sm:$0xff]
      %v2378 = vld [vmem:[%s9 + $0x28] sm:$0xff]
      %v2379 = vld [vmem:[%s9 + $0x30] sm:$0xff]
      %v2380 = vld [vmem:[%s9 + $0x38] sm:$0xff]
      %v2381 = vld [vmem:[%s9 + $0x40] sm:$0xff]
      %v2382 = vld [vmem:[%s9 + $0x48] sm:$0xff]
      %v2383 = vld [vmem:[%s9 + $0x50] sm:$0xff]
      %v2384 = vld [vmem:[%s9 + $0x58] sm:$0xff]
      %v2385 = vld [vmem:[%s9 + $0x60] sm:$0xff]
      %v2386 = vld [vmem:[%s9 + $0x68] sm:$0xff]
      %v2387 = vld [vmem:[%s9 + $0x70] sm:$0xff]
      %v2388 = vld [vmem:[%s9 + $0x78] sm:$0xff]
      %v2389 = vld [vmem:[%s9 + $0x80] sm:$0xff]
      %v2390 = vld [vmem:[%s9 + $0x88] sm:$0xff]
      %v2391 = vld [vmem:[%s9 + $0x90] sm:$0xff]
      %v2392 = vld [vmem:[%s9 + $0x98] sm:$0xff]
      %2394 = vset.pattern.permute.xlu0 0
      %2395 = vperm.xlu0 %2394, %v2373
      %v2396 = vpop.permute.xlu0 %2395
      %2399 = vset.pattern.permute.xlu0 0
      %2400 = vperm.xlu0 %2399, %v2374
      %v2401 = vpop.permute.xlu0 %2400
      %2404 = vset.pattern.permute.xlu0 0
      %2405 = vperm.xlu0 %2404, %v2375
      %v2406 = vpop.permute.xlu0 %2405
      %2409 = vset.pattern.permute.xlu0 0
      %2410 = vperm.xlu0 %2409, %v2376
      %v2411 = vpop.permute.xlu0 %2410
      %2414 = vset.pattern.permute.xlu0 0
      %2415 = vperm.xlu0 %2414, %v2377
      %v2416 = vpop.permute.xlu0 %2415
      %2419 = vset.pattern.permute.xlu0 0
      %2420 = vperm.xlu0 %2419, %v2378
      %v2421 = vpop.permute.xlu0 %2420
      %2424 = vset.pattern.permute.xlu0 0
      %2425 = vperm.xlu0 %2424, %v2379
      %v2426 = vpop.permute.xlu0 %2425
      %2429 = vset.pattern.permute.xlu0 0
      %2430 = vperm.xlu0 %2429, %v2380
      %v2431 = vpop.permute.xlu0 %2430
      %2434 = vset.pattern.permute.xlu0 0
      %2435 = vperm.xlu0 %2434, %v2381
      %v2436 = vpop.permute.xlu0 %2435
      %2439 = vset.pattern.permute.xlu0 0
      %2440 = vperm.xlu0 %2439, %v2382
      %v2441 = vpop.permute.xlu0 %2440
      %2444 = vset.pattern.permute.xlu0 0
      %2445 = vperm.xlu0 %2444, %v2383
      %v2446 = vpop.permute.xlu0 %2445
      %2449 = vset.pattern.permute.xlu0 0
      %2450 = vperm.xlu0 %2449, %v2384
      %v2451 = vpop.permute.xlu0 %2450
      %2454 = vset.pattern.permute.xlu0 0
      %2455 = vperm.xlu0 %2454, %v2385
      %v2456 = vpop.permute.xlu0 %2455
      %2459 = vset.pattern.permute.xlu0 0
      %2460 = vperm.xlu0 %2459, %v2386
      %v2461 = vpop.permute.xlu0 %2460
      %2464 = vset.pattern.permute.xlu0 0
      %2465 = vperm.xlu0 %2464, %v2387
      %v2466 = vpop.permute.xlu0 %2465
      %2469 = vset.pattern.permute.xlu0 0
      %2470 = vperm.xlu0 %2469, %v2388
      %v2471 = vpop.permute.xlu0 %2470
      %2474 = vset.pattern.permute.xlu0 0
      %2475 = vperm.xlu0 %2474, %v2389
      %v2476 = vpop.permute.xlu0 %2475
      %2479 = vset.pattern.permute.xlu0 0
      %2480 = vperm.xlu0 %2479, %v2390
      %v2481 = vpop.permute.xlu0 %2480
      %2484 = vset.pattern.permute.xlu0 0
      %2485 = vperm.xlu0 %2484, %v2391
      %v2486 = vpop.permute.xlu0 %2485
      %2489 = vset.pattern.permute.xlu0 0
      %2490 = vperm.xlu0 %2489, %v2392
      %v2491 = vpop.permute.xlu0 %2490
      %v2494 = vsel %vm965, %v2353, 0
      %v2497 = vsel %vm965, %v2354, 0
      %v2500 = vsel %vm965, %v2355, 0
      %v2503 = vsel %vm965, %v2356, 0
      %v2506 = vsel %vm965, %v2357, 0
      %v2509 = vsel %vm965, %v2358, 0
      %v2512 = vsel %vm965, %v2359, 0
      %v2515 = vsel %vm965, %v2360, 0
      %v2518 = vsel %vm965, %v2361, 0
      %v2521 = vsel %vm965, %v2362, 0
      %v2524 = vsel %vm965, %v2363, 0
      %v2527 = vsel %vm965, %v2364, 0
      %v2530 = vsel %vm965, %v2365, 0
      %v2533 = vsel %vm965, %v2366, 0
      %v2536 = vsel %vm965, %v2367, 0
      %v2539 = vsel %vm965, %v2368, 0
      %v2542 = vsel %vm965, %v2369, 0
      %v2545 = vsel %vm965, %v2370, 0
      %v2548 = vsel %vm965, %v2371, 0
      %v2551 = vsel %vm965, %v2372, 0
      %2553 = vmatprep.subr.mxu0 0.0
      %2554 = vmatpush1.msra.mxu0 %v2295
      %2555 = vmatprep.subr.mxu0 0.0
      %2556 = vmatpush1.msra.mxu0 %v2300
      %2557 = vmatprep.subr.mxu0 0.0
      %2558 = vmatpush1.msra.mxu0 %v2305
      %2559 = vmatprep.subr.mxu0 0.0
      %2560 = vmatpush1.msra.mxu0 %v2310
      %2561 = vmatprep.subr.mxu0 0.0
      %2562 = vmatpush1.msra.mxu0 %v2315
      %2563 = vmatprep.subr.mxu0 0.0
      %2564 = vmatpush1.msra.mxu0 %v2320
      %2565 = vmatprep.subr.mxu0 0.0
      %2566 = vmatpush1.msra.mxu0 %v2325
      %2567 = vmatprep.subr.mxu0 0.0
      %2568 = vmatpush1.msra.mxu0 %v2330
      %2569 = vmatprep.subr.mxu0 0.0
      %2570 = vmatpush1.msra.mxu0 %v2335
      %2571 = vmatprep.subr.mxu0 0.0
      %2572 = vmatpush1.msra.mxu0 %v2340
      %2573 = vmatprep.subr.mxu0 0.0
      %2574 = vmatpush1.msra.mxu0 %v2345
      %2575 = vmatprep.subr.mxu0 0.0
      %2576 = vmatpush1.msra.mxu0 %v2350
      %2577 = vmatprep.subr.mxu0 0.0
      %2578 = vmatpush1.msra.mxu0 0.0
      %2579 = vmatprep.subr.mxu0 0.0
      %2580 = vmatpush1.msra.mxu0 0.0
      %2581 = vmatprep.subr.mxu0 0.0
      %2582 = vmatpush1.msra.mxu0 0.0
      %2583 = vmatprep.subr.mxu0 0.0
      %2584 = vmatpush1.msra.mxu0 0.0
      %2585 = vmatprep.subr.mxu0 0.0
      %2586 = vmatpush1.msra.mxu0 0.0
      %2587 = vmatprep.subr.mxu0 0.0
      %2588 = vmatpush1.msra.mxu0 0.0
      %2589 = vmatprep.subr.mxu0 0.0
      %2590 = vmatpush1.msra.mxu0 0.0
      %2591 = vmatprep.subr.mxu0 0.0
      %2592 = vmatpush1.msra.mxu0 0.0
      %2593 = vmatprep.subr.mxu0 0.0
      %2594 = vmatpush1.msra.mxu0 0.0
      %2595 = vmatprep.subr.mxu0 0.0
      %2596 = vmatpush1.msra.mxu0 0.0
      %2597 = vmatprep.subr.mxu0 0.0
      %2598 = vmatpush1.msra.mxu0 0.0
      %2599 = vmatprep.subr.mxu0 0.0
      %2600 = vmatpush1.msra.mxu0 0.0
      %2601 = vmatprep.subr.mxu0 0.0
      %2602 = vmatpush1.msra.mxu0 0.0
      %2603 = vmatprep.subr.mxu0 0.0
      %2604 = vmatpush1.msra.mxu0 0.0
      %2605 = vmatprep.subr.mxu0 0.0
      %2606 = vmatpush1.msra.mxu0 0.0
      %2607 = vmatprep.subr.mxu0 0.0
      %2608 = vmatpush1.msra.mxu0 0.0
      %2609 = vmatprep.subr.mxu0 0.0
      %2610 = vmatpush1.msra.mxu0 0.0
      %2611 = vmatprep.subr.mxu0 0.0
      %2612 = vmatpush1.msra.mxu0 0.0
      %2613 = vmatprep.subr.mxu0 0.0
      %2614 = vmatpush1.msra.mxu0 0.0
      %2615 = vmatprep.subr.mxu0 0.0
      %2616 = vmatpush1.msra.mxu0 0.0
      %2617 = vmatprep.mubr.f32.mxu0 0.0
      %2618 = vmatmul.mubr.f32.gmra.mrb[0].mxu0 %v2494
      %v2619 = vpop.f32.mrb[0].mxu0
      %v2620 = vadd.f32 %v2396, %v2619
      %v2621 = vpop.f32.mrb[0].mxu0
      %2622 = vmatprep.mubr.f32.mxu0 0.0
      %2623 = vmatmul.mubr.f32.gmra.mrb[0].mxu0 %v2497
      %v2624 = vpop.f32.mrb[0].mxu0
      %v2625 = vadd.f32 %v2401, %v2624
      %v2626 = vpop.f32.mrb[0].mxu0
      %2627 = vmatprep.mubr.f32.mxu0 0.0
      %2628 = vmatmul.mubr.f32.gmra.mrb[0].mxu0 %v2500
      %v2629 = vpop.f32.mrb[0].mxu0
      %v2630 = vadd.f32 %v2406, %v2629
      %v2631 = vpop.f32.mrb[0].mxu0
      %2632 = vmatprep.mubr.f32.mxu0 0.0
      %2633 = vmatmul.mubr.f32.gmra.mrb[0].mxu0 %v2503
      %v2634 = vpop.f32.mrb[0].mxu0
      %v2635 = vadd.f32 %v2411, %v2634
      %v2636 = vpop.f32.mrb[0].mxu0
      %2637 = vmatprep.mubr.f32.mxu0 0.0
      %2638 = vmatmul.mubr.f32.gmra.mrb[0].mxu0 %v2506
      %v2639 = vpop.f32.mrb[0].mxu0
      %v2640 = vadd.f32 %v2416, %v2639
      %v2641 = vpop.f32.mrb[0].mxu0
      %2642 = vmatprep.mubr.f32.mxu0 0.0
      %2643 = vmatmul.mubr.f32.gmra.mrb[0].mxu0 %v2509
      %v2644 = vpop.f32.mrb[0].mxu0
      %v2645 = vadd.f32 %v2421, %v2644
      %v2646 = vpop.f32.mrb[0].mxu0
      %2647 = vmatprep.mubr.f32.mxu0 0.0
      %2648 = vmatmul.mubr.f32.gmra.mrb[0].mxu0 %v2512
      %v2649 = vpop.f32.mrb[0].mxu0
      %v2650 = vadd.f32 %v2426, %v2649
      %v2651 = vpop.f32.mrb[0].mxu0
      %2652 = vmatprep.mubr.f32.mxu0 0.0
      %2653 = vmatmul.mubr.f32.gmra.mrb[0].mxu0 %v2515
      %v2654 = vpop.f32.mrb[0].mxu0
      %v2655 = vadd.f32 %v2431, %v2654
      %v2656 = vpop.f32.mrb[0].mxu0
      %2657 = vmatprep.mubr.f32.mxu0 0.0
      %2658 = vmatmul.mubr.f32.gmra.mrb[0].mxu0 %v2518
      %v2659 = vpop.f32.mrb[0].mxu0
      %v2660 = vadd.f32 %v2436, %v2659
      %v2661 = vpop.f32.mrb[0].mxu0
      %2662 = vmatprep.mubr.f32.mxu0 0.0
      %2663 = vmatmul.mubr.f32.gmra.mrb[0].mxu0 %v2521
      %v2664 = vpop.f32.mrb[0].mxu0
      %v2665 = vadd.f32 %v2441, %v2664
      %v2666 = vpop.f32.mrb[0].mxu0
      %2667 = vmatprep.mubr.f32.mxu0 0.0
      %2668 = vmatmul.mubr.f32.gmra.mrb[0].mxu0 %v2524
      %v2669 = vpop.f32.mrb[0].mxu0
      %v2670 = vadd.f32 %v2446, %v2669
      %v2671 = vpop.f32.mrb[0].mxu0
      %2672 = vmatprep.mubr.f32.mxu0 0.0
      %2673 = vmatmul.mubr.f32.gmra.mrb[0].mxu0 %v2527
      %v2674 = vpop.f32.mrb[0].mxu0
      %v2675 = vadd.f32 %v2451, %v2674
      %v2676 = vpop.f32.mrb[0].mxu0
      %2677 = vmatprep.mubr.f32.mxu0 0.0
      %2678 = vmatmul.mubr.f32.gmra.mrb[0].mxu0 %v2530
      %v2679 = vpop.f32.mrb[0].mxu0
      %v2680 = vadd.f32 %v2456, %v2679
      %v2681 = vpop.f32.mrb[0].mxu0
      %2682 = vmatprep.mubr.f32.mxu0 0.0
      %2683 = vmatmul.mubr.f32.gmra.mrb[0].mxu0 %v2533
      %v2684 = vpop.f32.mrb[0].mxu0
      %v2685 = vadd.f32 %v2461, %v2684
      %v2686 = vpop.f32.mrb[0].mxu0
      %2687 = vmatprep.mubr.f32.mxu0 0.0
      %2688 = vmatmul.mubr.f32.gmra.mrb[0].mxu0 %v2536
      %v2689 = vpop.f32.mrb[0].mxu0
      %v2690 = vadd.f32 %v2466, %v2689
      %v2691 = vpop.f32.mrb[0].mxu0
      %2692 = vmatprep.mubr.f32.mxu0 0.0
      %2693 = vmatmul.mubr.f32.gmra.mrb[0].mxu0 %v2539
      %v2694 = vpop.f32.mrb[0].mxu0
      %v2695 = vadd.f32 %v2471, %v2694
      %v2696 = vpop.f32.mrb[0].mxu0
      %2697 = vmatprep.mubr.f32.mxu0 0.0
      %2698 = vmatmul.mubr.f32.gmra.mrb[0].mxu0 %v2542
      %v2699 = vpop.f32.mrb[0].mxu0
      %v2700 = vadd.f32 %v2476, %v2699
      %v2701 = vpop.f32.mrb[0].mxu0
      %2702 = vmatprep.mubr.f32.mxu0 0.0
      %2703 = vmatmul.mubr.f32.gmra.mrb[0].mxu0 %v2545
      %v2704 = vpop.f32.mrb[0].mxu0
      %v2705 = vadd.f32 %v2481, %v2704
      %v2706 = vpop.f32.mrb[0].mxu0
      %2707 = vmatprep.mubr.f32.mxu0 0.0
      %2708 = vmatmul.mubr.f32.gmra.mrb[0].mxu0 %v2548
      %v2709 = vpop.f32.mrb[0].mxu0
      %v2710 = vadd.f32 %v2486, %v2709
      %v2711 = vpop.f32.mrb[0].mxu0
      %2712 = vmatprep.mubr.f32.mxu0 0.0
      %2713 = vmatmul.mubr.f32.gmra.mrb[0].mxu0 %v2551
      %v2714 = vpop.f32.mrb[0].mxu0
      %v2715 = vadd.f32 %v2491, %v2714
      %v2716 = vpop.f32.mrb[0].mxu0
      %2717 = vdwg.mxu0
      %v2718 = vmax.f32 %v2620, 0.0
      %v2719 = vmax.f32 %v2625, 0.0
      %v2720 = vmax.f32 %v2630, 0.0
      %v2721 = vmax.f32 %v2635, 0.0
      %v2722 = vmax.f32 %v2640, 0.0
      %v2723 = vmax.f32 %v2645, 0.0
      %v2724 = vmax.f32 %v2650, 0.0
      %v2725 = vmax.f32 %v2655, 0.0
      %v2726 = vmax.f32 %v2660, 0.0
      %v2727 = vmax.f32 %v2665, 0.0
      %v2728 = vmax.f32 %v2670, 0.0
      %v2729 = vmax.f32 %v2675, 0.0
      %v2730 = vmax.f32 %v2680, 0.0
      %v2731 = vmax.f32 %v2685, 0.0
      %v2732 = vmax.f32 %v2690, 0.0
      %v2733 = vmax.f32 %v2695, 0.0
      %v2734 = vmax.f32 %v2700, 0.0
      %v2735 = vmax.f32 %v2705, 0.0
      %v2736 = vmax.f32 %v2710, 0.0
      %v2737 = vmax.f32 %v2715, 0.0
      %v2738 = vpack.c.bf16 %v2719, %v2718
      %v2739 = vpack.c.bf16 %v2721, %v2720
      %v2740 = vpack.c.bf16 %v2723, %v2722
      %v2741 = vpack.c.bf16 %v2725, %v2724
      %v2742 = vpack.c.bf16 %v2727, %v2726
      %v2743 = vpack.c.bf16 %v2729, %v2728
      %v2744 = vpack.c.bf16 %v2731, %v2730
      %v2745 = vpack.c.bf16 %v2733, %v2732
      %v2746 = vpack.c.bf16 %v2735, %v2734
      %v2747 = vpack.c.bf16 %v2737, %v2736
      %v2758 = vunpack.c.l.b16 %v2738
      %v2759 = vunpack.c.h.b16 %v2738
      %v2760 = vunpack.c.l.b16 %v2739
      %v2761 = vunpack.c.h.b16 %v2739
      %v2762 = vunpack.c.l.b16 %v2740
      %v2763 = vunpack.c.h.b16 %v2740
      %v2764 = vunpack.c.l.b16 %v2741
      %v2765 = vunpack.c.h.b16 %v2741
      %v2766 = vunpack.c.l.b16 %v2742
      %v2767 = vunpack.c.h.b16 %v2742
      %v2768 = vunpack.c.l.b16 %v2743
      %v2769 = vunpack.c.h.b16 %v2743
      %v2770 = vunpack.c.l.b16 %v2744
      %v2771 = vunpack.c.h.b16 %v2744
      %v2772 = vunpack.c.l.b16 %v2745
      %v2773 = vunpack.c.h.b16 %v2745
      %v2774 = vunpack.c.l.b16 %v2746
      %v2775 = vunpack.c.h.b16 %v2746
      %v2776 = vunpack.c.l.b16 %v2747
      %v2777 = vunpack.c.h.b16 %v2747
      %v2778 = vpack.c.b16 %v2758, %v2758
      %v2779 = vpack.c.b16 %v2759, %v2759
      %v2780 = vpack.c.b16 %v2760, %v2760
      %v2781 = vpack.c.b16 %v2761, %v2761
      %v2782 = vpack.c.b16 %v2762, %v2762
      %v2783 = vpack.c.b16 %v2763, %v2763
      %v2784 = vpack.c.b16 %v2764, %v2764
      %v2785 = vpack.c.b16 %v2765, %v2765
      %v2786 = vpack.c.b16 %v2766, %v2766
      %v2787 = vpack.c.b16 %v2767, %v2767
      %v2788 = vpack.c.b16 %v2768, %v2768
      %v2789 = vpack.c.b16 %v2769, %v2769
      %v2790 = vpack.c.b16 %v2770, %v2770
      %v2791 = vpack.c.b16 %v2771, %v2771
      %v2792 = vpack.c.b16 %v2772, %v2772
      %v2793 = vpack.c.b16 %v2773, %v2773
      %v2794 = vpack.c.b16 %v2774, %v2774
      %v2795 = vpack.c.b16 %v2775, %v2775
      %v2796 = vpack.c.b16 %v2776, %v2776
      %v2797 = vpack.c.b16 %v2777, %v2777
      %vm2818 = vcmask 11264
      %2819 = vst.msk [vmem:[%s600] sm:$0xf] %vm2818, %v2778
      %2820 = vst.msk [vmem:[%s600 + $0x4] sm:$0xf] %vm2818, %v2779
      %2821 = vst.msk [vmem:[%s600 + $0x8] sm:$0xf] %vm2818, %v2780
      %2822 = vst.msk [vmem:[%s600 + $0xc] sm:$0xf] %vm2818, %v2781
      %2823 = vst.msk [vmem:[%s600 + $0x10] sm:$0xf] %vm2818, %v2782
      %2824 = vst.msk [vmem:[%s600 + $0x14] sm:$0xf] %vm2818, %v2783
      %2825 = vst.msk [vmem:[%s600 + $0x18] sm:$0xf] %vm2818, %v2784
      %2826 = vst.msk [vmem:[%s600 + $0x1c] sm:$0xf] %vm2818, %v2785
      %2827 = vst.msk [vmem:[%s600 + $0x20] sm:$0xf] %vm2818, %v2786
      %2828 = vst.msk [vmem:[%s600 + $0x24] sm:$0xf] %vm2818, %v2787
      %2829 = vst.msk [vmem:[%s600 + $0x28] sm:$0xf] %vm2818, %v2788
      %2830 = vst.msk [vmem:[%s600 + $0x2c] sm:$0xf] %vm2818, %v2789
      %2831 = vst.msk [vmem:[%s600 + $0x30] sm:$0xf] %vm2818, %v2790
      %2832 = vst.msk [vmem:[%s600 + $0x34] sm:$0xf] %vm2818, %v2791
      %2833 = vst.msk [vmem:[%s600 + $0x38] sm:$0xf] %vm2818, %v2792
      %2834 = vst.msk [vmem:[%s600 + $0x3c] sm:$0xf] %vm2818, %v2793
      %2835 = vst.msk [vmem:[%s600 + $0x40] sm:$0xf] %vm2818, %v2794
      %2836 = vst.msk [vmem:[%s600 + $0x44] sm:$0xf] %vm2818, %v2795
      %2837 = vst.msk [vmem:[%s600 + $0x48] sm:$0xf] %vm2818, %v2796
      %2838 = vst.msk [vmem:[%s600 + $0x4c] sm:$0xf] %vm2818, %v2797
      %v2839 = vld [vmem:[%s610] sm:$0x1]
      %v2840 = vmul.f32 %v2718, %v2718
      %v2841 = vmul.f32 %v2719, %v2719
      %v2842 = vmul.f32 %v2720, %v2720
      %v2843 = vmul.f32 %v2721, %v2721
      %v2844 = vmul.f32 %v2722, %v2722
      %v2845 = vmul.f32 %v2723, %v2723
      %v2846 = vmul.f32 %v2724, %v2724
      %v2847 = vmul.f32 %v2725, %v2725
      %v2848 = vmul.f32 %v2726, %v2726
      %v2849 = vmul.f32 %v2727, %v2727
      %v2850 = vmul.f32 %v2728, %v2728
      %v2851 = vmul.f32 %v2729, %v2729
      %v2852 = vmul.f32 %v2730, %v2730
      %v2853 = vmul.f32 %v2731, %v2731
      %v2854 = vmul.f32 %v2732, %v2732
      %v2855 = vmul.f32 %v2733, %v2733
      %v2856 = vmul.f32 %v2734, %v2734
      %v2857 = vmul.f32 %v2735, %v2735
      %v2858 = vmul.f32 %v2736, %v2736
      %v2859 = vmul.f32 %v2737, %v2737
      %vm2860 = vcmask 15360
      %v2861 = vsel %vm2860, %v2840, 0.0
      %v2862 = vsel %vm2860, %v2841, 0.0
      %v2863 = vadd.f32 %v2861, %v2862
      %v2864 = vsel %vm2860, %v2842, 0.0
      %v2865 = vadd.f32 %v2863, %v2864
      %v2866 = vsel %vm2860, %v2843, 0.0
      %v2867 = vadd.f32 %v2865, %v2866
      %v2868 = vsel %vm2860, %v2844, 0.0
      %v2869 = vadd.f32 %v2867, %v2868
      %v2870 = vsel %vm2860, %v2845, 0.0
      %v2871 = vadd.f32 %v2869, %v2870
      %v2872 = vsel %vm2860, %v2846, 0.0
      %v2873 = vadd.f32 %v2871, %v2872
      %v2874 = vsel %vm2860, %v2847, 0.0
      %v2875 = vadd.f32 %v2873, %v2874
      %v2876 = vsel %vm2860, %v2848, 0.0
      %v2877 = vadd.f32 %v2875, %v2876
      %v2878 = vsel %vm2860, %v2849, 0.0
      %v2879 = vadd.f32 %v2877, %v2878
      %v2880 = vsel %vm2860, %v2850, 0.0
      %v2881 = vadd.f32 %v2879, %v2880
      %v2882 = vsel %vm2860, %v2851, 0.0
      %v2883 = vadd.f32 %v2881, %v2882
      %v2884 = vsel %vm2860, %v2852, 0.0
      %v2885 = vadd.f32 %v2883, %v2884
      %v2886 = vsel %vm2860, %v2853, 0.0
      %v2887 = vadd.f32 %v2885, %v2886
      %v2888 = vsel %vm2860, %v2854, 0.0
      %v2889 = vadd.f32 %v2887, %v2888
      %v2890 = vsel %vm2860, %v2855, 0.0
      %v2891 = vadd.f32 %v2889, %v2890
      %v2892 = vsel %vm2860, %v2856, 0.0
      %v2893 = vadd.f32 %v2891, %v2892
      %v2894 = vsel %vm2860, %v2857, 0.0
      %v2895 = vadd.f32 %v2893, %v2894
      %v2896 = vsel %vm2860, %v2858, 0.0
      %v2897 = vadd.f32 %v2895, %v2896
      %v2898 = vsel %vm2860, %v2859, 0.0
      %v2899 = vadd.f32 %v2897, %v2898
      %2900 = vadd.xlane.f32.xlu0 %v2899
      %v2901 = vpop.xlane.xlu0 %2900
      %v2902 = vrot.slane %v2901, 4
      %v2903 = vadd.f32 %v2901, %v2902
      %v2904 = vrot.slane %v2903, 2
      %v2905 = vadd.f32 %v2903, %v2904
      %v2906 = vrot.slane %v2905, 1
      %v2907 = vadd.f32 %v2905, %v2906
      %s2908 = vtos %v2907
      %v2909 = vstv %s2908
      %v2910 = vadd.f32 %v2839, %v2909
      %2911 = vst.msk [vmem:[%s610] sm:$0x1] %vm1460, %v2910
      %s2912 = smul.u32 8, %s32
      %p2913 = scmp.lt.s32.totalorder %s31, 3
      %s2914 = scalar_select %p2913, %s31, 3
      %p2915 = scmp.lt.s32.totalorder %s2912, 7
      %s2916 = scalar_select %p2915, %s2912, 7
      %s2917 = smul.addr %s2916, 3
      %s2918 = smul.addr %s2914, 24
      %s2919 = sadd.s32 %s2917, %s2918
      %s2920 = smul.addr %s2919, 4
      %s2921 = scalar_lea.vmem %s10, %s2920
      %s2922 = smul.u32 4, %s32
      %p2923 = scmp.lt.s32.totalorder %s31, 3
      %s2924 = scalar_select %p2923, %s31, 3
      %p2925 = scmp.lt.s32.totalorder %s2922, 3
      %s2926 = scalar_select %p2925, %s2922, 3
      %s2927 = smul.addr %s2926, 5
      %s2928 = smul.addr %s2924, 20
      %s2929 = sadd.s32 %s2927, %s2928
      %s2930 = smul.addr %s2929, 4
      %s2931 = scalar_lea.vmem %s11, %s2930
      %s2932 = smul.u32 2, %s32
      %p2933 = scmp.lt.s32.totalorder %s31, 3
      %s2934 = scalar_select %p2933, %s31, 3
      %p2935 = scmp.lt.s32.totalorder %s2932, 1
      %s2936 = scalar_select %p2935, %s2932, 1
      %s2937 = smul.addr %s2936, 10
      %s2938 = smul.addr %s2934, 20
      %s2939 = sadd.s32 %s2937, %s2938
      %s2940 = smul.addr %s2939, 4
      %s2941 = scalar_lea.vmem %s12, %s2940
      %p2942 = scmp.lt.s32.totalorder %s31, 3
      %s2943 = scalar_select %p2942, %s31, 3
      %s2944 = scalar_lea.vmem %s13, %s2943
      %p2945 = scmp.lt.s32.totalorder %s31, 3
      %s2946 = scalar_select %p2945, %s31, 3
      %s2947 = scalar_lea.vmem %s14, %s2946
      %p2948 = scmp.lt.s32.totalorder %s31, 3
      %s2949 = scalar_select %p2948, %s31, 3
      %s2950 = scalar_lea.vmem %s15, %s2949
      // Predicated region
      $region65: #{neural_recon_forward.1} parent=59 // pred_check
        %p2951 = pneg %p276
      $region66: #{neural_recon_forward.1} parent=59 // pred_check_branch
        %2953 = sbr.rel (%p2951) target = $region68
      $region67: #{neural_recon_forward.1} parent=59 // pred_region
        %s2954 = smul.u32 8, %s32
      $region68: #{neural_recon_forward.1} parent=59 // pred_fallthru
        _
      // Predicated region
      $region69: #{neural_recon_forward.1} parent=59 // pred_check
        %p2955 = pneg %p304
      $region70: #{neural_recon_forward.1} parent=59 // pred_check_branch
        %2957 = sbr.rel (%p2955) target = $region72
      $region71: #{neural_recon_forward.1} parent=59 // pred_region
        %s2958 = smul.u32 4, %s32
      $region72: #{neural_recon_forward.1} parent=59 // pred_fallthru
        _
      // Predicated region
      $region73: #{neural_recon_forward.1} parent=59 // pred_check
        %p2959 = pneg %p332
      $region74: #{neural_recon_forward.1} parent=59 // pred_check_branch
        %2961 = sbr.rel (%p2959) target = $region76
      $region75: #{neural_recon_forward.1} parent=59 // pred_region
        %s2962 = smul.u32 2, %s32
      $region76: #{neural_recon_forward.1} parent=59 // pred_fallthru
        _
      // Predicated region
      $region77: #{neural_recon_forward.1} parent=59 // pred_check
        %p2963 = pneg %p358
      $region78: #{neural_recon_forward.1} parent=59 // pred_check_branch
        %2965 = sbr.rel (%p2963) target = $region80
      $region79: #{neural_recon_forward.1} parent=59 // pred_region
        _
      $region80: #{neural_recon_forward.1} parent=59 // pred_fallthru
        _
      // Predicated region
      $region81: #{neural_recon_forward.1} parent=59 // pred_check
        %p2966 = pneg %p384
      $region82: #{neural_recon_forward.1} parent=59 // pred_check_branch
        %2968 = sbr.rel (%p2966) target = $region84
      $region83: #{neural_recon_forward.1} parent=59 // pred_region
        _
      $region84: #{neural_recon_forward.1} parent=59 // pred_fallthru
        _
      // Predicated region
      $region85: #{neural_recon_forward.1} parent=59 // pred_check
        %p2969 = pneg %p410
      $region86: #{neural_recon_forward.1} parent=59 // pred_check_branch
        %2971 = sbr.rel (%p2969) target = $region88
      $region87: #{neural_recon_forward.1} parent=59 // pred_region
        _
      $region88: #{neural_recon_forward.1} parent=59 // pred_fallthru
        _
    $region60: #{neural_recon_forward.1} parent=5 // pred_fallthru
      _
    %p2972 = scmp.le.s32.totalorder 2, %s22
    // Predicated region
    $region89: #{neural_recon_forward.1} parent=5 // pred_check
      %p2973 = pneg %p2972
    $region90: #{neural_recon_forward.1} parent=5 // pred_check_branch
      %2975 = sbr.rel (%p2973) target = $region92
    $region91: #{neural_recon_forward.1} parent=5 // pred_region
      %s2976 = ssub.s32 %s22, 2
      // Predicated region
      $region93: #{neural_recon_forward.1} parent=91 // pred_check
        %p2977 = pneg %p282
      $region94: #{neural_recon_forward.1} parent=91 // pred_check_branch
        %2979 = sbr.rel (%p2977) target = $region96
      $region95: #{neural_recon_forward.1} parent=91 // pred_region
        %s2980 = smul.u32 8, %s34
        %p2981 = scmp.lt.s32.totalorder %s33, 3
        %s2982 = scalar_select %p2981, %s33, 3
        %p2983 = scmp.lt.s32.totalorder %s2980, 7
        %s2984 = scalar_select %p2983, %s2980, 7
        %s2985 = smul.addr %s2984, 3
        %s2986 = smul.addr %s2982, 24
        %s2987 = sadd.s32 %s2985, %s2986
        %s2988 = smul.addr %s2987, 4
        %s2989 = scalar_lea.vmem %s10, %s2988
      $region96: #{neural_recon_forward.1} parent=91 // pred_fallthru
        _
      // Predicated region
      $region97: #{neural_recon_forward.1} parent=91 // pred_check
        %p2990 = pneg %p310
      $region98: #{neural_recon_forward.1} parent=91 // pred_check_branch
        %2992 = sbr.rel (%p2990) target = $region100
      $region99: #{neural_recon_forward.1} parent=91 // pred_region
        %s2993 = smul.u32 4, %s34
        %p2994 = scmp.lt.s32.totalorder %s33, 3
        %s2995 = scalar_select %p2994, %s33, 3
        %p2996 = scmp.lt.s32.totalorder %s2993, 3
        %s2997 = scalar_select %p2996, %s2993, 3
        %s2998 = smul.addr %s2997, 5
        %s2999 = smul.addr %s2995, 20
        %s3000 = sadd.s32 %s2998, %s2999
        %s3001 = smul.addr %s3000, 4
        %s3002 = scalar_lea.vmem %s11, %s3001
      $region100: #{neural_recon_forward.1} parent=91 // pred_fallthru
        _
      // Predicated region
      $region101: #{neural_recon_forward.1} parent=91 // pred_check
        %p3003 = pneg %p338
      $region102: #{neural_recon_forward.1} parent=91 // pred_check_branch
        %3005 = sbr.rel (%p3003) target = $region104
      $region103: #{neural_recon_forward.1} parent=91 // pred_region
        %s3006 = smul.u32 2, %s34
        %p3007 = scmp.lt.s32.totalorder %s33, 3
        %s3008 = scalar_select %p3007, %s33, 3
        %p3009 = scmp.lt.s32.totalorder %s3006, 1
        %s3010 = scalar_select %p3009, %s3006, 1
        %s3011 = smul.addr %s3010, 10
        %s3012 = smul.addr %s3008, 20
        %s3013 = sadd.s32 %s3011, %s3012
        %s3014 = smul.addr %s3013, 4
        %s3015 = scalar_lea.vmem %s12, %s3014
      $region104: #{neural_recon_forward.1} parent=91 // pred_fallthru
        _
      // Predicated region
      $region105: #{neural_recon_forward.1} parent=91 // pred_check
        %p3016 = pneg %p364
      $region106: #{neural_recon_forward.1} parent=91 // pred_check_branch
        %3018 = sbr.rel (%p3016) target = $region108
      $region107: #{neural_recon_forward.1} parent=91 // pred_region
        %p3019 = scmp.lt.s32.totalorder %s33, 3
        %s3020 = scalar_select %p3019, %s33, 3
        %s3021 = scalar_lea.vmem %s13, %s3020
      $region108: #{neural_recon_forward.1} parent=91 // pred_fallthru
        _
      // Predicated region
      $region109: #{neural_recon_forward.1} parent=91 // pred_check
        %p3022 = pneg %p390
      $region110: #{neural_recon_forward.1} parent=91 // pred_check_branch
        %3024 = sbr.rel (%p3022) target = $region112
      $region111: #{neural_recon_forward.1} parent=91 // pred_region
        %p3025 = scmp.lt.s32.totalorder %s33, 3
        %s3026 = scalar_select %p3025, %s33, 3
        %s3027 = scalar_lea.vmem %s14, %s3026
      $region112: #{neural_recon_forward.1} parent=91 // pred_fallthru
        _
      // Predicated region
      $region113: #{neural_recon_forward.1} parent=91 // pred_check
        %p3028 = pneg %p416
      $region114: #{neural_recon_forward.1} parent=91 // pred_check_branch
        %3030 = sbr.rel (%p3028) target = $region116
      $region115: #{neural_recon_forward.1} parent=91 // pred_region
        %p3031 = scmp.lt.s32.totalorder %s33, 3
        %s3032 = scalar_select %p3031, %s33, 3
        %s3033 = scalar_lea.vmem %s15, %s3032
      $region116: #{neural_recon_forward.1} parent=91 // pred_fallthru
        _
    $region92: #{neural_recon_forward.1} parent=5 // pred_fallthru
      _
  $region6: #{neural_recon_forward.1} parent=0 // loop_footer
    %s26 = sadd.s32 1, %s22
  $region7: #{neural_recon_forward.1} parent=0 // loop_footer_branch
    %21 = sbr.rel target = $region3
  $region8: #{neural_recon_forward.1} parent=0 // loop_exit
    _

</llo_original>
